<compile_context>
chip_gen: v5e
topology: v5e:2x2
jax: 0.10.0
libtpu: 0.0.40
codegen_flags: <defaults>
</compile_context>

<pallas_src>
import jax
import jax.numpy as jnp
from jax import lax
from jax.experimental import pallas as pl
from jax.experimental.pallas import tpu as pltpu


def _sam_kernel(x_ref, wa_ref, wb_ref, b_ref, o_ref, ap_ref, pad_ref, col_ref):
    # x_ref  : (1, H, W, C)    input image (NHWC)
    # wa_ref : (18,)           SMEM, attention conv weights, idx = c*9 + kh*3 + kw
    # wb_ref : (9*C, C_out)    main conv weight (HWIO flattened), BN scale folded
    # b_ref  : (1, C_out)      folded BN bias
    # o_ref  : (1, H*W, C_out) output (flattened spatial)
    # ap_ref : (2, H+2, W+2)   scratch: zero-padded [avg, max] maps
    # pad_ref: (H+2, W+2, C)   scratch: zero-padded x*att
    # col_ref: (H*W, 9*C)      scratch: im2col buffer
    H = x_ref.shape[1]
    W = x_ref.shape[2]
    C = x_ref.shape[3]

    x = x_ref[0]                                     # (H, W, C)

    # ---- channel-wise mean / max (attention inputs), kept as dense (H, W) --
    avg = jnp.mean(x, axis=-1)                       # (H, W)
    mx = jnp.max(x, axis=-1)                         # (H, W)

    # ---- 3x3 conv (2 -> 1 channels), zero padding --------------------------
    # Zero only the 1-px border; the interior is fully overwritten each step.
    zrow2 = jnp.zeros((2, 1, W + 2), jnp.float32)
    ap_ref[:, 0:1, :] = zrow2
    ap_ref[:, H + 1:H + 2, :] = zrow2
    zcol2 = jnp.zeros((2, H + 2, 1), jnp.float32)
    ap_ref[:, :, 0:1] = zcol2
    ap_ref[:, :, W + 1:W + 2] = zcol2
    ap_ref[0, 1:H + 1, 1:W + 1] = avg
    ap_ref[1, 1:H + 1, 1:W + 1] = mx

    att = jnp.zeros((H, W), jnp.float32)
    for c2 in range(2):
        for kh in range(3):
            for kw in range(3):
                w_s = wa_ref[c2 * 9 + kh * 3 + kw]           # SMEM scalar
                att = att + ap_ref[c2, kh:kh + H, kw:kw + W] * w_s
    att = jax.nn.sigmoid(att)                                # (H, W)

    # ---- out = x * att ------------------------------------------------------
    out = x * att[:, :, None]                                # (H, W, C)

    # ---- main 3x3 conv as a single im2col matmul ----------------------------
    zrow = jnp.zeros((1, W + 2, C), jnp.float32)
    pad_ref[0:1, :, :] = zrow
    pad_ref[H + 1:H + 2, :, :] = zrow
    zcol = jnp.zeros((H + 2, 1, C), jnp.float32)
    pad_ref[:, 0:1, :] = zcol
    pad_ref[:, W + 1:W + 2, :] = zcol
    pad_ref[1:H + 1, 1:W + 1, :] = out

    for kh in range(3):
        for kw in range(3):
            k = kh * 3 + kw
            col_ref[:, k * C:(k + 1) * C] = (
                pad_ref[kh:kh + H, kw:kw + W, :].reshape(H * W, C))

    # one MXU matmul: (H*W, 9C) @ (9C, C_out), f32 accumulation
    y = jnp.dot(col_ref[...], wb_ref[...], preferred_element_type=jnp.float32)
    y = jnp.maximum(y + b_ref[...], 0.0)                     # folded BN bias + ReLU
    o_ref[0] = y.astype(o_ref.dtype)


def sam_pallas(x_nhwc, wa_flat, wb_folded, bias):
    """x_nhwc: (N,H,W,C) f32; wa_flat: (18,); wb_folded: (9*C, C_out); bias: (1, C_out)."""
    N, H, W, C = x_nhwc.shape
    C_out = wb_folded.shape[1]

    grid_spec = pltpu.PrefetchScalarGridSpec(
        num_scalar_prefetch=0,
        grid=(N,),
        in_specs=[
            pl.BlockSpec((1, H, W, C), lambda n: (n, 0, 0, 0)),       # x (per image)
            pl.BlockSpec(memory_space=pltpu.MemorySpace.SMEM),         # wa -> SMEM scalars
            pl.BlockSpec((9 * C, C_out), lambda n: (0, 0)),            # wb (constant block)
            pl.BlockSpec((1, C_out), lambda n: (0, 0)),                # bias (constant block)
        ],
        out_specs=pl.BlockSpec((1, H * W, C_out), lambda n: (n, 0, 0)),
        scratch_shapes=[
            pltpu.VMEM((2, H + 2, W + 2), jnp.float32),    # padded avg/max maps
            pltpu.VMEM((H + 2, W + 2, C), jnp.float32),    # padded x*att
            pltpu.VMEM((H * W, 9 * C), jnp.float32),       # im2col buffer
        ],
    )

    out = pl.pallas_call(
        _sam_kernel,
        out_shape=jax.ShapeDtypeStruct((N, H * W, C_out), jnp.float32),
        grid_spec=grid_spec,
        compiler_params=pltpu.CompilerParams(
            dimension_semantics=("parallel",)),
    )(x_nhwc, wa_flat, wb_folded, bias)
    return out.reshape(N, H, W, C_out)


def sam_forward(x_nchw, wa_oihw, wc_oihw, gamma, beta, mean, var, eps=1e-5):
    """PyTorch-layout interface: x (N,Cin,H,W), conv_atten (1,2,3,3), conv (Cout,Cin,3,3)."""
    N, C_in, H, W = x_nchw.shape
    C_out = wc_oihw.shape[0]

    x_nhwc = jnp.transpose(x_nchw, (0, 2, 3, 1))
    wa_flat = wa_oihw.reshape(-1)                       # idx = c*9 + kh*3 + kw

    # Fold BatchNorm (inference) into the conv weight / bias.
    scale = gamma / jnp.sqrt(var + eps)                 # (C_out,)
    bias = (beta - mean * scale).reshape(1, C_out)
    w_hwio = jnp.transpose(wc_oihw, (2, 3, 1, 0)) * scale[None, None, None, :]
    wb = w_hwio.reshape(9 * C_in, C_out)                # row = (kh*3+kw)*C_in + ci
    # v6e/v7x option: x_nhwc = x_nhwc.astype(jnp.bfloat16); wb = wb.astype(jnp.bfloat16)
    # (keep preferred_element_type=f32 in the kernel); kept f32 here for the 1e-4 check.

    y = sam_pallas(x_nhwc, wa_flat, wb, bias)           # (N, H, W, C_out)
    return jnp.transpose(y, (0, 3, 1, 2))               # back to NCHW


def sam_reference(x_nchw, wa_oihw, wc_oihw, gamma, beta, mean, var, eps=1e-5):
    """Pure-JAX reference of the PyTorch SAM forward (inference BN)."""
    x = jnp.transpose(x_nchw, (0, 2, 3, 1))             # NHWC
    avg = jnp.mean(x, axis=-1, keepdims=True)
    mx = jnp.max(x, axis=-1, keepdims=True)
    att = jnp.concatenate([avg, mx], axis=-1)
    dn = ('NHWC', 'HWIO', 'NHWC')
    att = jax.nn.sigmoid(lax.conv_general_dilated(
        att, jnp.transpose(wa_oihw, (2, 3, 1, 0)), (1, 1), 'SAME',
        dimension_numbers=dn))
    out = x * att
    y = lax.conv_general_dilated(
        out, jnp.transpose(wc_oihw, (2, 3, 1, 0)), (1, 1), 'SAME',
        dimension_numbers=dn)
    scale = gamma / jnp.sqrt(var + eps)
    y = jnp.maximum(y * scale + (beta - mean * scale), 0.0)
    return jnp.transpose(y, (0, 3, 1, 2))               # NCHW


if __name__ == "__main__":
    # Small deterministic problem: batch=2, in_chan=out_chan=4, spatial 16x16.
    N, C_in, C_out, H, W = 2, 4, 4, 16, 16
    key = jax.random.PRNGKey(0)
    ks = jax.random.split(key, 8)

    x = jax.random.normal(ks[0], (N, C_in, H, W), dtype=jnp.float32)
    wa = jax.random.normal(ks[1], (1, 2, 3, 3), dtype=jnp.float32) * 0.3   # conv_atten
    wc = jax.random.normal(ks[2], (C_out, C_in, 3, 3), dtype=jnp.float32) * 0.2  # conv
    gamma = 1.0 + 0.1 * jax.random.normal(ks[3], (C_out,), dtype=jnp.float32)
    beta = 0.1 * jax.random.normal(ks[4], (C_out,), dtype=jnp.float32)
    mean = 0.1 * jax.random.normal(ks[5], (C_out,), dtype=jnp.float32)
    var = jnp.abs(jax.random.normal(ks[6], (C_out,), dtype=jnp.float32)) + 0.5

    out = sam_forward(x, wa, wc, gamma, beta, mean, var)
    out = jax.block_until_ready(out)

    ref = sam_reference(x, wa, wc, gamma, beta, mean, var)
    assert out.shape == (N, C_out, H, W)
    err = float(jnp.max(jnp.abs(out - ref)))
    assert jnp.allclose(out, ref, atol=1e-4, rtol=1e-4), f"max err {err}"

    print("KERNEL_OK")
</pallas_src>

<mosaic_0001>
module attributes {stable_mosaic.version = 11 : i64} {
  func.func @_sam_kernel(%arg0: i32, %arg1: memref<1x16x16x4xf32, #tpu.memory_space<vmem>>, %arg2: memref<18xf32, #tpu.memory_space<smem>>, %arg3: memref<36x4xf32, #tpu.memory_space<vmem>>, %arg4: memref<1x4xf32, #tpu.memory_space<vmem>>, %arg5: memref<1x256x4xf32, #tpu.memory_space<vmem>>, %arg6: memref<2x18x18xf32, #tpu.memory_space<vmem>>, %arg7: memref<18x18x4xf32, #tpu.memory_space<vmem>>, %arg8: memref<256x36xf32, #tpu.memory_space<vmem>>) attributes {dimension_semantics = [#tpu.dimension_semantics<parallel>], iteration_bounds = array<i64: 2>, scalar_prefetch = 0 : i64, scratch_operands = 3 : i64, tpu.core_type = #tpu.core_type<tc>, window_params = [{transform_indices = @transform_0, window_bounds = array<i64: 1, 16, 16, 4>}, {transform_indices = @transform_1, window_bounds = array<i64: 18>}, {pipeline_mode = #tpu.pipeline_mode<synchronous>, transform_indices = @transform_2, window_bounds = array<i64: 36, 4>}, {pipeline_mode = #tpu.pipeline_mode<synchronous>, transform_indices = @transform_3, window_bounds = array<i64: 1, 4>}, {transform_indices = @transform_4, window_bounds = array<i64: 1, 256, 4>}]} {
    %c0 = arith.constant 0 : index
    %c0_0 = arith.constant 0 : index
    %c0_1 = arith.constant 0 : index
    %c0_2 = arith.constant 0 : index
    %0 = vector.load %arg1[%c0, %c0_0, %c0_1, %c0_2] : memref<1x16x16x4xf32, #tpu.memory_space<vmem>>, vector<1x16x16x4xf32>
    %1 = vector.shape_cast %0 : vector<1x16x16x4xf32> to vector<16x16x4xf32>
    %cst = arith.constant dense<0.000000e+00> : vector<16x16xf32>
    %2 = vector.multi_reduction <add>, %1, %cst [2] : vector<16x16x4xf32> to vector<16x16xf32>
    %cst_3 = arith.constant 4.000000e+00 : f32
    %3 = vector.broadcast %cst_3 : f32 to vector<16x16xf32>
    %4 = arith.divf %2, %3 : vector<16x16xf32>
    %cst_4 = arith.constant dense<0xFF800000> : vector<16x16xf32>
    %5 = vector.multi_reduction <maximumf>, %1, %cst_4 [2] : vector<16x16x4xf32> to vector<16x16xf32>
    %cst_5 = arith.constant 0.000000e+00 : f32
    %6 = vector.broadcast %cst_5 : f32 to vector<2x1x18xf32>
    %c0_6 = arith.constant 0 : index
    %c0_7 = arith.constant 0 : index
    %c0_8 = arith.constant 0 : index
    %7 = vector.load %arg6[%c0_6, %c0_7, %c0_8] : memref<2x18x18xf32, #tpu.memory_space<vmem>>, vector<2x1x18xf32>
    tpu.vector_store %arg6[%c0_6, %c0_7, %c0_8], %6 {strides = array<i32>} : memref<2x18x18xf32, #tpu.memory_space<vmem>>, vector<2x1x18xf32>,
    %c0_9 = arith.constant 0 : index
    %c17 = arith.constant 17 : index
    %c0_10 = arith.constant 0 : index
    %8 = vector.load %arg6[%c0_9, %c17, %c0_10] : memref<2x18x18xf32, #tpu.memory_space<vmem>>, vector<2x1x18xf32>
    tpu.vector_store %arg6[%c0_9, %c17, %c0_10], %6 {strides = array<i32>} : memref<2x18x18xf32, #tpu.memory_space<vmem>>, vector<2x1x18xf32>,
    %cst_11 = arith.constant 0.000000e+00 : f32
    %9 = vector.broadcast %cst_11 : f32 to vector<2x18x1xf32>
    %c0_12 = arith.constant 0 : index
    %c0_13 = arith.constant 0 : index
    %c0_14 = arith.constant 0 : index
    %10 = vector.load %arg6[%c0_12, %c0_13, %c0_14] : memref<2x18x18xf32, #tpu.memory_space<vmem>>, vector<2x18x1xf32>
    tpu.vector_store %arg6[%c0_12, %c0_13, %c0_14], %9 {strides = array<i32>} : memref<2x18x18xf32, #tpu.memory_space<vmem>>, vector<2x18x1xf32>,
    %c0_15 = arith.constant 0 : index
    %c0_16 = arith.constant 0 : index
    %c17_17 = arith.constant 17 : index
    %11 = vector.load %arg6[%c0_15, %c0_16, %c17_17] : memref<2x18x18xf32, #tpu.memory_space<vmem>>, vector<2x18x1xf32>
    tpu.vector_store %arg6[%c0_15, %c0_16, %c17_17], %9 {strides = array<i32>} : memref<2x18x18xf32, #tpu.memory_space<vmem>>, vector<2x18x1xf32>,
    %c0_18 = arith.constant 0 : index
    %c1 = arith.constant 1 : index
    %c1_19 = arith.constant 1 : index
    %12 = vector.load %arg6[%c0_18, %c1, %c1_19] : memref<2x18x18xf32, #tpu.memory_space<vmem>>, vector<1x16x16xf32>
    %13 = vector.shape_cast %12 : vector<1x16x16xf32> to vector<16x16xf32>
    %14 = vector.shape_cast %4 : vector<16x16xf32> to vector<1x16x16xf32>
    tpu.vector_store %arg6[%c0_18, %c1, %c1_19], %14 {strides = array<i32>} : memref<2x18x18xf32, #tpu.memory_space<vmem>>, vector<1x16x16xf32>,
    %c1_20 = arith.constant 1 : index
    %c1_21 = arith.constant 1 : index
    %c1_22 = arith.constant 1 : index
    %15 = vector.load %arg6[%c1_20, %c1_21, %c1_22] : memref<2x18x18xf32, #tpu.memory_space<vmem>>, vector<1x16x16xf32>
    %16 = vector.shape_cast %15 : vector<1x16x16xf32> to vector<16x16xf32>
    %17 = vector.shape_cast %5 : vector<16x16xf32> to vector<1x16x16xf32>
    tpu.vector_store %arg6[%c1_20, %c1_21, %c1_22], %17 {strides = array<i32>} : memref<2x18x18xf32, #tpu.memory_space<vmem>>, vector<1x16x16xf32>,
    %cst_23 = arith.constant 0.000000e+00 : f32
    %18 = vector.broadcast %cst_23 : f32 to vector<16x16xf32>
    %c0_24 = arith.constant 0 : index
    %19 = memref.load %arg2[%c0_24] : memref<18xf32, #tpu.memory_space<smem>>
    %c0_25 = arith.constant 0 : index
    %c0_26 = arith.constant 0 : index
    %c0_27 = arith.constant 0 : index
    %20 = vector.load %arg6[%c0_25, %c0_26, %c0_27] : memref<2x18x18xf32, #tpu.memory_space<vmem>>, vector<1x16x16xf32>
    %21 = vector.shape_cast %20 : vector<1x16x16xf32> to vector<16x16xf32>
    %22 = vector.broadcast %19 : f32 to vector<16x16xf32>
    %23 = arith.mulf %21, %22 : vector<16x16xf32>
    %24 = arith.addf %18, %23 : vector<16x16xf32>
    %c1_28 = arith.constant 1 : index
    %25 = memref.load %arg2[%c1_28] : memref<18xf32, #tpu.memory_space<smem>>
    %c0_29 = arith.constant 0 : index
    %c0_30 = arith.constant 0 : index
    %c1_31 = arith.constant 1 : index
    %26 = vector.load %arg6[%c0_29, %c0_30, %c1_31] : memref<2x18x18xf32, #tpu.memory_space<vmem>>, vector<1x16x16xf32>
    %27 = vector.shape_cast %26 : vector<1x16x16xf32> to vector<16x16xf32>
    %28 = vector.broadcast %25 : f32 to vector<16x16xf32>
    %29 = arith.mulf %27, %28 : vector<16x16xf32>
    %30 = arith.addf %24, %29 : vector<16x16xf32>
    %c2 = arith.constant 2 : index
    %31 = memref.load %arg2[%c2] : memref<18xf32, #tpu.memory_space<smem>>
    %c0_32 = arith.constant 0 : index
    %c0_33 = arith.constant 0 : index
    %c2_34 = arith.constant 2 : index
    %32 = vector.load %arg6[%c0_32, %c0_33, %c2_34] : memref<2x18x18xf32, #tpu.memory_space<vmem>>, vector<1x16x16xf32>
    %33 = vector.shape_cast %32 : vector<1x16x16xf32> to vector<16x16xf32>
    %34 = vector.broadcast %31 : f32 to vector<16x16xf32>
    %35 = arith.mulf %33, %34 : vector<16x16xf32>
    %36 = arith.addf %30, %35 : vector<16x16xf32>
    %c3 = arith.constant 3 : index
    %37 = memref.load %arg2[%c3] : memref<18xf32, #tpu.memory_space<smem>>
    %c0_35 = arith.constant 0 : index
    %c1_36 = arith.constant 1 : index
    %c0_37 = arith.constant 0 : index
    %38 = vector.load %arg6[%c0_35, %c1_36, %c0_37] : memref<2x18x18xf32, #tpu.memory_space<vmem>>, vector<1x16x16xf32>
    %39 = vector.shape_cast %38 : vector<1x16x16xf32> to vector<16x16xf32>
    %40 = vector.broadcast %37 : f32 to vector<16x16xf32>
    %41 = arith.mulf %39, %40 : vector<16x16xf32>
    %42 = arith.addf %36, %41 : vector<16x16xf32>
    %c4 = arith.constant 4 : index
    %43 = memref.load %arg2[%c4] : memref<18xf32, #tpu.memory_space<smem>>
    %c0_38 = arith.constant 0 : index
    %c1_39 = arith.constant 1 : index
    %c1_40 = arith.constant 1 : index
    %44 = vector.load %arg6[%c0_38, %c1_39, %c1_40] : memref<2x18x18xf32, #tpu.memory_space<vmem>>, vector<1x16x16xf32>
    %45 = vector.shape_cast %44 : vector<1x16x16xf32> to vector<16x16xf32>
    %46 = vector.broadcast %43 : f32 to vector<16x16xf32>
    %47 = arith.mulf %45, %46 : vector<16x16xf32>
    %48 = arith.addf %42, %47 : vector<16x16xf32>
    %c5 = arith.constant 5 : index
    %49 = memref.load %arg2[%c5] : memref<18xf32, #tpu.memory_space<smem>>
    %c0_41 = arith.constant 0 : index
    %c1_42 = arith.constant 1 : index
    %c2_43 = arith.constant 2 : index
    %50 = vector.load %arg6[%c0_41, %c1_42, %c2_43] : memref<2x18x18xf32, #tpu.memory_space<vmem>>, vector<1x16x16xf32>
    %51 = vector.shape_cast %50 : vector<1x16x16xf32> to vector<16x16xf32>
    %52 = vector.broadcast %49 : f32 to vector<16x16xf32>
    %53 = arith.mulf %51, %52 : vector<16x16xf32>
    %54 = arith.addf %48, %53 : vector<16x16xf32>
    %c6 = arith.constant 6 : index
    %55 = memref.load %arg2[%c6] : memref<18xf32, #tpu.memory_space<smem>>
    %c0_44 = arith.constant 0 : index
    %c2_45 = arith.constant 2 : index
    %c0_46 = arith.constant 0 : index
    %56 = vector.load %arg6[%c0_44, %c2_45, %c0_46] : memref<2x18x18xf32, #tpu.memory_space<vmem>>, vector<1x16x16xf32>
    %57 = vector.shape_cast %56 : vector<1x16x16xf32> to vector<16x16xf32>
    %58 = vector.broadcast %55 : f32 to vector<16x16xf32>
    %59 = arith.mulf %57, %58 : vector<16x16xf32>
    %60 = arith.addf %54, %59 : vector<16x16xf32>
    %c7 = arith.constant 7 : index
    %61 = memref.load %arg2[%c7] : memref<18xf32, #tpu.memory_space<smem>>
    %c0_47 = arith.constant 0 : index
    %c2_48 = arith.constant 2 : index
    %c1_49 = arith.constant 1 : index
    %62 = vector.load %arg6[%c0_47, %c2_48, %c1_49] : memref<2x18x18xf32, #tpu.memory_space<vmem>>, vector<1x16x16xf32>
    %63 = vector.shape_cast %62 : vector<1x16x16xf32> to vector<16x16xf32>
    %64 = vector.broadcast %61 : f32 to vector<16x16xf32>
    %65 = arith.mulf %63, %64 : vector<16x16xf32>
    %66 = arith.addf %60, %65 : vector<16x16xf32>
    %c8 = arith.constant 8 : index
    %67 = memref.load %arg2[%c8] : memref<18xf32, #tpu.memory_space<smem>>
    %c0_50 = arith.constant 0 : index
    %c2_51 = arith.constant 2 : index
    %c2_52 = arith.constant 2 : index
    %68 = vector.load %arg6[%c0_50, %c2_51, %c2_52] : memref<2x18x18xf32, #tpu.memory_space<vmem>>, vector<1x16x16xf32>
    %69 = vector.shape_cast %68 : vector<1x16x16xf32> to vector<16x16xf32>
    %70 = vector.broadcast %67 : f32 to vector<16x16xf32>
    %71 = arith.mulf %69, %70 : vector<16x16xf32>
    %72 = arith.addf %66, %71 : vector<16x16xf32>
    %c9 = arith.constant 9 : index
    %73 = memref.load %arg2[%c9] : memref<18xf32, #tpu.memory_space<smem>>
    %c1_53 = arith.constant 1 : index
    %c0_54 = arith.constant 0 : index
    %c0_55 = arith.constant 0 : index
    %74 = vector.load %arg6[%c1_53, %c0_54, %c0_55] : memref<2x18x18xf32, #tpu.memory_space<vmem>>, vector<1x16x16xf32>
    %75 = vector.shape_cast %74 : vector<1x16x16xf32> to vector<16x16xf32>
    %76 = vector.broadcast %73 : f32 to vector<16x16xf32>
    %77 = arith.mulf %75, %76 : vector<16x16xf32>
    %78 = arith.addf %72, %77 : vector<16x16xf32>
    %c10 = arith.constant 10 : index
    %79 = memref.load %arg2[%c10] : memref<18xf32, #tpu.memory_space<smem>>
    %c1_56 = arith.constant 1 : index
    %c0_57 = arith.constant 0 : index
    %c1_58 = arith.constant 1 : index
    %80 = vector.load %arg6[%c1_56, %c0_57, %c1_58] : memref<2x18x18xf32, #tpu.memory_space<vmem>>, vector<1x16x16xf32>
    %81 = vector.shape_cast %80 : vector<1x16x16xf32> to vector<16x16xf32>
    %82 = vector.broadcast %79 : f32 to vector<16x16xf32>
    %83 = arith.mulf %81, %82 : vector<16x16xf32>
    %84 = arith.addf %78, %83 : vector<16x16xf32>
    %c11 = arith.constant 11 : index
    %85 = memref.load %arg2[%c11] : memref<18xf32, #tpu.memory_space<smem>>
    %c1_59 = arith.constant 1 : index
    %c0_60 = arith.constant 0 : index
    %c2_61 = arith.constant 2 : index
    %86 = vector.load %arg6[%c1_59, %c0_60, %c2_61] : memref<2x18x18xf32, #tpu.memory_space<vmem>>, vector<1x16x16xf32>
    %87 = vector.shape_cast %86 : vector<1x16x16xf32> to vector<16x16xf32>
    %88 = vector.broadcast %85 : f32 to vector<16x16xf32>
    %89 = arith.mulf %87, %88 : vector<16x16xf32>
    %90 = arith.addf %84, %89 : vector<16x16xf32>
    %c12 = arith.constant 12 : index
    %91 = memref.load %arg2[%c12] : memref<18xf32, #tpu.memory_space<smem>>
    %c1_62 = arith.constant 1 : index
    %c1_63 = arith.constant 1 : index
    %c0_64 = arith.constant 0 : index
    %92 = vector.load %arg6[%c1_62, %c1_63, %c0_64] : memref<2x18x18xf32, #tpu.memory_space<vmem>>, vector<1x16x16xf32>
    %93 = vector.shape_cast %92 : vector<1x16x16xf32> to vector<16x16xf32>
    %94 = vector.broadcast %91 : f32 to vector<16x16xf32>
    %95 = arith.mulf %93, %94 : vector<16x16xf32>
    %96 = arith.addf %90, %95 : vector<16x16xf32>
    %c13 = arith.constant 13 : index
    %97 = memref.load %arg2[%c13] : memref<18xf32, #tpu.memory_space<smem>>
    %c1_65 = arith.constant 1 : index
    %c1_66 = arith.constant 1 : index
    %c1_67 = arith.constant 1 : index
    %98 = vector.load %arg6[%c1_65, %c1_66, %c1_67] : memref<2x18x18xf32, #tpu.memory_space<vmem>>, vector<1x16x16xf32>
    %99 = vector.shape_cast %98 : vector<1x16x16xf32> to vector<16x16xf32>
    %100 = vector.broadcast %97 : f32 to vector<16x16xf32>
    %101 = arith.mulf %99, %100 : vector<16x16xf32>
    %102 = arith.addf %96, %101 : vector<16x16xf32>
    %c14 = arith.constant 14 : index
    %103 = memref.load %arg2[%c14] : memref<18xf32, #tpu.memory_space<smem>>
    %c1_68 = arith.constant 1 : index
    %c1_69 = arith.constant 1 : index
    %c2_70 = arith.constant 2 : index
    %104 = vector.load %arg6[%c1_68, %c1_69, %c2_70] : memref<2x18x18xf32, #tpu.memory_space<vmem>>, vector<1x16x16xf32>
    %105 = vector.shape_cast %104 : vector<1x16x16xf32> to vector<16x16xf32>
    %106 = vector.broadcast %103 : f32 to vector<16x16xf32>
    %107 = arith.mulf %105, %106 : vector<16x16xf32>
    %108 = arith.addf %102, %107 : vector<16x16xf32>
    %c15 = arith.constant 15 : index
    %109 = memref.load %arg2[%c15] : memref<18xf32, #tpu.memory_space<smem>>
    %c1_71 = arith.constant 1 : index
    %c2_72 = arith.constant 2 : index
    %c0_73 = arith.constant 0 : index
    %110 = vector.load %arg6[%c1_71, %c2_72, %c0_73] : memref<2x18x18xf32, #tpu.memory_space<vmem>>, vector<1x16x16xf32>
    %111 = vector.shape_cast %110 : vector<1x16x16xf32> to vector<16x16xf32>
    %112 = vector.broadcast %109 : f32 to vector<16x16xf32>
    %113 = arith.mulf %111, %112 : vector<16x16xf32>
    %114 = arith.addf %108, %113 : vector<16x16xf32>
    %c16 = arith.constant 16 : index
    %115 = memref.load %arg2[%c16] : memref<18xf32, #tpu.memory_space<smem>>
    %c1_74 = arith.constant 1 : index
    %c2_75 = arith.constant 2 : index
    %c1_76 = arith.constant 1 : index
    %116 = vector.load %arg6[%c1_74, %c2_75, %c1_76] : memref<2x18x18xf32, #tpu.memory_space<vmem>>, vector<1x16x16xf32>
    %117 = vector.shape_cast %116 : vector<1x16x16xf32> to vector<16x16xf32>
    %118 = vector.broadcast %115 : f32 to vector<16x16xf32>
    %119 = arith.mulf %117, %118 : vector<16x16xf32>
    %120 = arith.addf %114, %119 : vector<16x16xf32>
    %c17_77 = arith.constant 17 : index
    %121 = memref.load %arg2[%c17_77] : memref<18xf32, #tpu.memory_space<smem>>
    %c1_78 = arith.constant 1 : index
    %c2_79 = arith.constant 2 : index
    %c2_80 = arith.constant 2 : index
    %122 = vector.load %arg6[%c1_78, %c2_79, %c2_80] : memref<2x18x18xf32, #tpu.memory_space<vmem>>, vector<1x16x16xf32>
    %123 = vector.shape_cast %122 : vector<1x16x16xf32> to vector<16x16xf32>
    %124 = vector.broadcast %121 : f32 to vector<16x16xf32>
    %125 = arith.mulf %123, %124 : vector<16x16xf32>
    %126 = arith.addf %120, %125 : vector<16x16xf32>
    %127 = arith.negf %126 : vector<16x16xf32>
    %128 = math.exp %127 : vector<16x16xf32>
    %cst_81 = arith.constant 1.000000e+00 : f32
    %129 = vector.broadcast %cst_81 : f32 to vector<16x16xf32>
    %130 = arith.addf %129, %128 : vector<16x16xf32>
    %131 = arith.divf %129, %130 : vector<16x16xf32>
    %132 = vector.shape_cast %131 : vector<16x16xf32> to vector<16x16x1xf32>
    %133 = vector.broadcast %132 : vector<16x16x1xf32> to vector<16x16x4xf32>
    %134 = arith.mulf %1, %133 : vector<16x16x4xf32>
    %cst_82 = arith.constant 0.000000e+00 : f32
    %135 = vector.broadcast %cst_82 : f32 to vector<1x18x4xf32>
    %c0_83 = arith.constant 0 : index
    %c0_84 = arith.constant 0 : index
    %c0_85 = arith.constant 0 : index
    %136 = vector.load %arg7[%c0_83, %c0_84, %c0_85] : memref<18x18x4xf32, #tpu.memory_space<vmem>>, vector<1x18x4xf32>
    tpu.vector_store %arg7[%c0_83, %c0_84, %c0_85], %135 {strides = array<i32>} : memref<18x18x4xf32, #tpu.memory_space<vmem>>, vector<1x18x4xf32>,
    %c17_86 = arith.constant 17 : index
    %c0_87 = arith.constant 0 : index
    %c0_88 = arith.constant 0 : index
    %137 = vector.load %arg7[%c17_86, %c0_87, %c0_88] : memref<18x18x4xf32, #tpu.memory_space<vmem>>, vector<1x18x4xf32>
    tpu.vector_store %arg7[%c17_86, %c0_87, %c0_88], %135 {strides = array<i32>} : memref<18x18x4xf32, #tpu.memory_space<vmem>>, vector<1x18x4xf32>,
    %cst_89 = arith.constant 0.000000e+00 : f32
    %138 = vector.broadcast %cst_89 : f32 to vector<18x1x4xf32>
    %c0_90 = arith.constant 0 : index
    %c0_91 = arith.constant 0 : index
    %c0_92 = arith.constant 0 : index
    %139 = vector.load %arg7[%c0_90, %c0_91, %c0_92] : memref<18x18x4xf32, #tpu.memory_space<vmem>>, vector<18x1x4xf32>
    tpu.vector_store %arg7[%c0_90, %c0_91, %c0_92], %138 {strides = array<i32>} : memref<18x18x4xf32, #tpu.memory_space<vmem>>, vector<18x1x4xf32>,
    %c0_93 = arith.constant 0 : index
    %c17_94 = arith.constant 17 : index
    %c0_95 = arith.constant 0 : index
    %140 = vector.load %arg7[%c0_93, %c17_94, %c0_95] : memref<18x18x4xf32, #tpu.memory_space<vmem>>, vector<18x1x4xf32>
    tpu.vector_store %arg7[%c0_93, %c17_94, %c0_95], %138 {strides = array<i32>} : memref<18x18x4xf32, #tpu.memory_space<vmem>>, vector<18x1x4xf32>,
    %c1_96 = arith.constant 1 : index
    %c1_97 = arith.constant 1 : index
    %c0_98 = arith.constant 0 : index
    %141 = vector.load %arg7[%c1_96, %c1_97, %c0_98] : memref<18x18x4xf32, #tpu.memory_space<vmem>>, vector<16x16x4xf32>
    tpu.vector_store %arg7[%c1_96, %c1_97, %c0_98], %134 {strides = array<i32>} : memref<18x18x4xf32, #tpu.memory_space<vmem>>, vector<16x16x4xf32>,
    %c0_99 = arith.constant 0 : index
    %c0_100 = arith.constant 0 : index
    %c0_101 = arith.constant 0 : index
    %142 = vector.load %arg7[%c0_99, %c0_100, %c0_101] : memref<18x18x4xf32, #tpu.memory_space<vmem>>, vector<16x16x4xf32>
    %143 = vector.shape_cast %142 : vector<16x16x4xf32> to vector<256x4xf32>
    %c0_102 = arith.constant 0 : index
    %c0_103 = arith.constant 0 : index
    %144 = vector.load %arg8[%c0_102, %c0_103] : memref<256x36xf32, #tpu.memory_space<vmem>>, vector<256x4xf32>
    tpu.vector_store %arg8[%c0_102, %c0_103], %143 {strides = array<i32>} : memref<256x36xf32, #tpu.memory_space<vmem>>, vector<256x4xf32>,
    %c0_104 = arith.constant 0 : index
    %c1_105 = arith.constant 1 : index
    %c0_106 = arith.constant 0 : index
    %145 = vector.load %arg7[%c0_104, %c1_105, %c0_106] : memref<18x18x4xf32, #tpu.memory_space<vmem>>, vector<16x16x4xf32>
    %146 = vector.shape_cast %145 : vector<16x16x4xf32> to vector<256x4xf32>
    %c0_107 = arith.constant 0 : index
    %c4_108 = arith.constant 4 : index
    %147 = vector.load %arg8[%c0_107, %c4_108] : memref<256x36xf32, #tpu.memory_space<vmem>>, vector<256x4xf32>
    tpu.vector_store %arg8[%c0_107, %c4_108], %146 {strides = array<i32>} : memref<256x36xf32, #tpu.memory_space<vmem>>, vector<256x4xf32>,
    %c0_109 = arith.constant 0 : index
    %c2_110 = arith.constant 2 : index
    %c0_111 = arith.constant 0 : index
    %148 = vector.load %arg7[%c0_109, %c2_110, %c0_111] : memref<18x18x4xf32, #tpu.memory_space<vmem>>, vector<16x16x4xf32>
    %149 = vector.shape_cast %148 : vector<16x16x4xf32> to vector<256x4xf32>
    %c0_112 = arith.constant 0 : index
    %c8_113 = arith.constant 8 : index
    %150 = vector.load %arg8[%c0_112, %c8_113] : memref<256x36xf32, #tpu.memory_space<vmem>>, vector<256x4xf32>
    tpu.vector_store %arg8[%c0_112, %c8_113], %149 {strides = array<i32>} : memref<256x36xf32, #tpu.memory_space<vmem>>, vector<256x4xf32>,
    %c1_114 = arith.constant 1 : index
    %c0_115 = arith.constant 0 : index
    %c0_116 = arith.constant 0 : index
    %151 = vector.load %arg7[%c1_114, %c0_115, %c0_116] : memref<18x18x4xf32, #tpu.memory_space<vmem>>, vector<16x16x4xf32>
    %152 = vector.shape_cast %151 : vector<16x16x4xf32> to vector<256x4xf32>
    %c0_117 = arith.constant 0 : index
    %c12_118 = arith.constant 12 : index
    %153 = vector.load %arg8[%c0_117, %c12_118] : memref<256x36xf32, #tpu.memory_space<vmem>>, vector<256x4xf32>
    tpu.vector_store %arg8[%c0_117, %c12_118], %152 {strides = array<i32>} : memref<256x36xf32, #tpu.memory_space<vmem>>, vector<256x4xf32>,
    %c1_119 = arith.constant 1 : index
    %c1_120 = arith.constant 1 : index
    %c0_121 = arith.constant 0 : index
    %154 = vector.load %arg7[%c1_119, %c1_120, %c0_121] : memref<18x18x4xf32, #tpu.memory_space<vmem>>, vector<16x16x4xf32>
    %155 = vector.shape_cast %154 : vector<16x16x4xf32> to vector<256x4xf32>
    %c0_122 = arith.constant 0 : index
    %c16_123 = arith.constant 16 : index
    %156 = vector.load %arg8[%c0_122, %c16_123] : memref<256x36xf32, #tpu.memory_space<vmem>>, vector<256x4xf32>
    tpu.vector_store %arg8[%c0_122, %c16_123], %155 {strides = array<i32>} : memref<256x36xf32, #tpu.memory_space<vmem>>, vector<256x4xf32>,
    %c1_124 = arith.constant 1 : index
    %c2_125 = arith.constant 2 : index
    %c0_126 = arith.constant 0 : index
    %157 = vector.load %arg7[%c1_124, %c2_125, %c0_126] : memref<18x18x4xf32, #tpu.memory_space<vmem>>, vector<16x16x4xf32>
    %158 = vector.shape_cast %157 : vector<16x16x4xf32> to vector<256x4xf32>
    %c0_127 = arith.constant 0 : index
    %c20 = arith.constant 20 : index
    %159 = vector.load %arg8[%c0_127, %c20] : memref<256x36xf32, #tpu.memory_space<vmem>>, vector<256x4xf32>
    tpu.vector_store %arg8[%c0_127, %c20], %158 {strides = array<i32>} : memref<256x36xf32, #tpu.memory_space<vmem>>, vector<256x4xf32>,
    %c2_128 = arith.constant 2 : index
    %c0_129 = arith.constant 0 : index
    %c0_130 = arith.constant 0 : index
    %160 = vector.load %arg7[%c2_128, %c0_129, %c0_130] : memref<18x18x4xf32, #tpu.memory_space<vmem>>, vector<16x16x4xf32>
    %161 = vector.shape_cast %160 : vector<16x16x4xf32> to vector<256x4xf32>
    %c0_131 = arith.constant 0 : index
    %c24 = arith.constant 24 : index
    %162 = vector.load %arg8[%c0_131, %c24] : memref<256x36xf32, #tpu.memory_space<vmem>>, vector<256x4xf32>
    tpu.vector_store %arg8[%c0_131, %c24], %161 {strides = array<i32>} : memref<256x36xf32, #tpu.memory_space<vmem>>, vector<256x4xf32>,
    %c2_132 = arith.constant 2 : index
    %c1_133 = arith.constant 1 : index
    %c0_134 = arith.constant 0 : index
    %163 = vector.load %arg7[%c2_132, %c1_133, %c0_134] : memref<18x18x4xf32, #tpu.memory_space<vmem>>, vector<16x16x4xf32>
    %164 = vector.shape_cast %163 : vector<16x16x4xf32> to vector<256x4xf32>
    %c0_135 = arith.constant 0 : index
    %c28 = arith.constant 28 : index
    %165 = vector.load %arg8[%c0_135, %c28] : memref<256x36xf32, #tpu.memory_space<vmem>>, vector<256x4xf32>
    tpu.vector_store %arg8[%c0_135, %c28], %164 {strides = array<i32>} : memref<256x36xf32, #tpu.memory_space<vmem>>, vector<256x4xf32>,
    %c2_136 = arith.constant 2 : index
    %c2_137 = arith.constant 2 : index
    %c0_138 = arith.constant 0 : index
    %166 = vector.load %arg7[%c2_136, %c2_137, %c0_138] : memref<18x18x4xf32, #tpu.memory_space<vmem>>, vector<16x16x4xf32>
    %167 = vector.shape_cast %166 : vector<16x16x4xf32> to vector<256x4xf32>
    %c0_139 = arith.constant 0 : index
    %c32 = arith.constant 32 : index
    %168 = vector.load %arg8[%c0_139, %c32] : memref<256x36xf32, #tpu.memory_space<vmem>>, vector<256x4xf32>
    tpu.vector_store %arg8[%c0_139, %c32], %167 {strides = array<i32>} : memref<256x36xf32, #tpu.memory_space<vmem>>, vector<256x4xf32>,
    %c0_140 = arith.constant 0 : index
    %c0_141 = arith.constant 0 : index
    %169 = vector.load %arg8[%c0_140, %c0_141] : memref<256x36xf32, #tpu.memory_space<vmem>>, vector<256x36xf32>
    %c0_142 = arith.constant 0 : index
    %c0_143 = arith.constant 0 : index
    %170 = vector.load %arg3[%c0_142, %c0_143] : memref<36x4xf32, #tpu.memory_space<vmem>>, vector<36x4xf32>
    %cst_144 = arith.constant dense<0.000000e+00> : vector<256x4xf32>
    %171 = tpu.matmul %169, %170, %cst_144 {dimension_numbers = #tpu.dot_dimension_numbers<[1], [0], [0], [1], [0, 0, 1, 1], [], []>} : vector<256x36xf32>, vector<36x4xf32>, vector<256x4xf32> -> vector<256x4xf32>
    %c0_145 = arith.constant 0 : index
    %c0_146 = arith.constant 0 : index
    %172 = vector.load %arg4[%c0_145, %c0_146] : memref<1x4xf32, #tpu.memory_space<vmem>>, vector<1x4xf32>
    %173 = vector.broadcast %172 : vector<1x4xf32> to vector<256x4xf32>
    %174 = arith.addf %171, %173 : vector<256x4xf32>
    %cst_147 = arith.constant 0.000000e+00 : f32
    %175 = vector.broadcast %cst_147 : f32 to vector<256x4xf32>
    %176 = arith.maximumf %174, %175 : vector<256x4xf32>
    %c0_148 = arith.constant 0 : index
    %c0_149 = arith.constant 0 : index
    %c0_150 = arith.constant 0 : index
    %177 = vector.load %arg5[%c0_148, %c0_149, %c0_150] : memref<1x256x4xf32, #tpu.memory_space<vmem>>, vector<1x256x4xf32>
    %178 = vector.shape_cast %177 : vector<1x256x4xf32> to vector<256x4xf32>
    %179 = vector.shape_cast %176 : vector<256x4xf32> to vector<1x256x4xf32>
    tpu.vector_store %arg5[%c0_148, %c0_149, %c0_150], %179 {strides = array<i32>} : memref<1x256x4xf32, #tpu.memory_space<vmem>>, vector<1x256x4xf32>,
    return
  }
  func.func @transform_0(%arg0: i32) -> (i32, i32, i32, i32) {
    %c0_i32 = arith.constant 0 : i32
    %c0_i32_0 = arith.constant 0 : i32
    %c0_i32_1 = arith.constant 0 : i32
    %c0_i32_2 = arith.constant 0 : i32
    return %arg0, %c0_i32, %c0_i32_0, %c0_i32_1 : i32, i32, i32, i32
  }
  func.func @transform_1(%arg0: i32) -> i32 {
    %c0_i32 = arith.constant 0 : i32
    %c0_i32_0 = arith.constant 0 : i32
    return %c0_i32 : i32
  }
  func.func @transform_2(%arg0: i32) -> (i32, i32) {
    %c0_i32 = arith.constant 0 : i32
    %c0_i32_0 = arith.constant 0 : i32
    %c0_i32_1 = arith.constant 0 : i32
    return %c0_i32, %c0_i32_0 : i32, i32
  }
  func.func @transform_3(%arg0: i32) -> (i32, i32) {
    %c0_i32 = arith.constant 0 : i32
    %c0_i32_0 = arith.constant 0 : i32
    %c0_i32_1 = arith.constant 0 : i32
    return %c0_i32, %c0_i32_0 : i32, i32
  }
  func.func @transform_4(%arg0: i32) -> (i32, i32, i32) {
    %c0_i32 = arith.constant 0 : i32
    %c0_i32_0 = arith.constant 0 : i32
    %c0_i32_1 = arith.constant 0 : i32
    return %arg0, %c0_i32, %c0_i32_0 : i32, i32, i32
  }
}

</mosaic_0001>

<llo_original>
// kernel: tpu_custom_call.1
$region0: #{tpu_custom_call.1}
  #allocation0 [shape = 'u32[]', space=smem, size = 0x4, offset = 0x4, fixed_abs, tag = 'smem constant byte address 0x4 - core index']
  #allocation1 [shape = 'u32[72,128]{1,0:T(1,128)}', space=vmem, size = 0x9000, scoped, tag = 'internal scratch']
  #allocation2 [shape = 'f32[2,18,18]{2,1,0:T(8,128)}', space=vmem, size = 0x6000, scoped, tag = 'scratch operand']
  #allocation3 [shape = 'f32[18,18,4]{2,1,0:T(8,128)}', space=vmem, size = 0x36000, scoped, tag = 'scratch operand']
  #allocation4 [shape = 'f32[256,36]{1,0:T(8,128)}', space=vmem, size = 0x20000, scoped, tag = 'scratch operand']
  %s0 = inlined_call_operand.vmem [shape: f32[2,16,16,4], index: 0, kind: input, shape index: {}]
  %s1 = inlined_call_operand.vmem [shape: f32[18], index: 1, kind: input, shape index: {}]
  %s2 = inlined_call_operand.vmem [shape: f32[36,4], index: 2, kind: input, shape index: {}]
  %s3 = inlined_call_operand.vmem [shape: f32[1,4], index: 3, kind: input, shape index: {}]
  %s4 = inlined_call_operand.vmem [shape: f32[2,256,4], index: 4, kind: output, shape index: {}]
  %s5 = sld [smem:[#allocation0]]
  $region53: #{tpu_custom_call.1} parent=0
    _
  %s7 = ssub.s32 1, %s5
  %s8 = scalar_select 0, %s7, %s5
  $region1: #{tpu_custom_call.1} parent=0
    #allocation5 [shape = 'u8[512]{0}', space=smem, size = 0x200, scoped, tag = 'input window, operand 1, single buffered']
    #allocation6 [shape = 's32[2]{0}', space=sflag, size = 0x8, scoped, tag = 'scoped memory for tpu_custom_call.1']
    %9 = vsyncpa [#allocation6], 0
    loop: start=0, step=1, limit=4
    $region2: #{tpu_custom_call.1} parent=1 // loop_pre_header
      _
    $region3: #{tpu_custom_call.1} parent=1 // loop_header
      %s11 = sphi 0, %s15
      %p12 = scmp.ge.s32.totalorder %s11, 4
      %s21 = sphi 0, %s23
      %s24 = sphi 0, %s21
      %s25 = sphi 0, %s24
      %s41 = sphi 0, %s25
      %s45 = sphi 0, %s45
      %s47 = sphi 0, %s45
      %s48 = sphi 0, %s47
      %s62 = sphi 0, %s48
      %s66 = sphi 0, %s66
      %s68 = sphi 0, %s66
      %s69 = sphi 0, %s68
      %s83 = sphi 0, %s69
      %s87 = sphi 0, %s87
      %s89 = sphi 0, %s87
      %s90 = sphi 0, %s89
      %s104 = sphi 0, %s90
      %s110 = sphi 0, %s112
      %s113 = sphi 0, %s110
      %s114 = sphi 0, %s113
      %s130 = sphi 0, %s114
    $region4: #{tpu_custom_call.1} parent=1 // loop_header_branch
      %14 = sbr.rel (%p12) target = $region8
    $region5: #{tpu_custom_call.1} parent=1 // loop_body
      %s16 = ssub.s32 %s11, 1
      %s17 = ssub.s32 %s11, 2
      %s18 = sadd.s32 %s11, 1
      %s19 = ssub.s32 %s11, %s18
      %p20 = scmp.eq.s32.totalorder %s19, 0
      %s22 = sadd.s32 %s21, 1
      %s23 = scalar_select %p20, %s21, %s22
      %p26 = pneg %p20
      %p27 = scmp.eq.s32.totalorder %s11, 1
      %p28 = por %p26, %p27
      %p29 = scmp.ne.s32.totalorder %s21, %s24
      %p30 = scmp.eq.s32.totalorder %s11, 0
      %p31 = por %p29, %p30
      %p32 = scmp.ne.s32.totalorder %s21, %s24
      %p33 = scmp.eq.s32.totalorder %s16, 1
      %p34 = por %p32, %p33
      %p35 = scmp.ne.s32.totalorder %s24, %s25
      %p36 = scmp.eq.s32.totalorder %s16, 0
      %p37 = por %p35, %p36
      %p38 = scmp.ne.s32.totalorder %s24, %s25
      %p39 = scmp.eq.s32.totalorder %s17, 1
      %p40 = por %p38, %p39
      %p42 = scmp.ne.s32.totalorder %s25, %s41
      %p43 = scmp.eq.s32.totalorder %s17, 0
      %p44 = por %p42, %p43
      %s46 = sadd.s32 %s45, 1
      %p49 = scmp.eq.s32.totalorder %s11, 1
      %p50 = scmp.ne.s32.totalorder %s45, %s47
      %p51 = scmp.eq.s32.totalorder %s11, 0
      %p52 = por %p50, %p51
      %p53 = scmp.ne.s32.totalorder %s45, %s47
      %p54 = scmp.eq.s32.totalorder %s16, 1
      %p55 = por %p53, %p54
      %p56 = scmp.ne.s32.totalorder %s47, %s48
      %p57 = scmp.eq.s32.totalorder %s16, 0
      %p58 = por %p56, %p57
      %p59 = scmp.ne.s32.totalorder %s47, %s48
      %p60 = scmp.eq.s32.totalorder %s17, 1
      %p61 = por %p59, %p60
      %p63 = scmp.ne.s32.totalorder %s48, %s62
      %p64 = scmp.eq.s32.totalorder %s17, 0
      %p65 = por %p63, %p64
      %s67 = sadd.s32 %s66, 1
      %p70 = scmp.eq.s32.totalorder %s11, 1
      %p71 = scmp.ne.s32.totalorder %s66, %s68
      %p72 = scmp.eq.s32.totalorder %s11, 0
      %p73 = por %p71, %p72
      %p74 = scmp.ne.s32.totalorder %s66, %s68
      %p75 = scmp.eq.s32.totalorder %s16, 1
      %p76 = por %p74, %p75
      %p77 = scmp.ne.s32.totalorder %s68, %s69
      %p78 = scmp.eq.s32.totalorder %s16, 0
      %p79 = por %p77, %p78
      %p80 = scmp.ne.s32.totalorder %s68, %s69
      %p81 = scmp.eq.s32.totalorder %s17, 1
      %p82 = por %p80, %p81
      %p84 = scmp.ne.s32.totalorder %s69, %s83
      %p85 = scmp.eq.s32.totalorder %s17, 0
      %p86 = por %p84, %p85
      %s88 = sadd.s32 %s87, 1
      %p91 = scmp.eq.s32.totalorder %s11, 1
      %p92 = scmp.ne.s32.totalorder %s87, %s89
      %p93 = scmp.eq.s32.totalorder %s11, 0
      %p94 = por %p92, %p93
      %p95 = scmp.ne.s32.totalorder %s87, %s89
      %p96 = scmp.eq.s32.totalorder %s16, 1
      %p97 = por %p95, %p96
      %p98 = scmp.ne.s32.totalorder %s89, %s90
      %p99 = scmp.eq.s32.totalorder %s16, 0
      %p100 = por %p98, %p99
      %p101 = scmp.ne.s32.totalorder %s89, %s90
      %p102 = scmp.eq.s32.totalorder %s17, 1
      %p103 = por %p101, %p102
      %p105 = scmp.ne.s32.totalorder %s90, %s104
      %p106 = scmp.eq.s32.totalorder %s17, 0
      %p107 = por %p105, %p106
      %s108 = ssub.s32 %s11, %s18
      %p109 = scmp.eq.s32.totalorder %s108, 0
      %s111 = sadd.s32 %s110, 1
      %s112 = scalar_select %p109, %s110, %s111
      %p115 = pneg %p109
      %p116 = scmp.eq.s32.totalorder %s11, 1
      %p117 = por %p115, %p116
      %p118 = scmp.ne.s32.totalorder %s110, %s113
      %p119 = scmp.eq.s32.totalorder %s11, 0
      %p120 = por %p118, %p119
      %p121 = scmp.ne.s32.totalorder %s110, %s113
      %p122 = scmp.eq.s32.totalorder %s16, 1
      %p123 = por %p121, %p122
      %p124 = scmp.ne.s32.totalorder %s113, %s114
      %p125 = scmp.eq.s32.totalorder %s16, 0
      %p126 = por %p124, %p125
      %p127 = scmp.ne.s32.totalorder %s113, %s114
      %p128 = scmp.eq.s32.totalorder %s17, 1
      %p129 = por %p127, %p128
      %p131 = scmp.ne.s32.totalorder %s114, %s130
      %p132 = scmp.eq.s32.totalorder %s17, 0
      %p133 = por %p131, %p132
      %p134 = scmp.le.s32.totalorder 1, %s11
      %p135 = scmp.lt.s32.totalorder %s11, 3
      %p136 = pnand %p134, %p135
      %p137 = pneg %p136
      // Predicated region
      $region9: #{tpu_custom_call.1} parent=5 // pred_check
        _
      $region10: #{tpu_custom_call.1} parent=5 // pred_check_branch
        %139 = sbr.rel (%p136) target = $region12
      $region11: #{tpu_custom_call.1} parent=5 // pred_region
        %s140 = ssub.s32 %s11, 1
        // Predicated region
        $region13: #{tpu_custom_call.1} parent=11 // pred_check
          %p141 = pneg %p58
        $region14: #{tpu_custom_call.1} parent=11 // pred_check_branch
          %143 = sbr.rel (%p141) target = $region16
        $region15: #{tpu_custom_call.1} parent=11 // pred_region
          %145 = vsyncadd [#allocation6], 0
          %s147 = sshll.u32 %s1, 4
          %s148 = int_to_ptr.vmem [resolvable:$true] %s147
          %150 = dma.vmem_to_smem %s148, 16, [#allocation5], [#allocation6]
        $region16: #{tpu_custom_call.1} parent=11 // pred_fallthru
          _
        // Predicated region
        $region17: #{tpu_custom_call.1} parent=11 // pred_check
          %p151 = pneg %p79
        $region18: #{tpu_custom_call.1} parent=11 // pred_check_branch
          %153 = sbr.rel (%p151) target = $region20
        $region19: #{tpu_custom_call.1} parent=11 // pred_region
          _
        $region20: #{tpu_custom_call.1} parent=11 // pred_fallthru
          _
        // Predicated region
        $region21: #{tpu_custom_call.1} parent=11 // pred_check
          %p154 = pneg %p100
        $region22: #{tpu_custom_call.1} parent=11 // pred_check_branch
          %156 = sbr.rel (%p154) target = $region24
        $region23: #{tpu_custom_call.1} parent=11 // pred_region
          _
        $region24: #{tpu_custom_call.1} parent=11 // pred_fallthru
          _
      $region12: #{tpu_custom_call.1} parent=5 // pred_fallthru
        _
      %p157 = scmp.lt.s32.totalorder %s11, 2
      // Predicated region
      $region25: #{tpu_custom_call.1} parent=5 // pred_check
        %p158 = pneg %p157
      $region26: #{tpu_custom_call.1} parent=5 // pred_check_branch
        %160 = sbr.rel (%p158) target = $region28
      $region27: #{tpu_custom_call.1} parent=5 // pred_region
        // Predicated region
        $region29: #{tpu_custom_call.1} parent=27 // pred_check
          %p161 = pneg %p31
        $region30: #{tpu_custom_call.1} parent=27 // pred_check_branch
          %163 = sbr.rel (%p161) target = $region32
        $region31: #{tpu_custom_call.1} parent=27 // pred_region
          %p164 = scmp.lt.s32.totalorder %s11, 1
          %s165 = scalar_select %p164, %s11, 1
          %s166 = smul.addr %s165, 32
          %s167 = smul.addr %s166, 8
          %s168 = scalar_lea.vmem %s0, %s167
        $region32: #{tpu_custom_call.1} parent=27 // pred_fallthru
          _
      $region28: #{tpu_custom_call.1} parent=5 // pred_fallthru
        _
      %p169 = scmp.le.s32.totalorder 1, %s11
      %p170 = scmp.lt.s32.totalorder %s11, 3
      %p171 = pnand %p169, %p170
      %p172 = pneg %p171
      // Predicated region
      $region33: #{tpu_custom_call.1} parent=5 // pred_check
        _
      $region34: #{tpu_custom_call.1} parent=5 // pred_check_branch
        %174 = sbr.rel (%p171) target = $region36
      $region35: #{tpu_custom_call.1} parent=5 // pred_region
        %s175 = ssub.s32 %s11, 1
        // Predicated region
        $region37: #{tpu_custom_call.1} parent=35 // pred_check
          %p176 = pneg %p58
        $region38: #{tpu_custom_call.1} parent=35 // pred_check_branch
          %178 = sbr.rel (%p176) target = $region40
        $region39: #{tpu_custom_call.1} parent=35 // pred_region
          %180 = dma.done [#allocation6], 16
        $region40: #{tpu_custom_call.1} parent=35 // pred_fallthru
          _
        %181 = sfence
        %p182 = scmp.lt.s32.totalorder %s16, 1
        %s183 = scalar_select %p182, %s16, 1
        %s184 = smul.addr %s183, 32
        %s185 = smul.addr %s184, 8
        %s186 = scalar_lea.vmem %s0, %s185
        %p187 = pneg %p37
        %p188 = pneg %p34
        %p189 = pneg %p58
        %p190 = pneg %p55
        %p191 = pneg %p79
        %p192 = pneg %p76
        %p193 = pneg %p100
        %p194 = pneg %p97
        %p195 = pneg %p126
        %p196 = pneg %p123
        %p197 = scmp.lt.s32.totalorder %s16, 1
        %s198 = scalar_select %p197, %s16, 1
        %s199 = smul.addr %s198, 32
        %s200 = smul.addr %s199, 8
        %s201 = scalar_lea.vmem %s4, %s200
        %p202 = scmp.lt.s32.totalorder %s16, 1
        %s203 = scalar_select %p202, %s16, 1
        %s204 = smul.addr %s203, 32
        %s205 = smul.addr %s204, 8
        %s206 = scalar_lea.vmem %s0, %s205
        %p207 = scmp.lt.s32.totalorder %s16, 1
        %s208 = scalar_select %p207, %s16, 1
        %s209 = smul.addr %s208, 32
        %s210 = smul.addr %s209, 8
        %s211 = scalar_lea.vmem %s4, %s210
        %v212 = vld [vmem:[%s206] sm:$0xff]
        %v213 = vld [vmem:[%s206 + $0x8] sm:$0xff]
        %v214 = vld [vmem:[%s206 + $0x10] sm:$0xff]
        %v215 = vld [vmem:[%s206 + $0x18] sm:$0xff]
        %v216 = vld [vmem:[%s206 + $0x20] sm:$0xff]
        %v217 = vld [vmem:[%s206 + $0x28] sm:$0xff]
        %v218 = vld [vmem:[%s206 + $0x30] sm:$0xff]
        %v219 = vld [vmem:[%s206 + $0x38] sm:$0xff]
        %v220 = vld [vmem:[%s206 + $0x40] sm:$0xff]
        %v221 = vld [vmem:[%s206 + $0x48] sm:$0xff]
        %v222 = vld [vmem:[%s206 + $0x50] sm:$0xff]
        %v223 = vld [vmem:[%s206 + $0x58] sm:$0xff]
        %v224 = vld [vmem:[%s206 + $0x60] sm:$0xff]
        %v225 = vld [vmem:[%s206 + $0x68] sm:$0xff]
        %v226 = vld [vmem:[%s206 + $0x70] sm:$0xff]
        %v227 = vld [vmem:[%s206 + $0x78] sm:$0xff]
        %v228 = vld [vmem:[%s206 + $0x80] sm:$0xff]
        %v229 = vld [vmem:[%s206 + $0x88] sm:$0xff]
        %v230 = vld [vmem:[%s206 + $0x90] sm:$0xff]
        %v231 = vld [vmem:[%s206 + $0x98] sm:$0xff]
        %v232 = vld [vmem:[%s206 + $0xa0] sm:$0xff]
        %v233 = vld [vmem:[%s206 + $0xa8] sm:$0xff]
        %v234 = vld [vmem:[%s206 + $0xb0] sm:$0xff]
        %v235 = vld [vmem:[%s206 + $0xb8] sm:$0xff]
        %v236 = vld [vmem:[%s206 + $0xc0] sm:$0xff]
        %v237 = vld [vmem:[%s206 + $0xc8] sm:$0xff]
        %v238 = vld [vmem:[%s206 + $0xd0] sm:$0xff]
        %v239 = vld [vmem:[%s206 + $0xd8] sm:$0xff]
        %v240 = vld [vmem:[%s206 + $0xe0] sm:$0xff]
        %v241 = vld [vmem:[%s206 + $0xe8] sm:$0xff]
        %v242 = vld [vmem:[%s206 + $0xf0] sm:$0xff]
        %v243 = vld [vmem:[%s206 + $0xf8] sm:$0xff]
        %vm244 = vcmask 31744
        %v245 = vsel %vm244, %v212, 0.0
        %246 = vadd.xlane.f32.xlu0 %v245
        %v247 = vpop.xlane.xlu0 %246
        %v248 = vsel %vm244, %v213, 0.0
        %249 = vadd.xlane.f32.xlu0 %v248
        %v250 = vpop.xlane.xlu0 %249
        %v251 = vsel %vm244, %v214, 0.0
        %252 = vadd.xlane.f32.xlu0 %v251
        %v253 = vpop.xlane.xlu0 %252
        %v254 = vsel %vm244, %v215, 0.0
        %255 = vadd.xlane.f32.xlu0 %v254
        %v256 = vpop.xlane.xlu0 %255
        %v257 = vsel %vm244, %v216, 0.0
        %258 = vadd.xlane.f32.xlu0 %v257
        %v259 = vpop.xlane.xlu0 %258
        %v260 = vsel %vm244, %v217, 0.0
        %261 = vadd.xlane.f32.xlu0 %v260
        %v262 = vpop.xlane.xlu0 %261
        %v263 = vsel %vm244, %v218, 0.0
        %264 = vadd.xlane.f32.xlu0 %v263
        %v265 = vpop.xlane.xlu0 %264
        %v266 = vsel %vm244, %v219, 0.0
        %267 = vadd.xlane.f32.xlu0 %v266
        %v268 = vpop.xlane.xlu0 %267
        %v269 = vsel %vm244, %v220, 0.0
        %270 = vadd.xlane.f32.xlu0 %v269
        %v271 = vpop.xlane.xlu0 %270
        %v272 = vsel %vm244, %v221, 0.0
        %273 = vadd.xlane.f32.xlu0 %v272
        %v274 = vpop.xlane.xlu0 %273
        %v275 = vsel %vm244, %v222, 0.0
        %276 = vadd.xlane.f32.xlu0 %v275
        %v277 = vpop.xlane.xlu0 %276
        %v278 = vsel %vm244, %v223, 0.0
        %279 = vadd.xlane.f32.xlu0 %v278
        %v280 = vpop.xlane.xlu0 %279
        %v281 = vsel %vm244, %v224, 0.0
        %282 = vadd.xlane.f32.xlu0 %v281
        %v283 = vpop.xlane.xlu0 %282
        %v284 = vsel %vm244, %v225, 0.0
        %285 = vadd.xlane.f32.xlu0 %v284
        %v286 = vpop.xlane.xlu0 %285
        %v287 = vsel %vm244, %v226, 0.0
        %288 = vadd.xlane.f32.xlu0 %v287
        %v289 = vpop.xlane.xlu0 %288
        %v290 = vsel %vm244, %v227, 0.0
        %291 = vadd.xlane.f32.xlu0 %v290
        %v292 = vpop.xlane.xlu0 %291
        %v293 = vsel %vm244, %v228, 0.0
        %294 = vadd.xlane.f32.xlu0 %v293
        %v295 = vpop.xlane.xlu0 %294
        %v296 = vsel %vm244, %v229, 0.0
        %297 = vadd.xlane.f32.xlu0 %v296
        %v298 = vpop.xlane.xlu0 %297
        %v299 = vsel %vm244, %v230, 0.0
        %300 = vadd.xlane.f32.xlu0 %v299
        %v301 = vpop.xlane.xlu0 %300
        %v302 = vsel %vm244, %v231, 0.0
        %303 = vadd.xlane.f32.xlu0 %v302
        %v304 = vpop.xlane.xlu0 %303
        %v305 = vsel %vm244, %v232, 0.0
        %306 = vadd.xlane.f32.xlu0 %v305
        %v307 = vpop.xlane.xlu0 %306
        %v308 = vsel %vm244, %v233, 0.0
        %309 = vadd.xlane.f32.xlu0 %v308
        %v310 = vpop.xlane.xlu0 %309
        %v311 = vsel %vm244, %v234, 0.0
        %312 = vadd.xlane.f32.xlu0 %v311
        %v313 = vpop.xlane.xlu0 %312
        %v314 = vsel %vm244, %v235, 0.0
        %315 = vadd.xlane.f32.xlu0 %v314
        %v316 = vpop.xlane.xlu0 %315
        %v317 = vsel %vm244, %v236, 0.0
        %318 = vadd.xlane.f32.xlu0 %v317
        %v319 = vpop.xlane.xlu0 %318
        %v320 = vsel %vm244, %v237, 0.0
        %321 = vadd.xlane.f32.xlu0 %v320
        %v322 = vpop.xlane.xlu0 %321
        %v323 = vsel %vm244, %v238, 0.0
        %324 = vadd.xlane.f32.xlu0 %v323
        %v325 = vpop.xlane.xlu0 %324
        %v326 = vsel %vm244, %v239, 0.0
        %327 = vadd.xlane.f32.xlu0 %v326
        %v328 = vpop.xlane.xlu0 %327
        %v329 = vsel %vm244, %v240, 0.0
        %330 = vadd.xlane.f32.xlu0 %v329
        %v331 = vpop.xlane.xlu0 %330
        %v332 = vsel %vm244, %v241, 0.0
        %333 = vadd.xlane.f32.xlu0 %v332
        %v334 = vpop.xlane.xlu0 %333
        %v335 = vsel %vm244, %v242, 0.0
        %336 = vadd.xlane.f32.xlu0 %v335
        %v337 = vpop.xlane.xlu0 %336
        %v338 = vsel %vm244, %v243, 0.0
        %339 = vadd.xlane.f32.xlu0 %v338
        %v340 = vpop.xlane.xlu0 %339
        %v341 = vrcp.pop 4.0
        %v342 = vmul.f32 4.0, %v341
        %v343 = vsub.f32 1.0, %v342
        %v344 = vmul.f32 %v341, %v343
        %v345 = vadd.f32 %v341, %v344
        %vm346 = vweird.f32 %v341
        %v347 = vsel %vm346, %v341, %v345
        %v348 = vmul.f32 %v247, %v347
        %v349 = vmul.f32 %v250, %v347
        %v350 = vmul.f32 %v253, %v347
        %v351 = vmul.f32 %v256, %v347
        %v352 = vmul.f32 %v259, %v347
        %v353 = vmul.f32 %v262, %v347
        %v354 = vmul.f32 %v265, %v347
        %v355 = vmul.f32 %v268, %v347
        %v356 = vmul.f32 %v271, %v347
        %v357 = vmul.f32 %v274, %v347
        %v358 = vmul.f32 %v277, %v347
        %v359 = vmul.f32 %v280, %v347
        %v360 = vmul.f32 %v283, %v347
        %v361 = vmul.f32 %v286, %v347
        %v362 = vmul.f32 %v289, %v347
        %v363 = vmul.f32 %v292, %v347
        %v364 = vmul.f32 %v295, %v347
        %v365 = vmul.f32 %v298, %v347
        %v366 = vmul.f32 %v301, %v347
        %v367 = vmul.f32 %v304, %v347
        %v368 = vmul.f32 %v307, %v347
        %v369 = vmul.f32 %v310, %v347
        %v370 = vmul.f32 %v313, %v347
        %v371 = vmul.f32 %v316, %v347
        %v372 = vmul.f32 %v319, %v347
        %v373 = vmul.f32 %v322, %v347
        %v374 = vmul.f32 %v325, %v347
        %v375 = vmul.f32 %v328, %v347
        %v376 = vmul.f32 %v331, %v347
        %v377 = vmul.f32 %v334, %v347
        %v378 = vmul.f32 %v337, %v347
        %v379 = vmul.f32 %v340, %v347
        %v380 = vsel %vm244, %v212, -inf
        %381 = vmax.xlane.f32.xlu0 %v380
        %v382 = vpop.xlane.xlu0 %381
        %v383 = vsel %vm244, %v213, -inf
        %384 = vmax.xlane.f32.xlu0 %v383
        %v385 = vpop.xlane.xlu0 %384
        %v386 = vsel %vm244, %v214, -inf
        %387 = vmax.xlane.f32.xlu0 %v386
        %v388 = vpop.xlane.xlu0 %387
        %v389 = vsel %vm244, %v215, -inf
        %390 = vmax.xlane.f32.xlu0 %v389
        %v391 = vpop.xlane.xlu0 %390
        %v392 = vsel %vm244, %v216, -inf
        %393 = vmax.xlane.f32.xlu0 %v392
        %v394 = vpop.xlane.xlu0 %393
        %v395 = vsel %vm244, %v217, -inf
        %396 = vmax.xlane.f32.xlu0 %v395
        %v397 = vpop.xlane.xlu0 %396
        %v398 = vsel %vm244, %v218, -inf
        %399 = vmax.xlane.f32.xlu0 %v398
        %v400 = vpop.xlane.xlu0 %399
        %v401 = vsel %vm244, %v219, -inf
        %402 = vmax.xlane.f32.xlu0 %v401
        %v403 = vpop.xlane.xlu0 %402
        %v404 = vsel %vm244, %v220, -inf
        %405 = vmax.xlane.f32.xlu0 %v404
        %v406 = vpop.xlane.xlu0 %405
        %v407 = vsel %vm244, %v221, -inf
        %408 = vmax.xlane.f32.xlu0 %v407
        %v409 = vpop.xlane.xlu0 %408
        %v410 = vsel %vm244, %v222, -inf
        %411 = vmax.xlane.f32.xlu0 %v410
        %v412 = vpop.xlane.xlu0 %411
        %v413 = vsel %vm244, %v223, -inf
        %414 = vmax.xlane.f32.xlu0 %v413
        %v415 = vpop.xlane.xlu0 %414
        %v416 = vsel %vm244, %v224, -inf
        %417 = vmax.xlane.f32.xlu0 %v416
        %v418 = vpop.xlane.xlu0 %417
        %v419 = vsel %vm244, %v225, -inf
        %420 = vmax.xlane.f32.xlu0 %v419
        %v421 = vpop.xlane.xlu0 %420
        %v422 = vsel %vm244, %v226, -inf
        %423 = vmax.xlane.f32.xlu0 %v422
        %v424 = vpop.xlane.xlu0 %423
        %v425 = vsel %vm244, %v227, -inf
        %426 = vmax.xlane.f32.xlu0 %v425
        %v427 = vpop.xlane.xlu0 %426
        %v428 = vsel %vm244, %v228, -inf
        %429 = vmax.xlane.f32.xlu0 %v428
        %v430 = vpop.xlane.xlu0 %429
        %v431 = vsel %vm244, %v229, -inf
        %432 = vmax.xlane.f32.xlu0 %v431
        %v433 = vpop.xlane.xlu0 %432
        %v434 = vsel %vm244, %v230, -inf
        %435 = vmax.xlane.f32.xlu0 %v434
        %v436 = vpop.xlane.xlu0 %435
        %v437 = vsel %vm244, %v231, -inf
        %438 = vmax.xlane.f32.xlu0 %v437
        %v439 = vpop.xlane.xlu0 %438
        %v440 = vsel %vm244, %v232, -inf
        %441 = vmax.xlane.f32.xlu0 %v440
        %v442 = vpop.xlane.xlu0 %441
        %v443 = vsel %vm244, %v233, -inf
        %444 = vmax.xlane.f32.xlu0 %v443
        %v445 = vpop.xlane.xlu0 %444
        %v446 = vsel %vm244, %v234, -inf
        %447 = vmax.xlane.f32.xlu0 %v446
        %v448 = vpop.xlane.xlu0 %447
        %v449 = vsel %vm244, %v235, -inf
        %450 = vmax.xlane.f32.xlu0 %v449
        %v451 = vpop.xlane.xlu0 %450
        %v452 = vsel %vm244, %v236, -inf
        %453 = vmax.xlane.f32.xlu0 %v452
        %v454 = vpop.xlane.xlu0 %453
        %v455 = vsel %vm244, %v237, -inf
        %456 = vmax.xlane.f32.xlu0 %v455
        %v457 = vpop.xlane.xlu0 %456
        %v458 = vsel %vm244, %v238, -inf
        %459 = vmax.xlane.f32.xlu0 %v458
        %v460 = vpop.xlane.xlu0 %459
        %v461 = vsel %vm244, %v239, -inf
        %462 = vmax.xlane.f32.xlu0 %v461
        %v463 = vpop.xlane.xlu0 %462
        %v464 = vsel %vm244, %v240, -inf
        %465 = vmax.xlane.f32.xlu0 %v464
        %v466 = vpop.xlane.xlu0 %465
        %v467 = vsel %vm244, %v241, -inf
        %468 = vmax.xlane.f32.xlu0 %v467
        %v469 = vpop.xlane.xlu0 %468
        %v470 = vsel %vm244, %v242, -inf
        %471 = vmax.xlane.f32.xlu0 %v470
        %v472 = vpop.xlane.xlu0 %471
        %v473 = vsel %vm244, %v243, -inf
        %474 = vmax.xlane.f32.xlu0 %v473
        %v475 = vpop.xlane.xlu0 %474
        %vm476 = vcmask 139264
        %477 = vst.msk [vmem:[#allocation2] sm:$0x1] %vm476, 0.0
        %478 = vst.msk [vmem:[#allocation2 + $0x18] sm:$0x1] %vm476, 0.0
        %479 = vst.msk [vmem:[#allocation2 + $0x11] sm:$0x1] %vm476, 0.0
        %480 = vst.msk [vmem:[#allocation2 + $0x29] sm:$0x1] %vm476, 0.0
        %vm481 = vcmask 7168
        %482 = vst.msk [vmem:[#allocation2] sm:$0xff] %vm481, 0.0
        %483 = vst.msk [vmem:[#allocation2 + $0x8] sm:$0xff] %vm481, 0.0
        %vm484 = vcmask 1024
        %485 = vst.msk [vmem:[#allocation2 + $0x10] sm:$0x3] %vm484, 0.0
        %486 = vst.msk [vmem:[#allocation2 + $0x18] sm:$0xff] %vm481, 0.0
        %487 = vst.msk [vmem:[#allocation2 + $0x20] sm:$0xff] %vm481, 0.0
        %488 = vst.msk [vmem:[#allocation2 + $0x28] sm:$0x3] %vm484, 0.0
        %vm489 = vcmask 146568
        %490 = vst.msk [vmem:[#allocation2] sm:$0xff] %vm489, 0.0
        %491 = vst.msk [vmem:[#allocation2 + $0x8] sm:$0xff] %vm489, 0.0
        %vm492 = vcmask 140424
        %493 = vst.msk [vmem:[#allocation2 + $0x10] sm:$0x3] %vm492, 0.0
        %494 = vst.msk [vmem:[#allocation2 + $0x18] sm:$0xff] %vm489, 0.0
        %495 = vst.msk [vmem:[#allocation2 + $0x20] sm:$0xff] %vm489, 0.0
        %496 = vst.msk [vmem:[#allocation2 + $0x28] sm:$0x3] %vm492, 0.0
        %v529 = vlaneseq
        %v530 = vand.u32 %v529, 127
        %v531 = vadd.s32 %v530, 4294967295
        %v532 = vperm.slane %v348, %v531
        %v533 = vadd.s32 %v530, 4294967287
        %v534 = vperm.slane %v349, %v533
        %vm535 = vcmask 138312
        %v536 = vsel %vm535, %v534, %v532
        %v537 = vperm.slane %v350, %v531
        %v538 = vperm.slane %v351, %v533
        %v539 = vsel %vm535, %v538, %v537
        %v540 = vperm.slane %v352, %v531
        %v541 = vperm.slane %v353, %v533
        %v542 = vsel %vm535, %v541, %v540
        %v543 = vperm.slane %v354, %v531
        %v544 = vperm.slane %v355, %v533
        %v545 = vsel %vm535, %v544, %v543
        %v546 = vperm.slane %v356, %v531
        %v547 = vperm.slane %v357, %v533
        %v548 = vsel %vm535, %v547, %v546
        %v549 = vperm.slane %v358, %v531
        %v550 = vperm.slane %v359, %v533
        %v551 = vsel %vm535, %v550, %v549
        %v552 = vperm.slane %v360, %v531
        %v553 = vperm.slane %v361, %v533
        %v554 = vsel %vm535, %v553, %v552
        %v555 = vperm.slane %v362, %v531
        %v556 = vperm.slane %v363, %v533
        %v557 = vsel %vm535, %v556, %v555
        %v558 = vperm.slane %v364, %v531
        %v559 = vperm.slane %v365, %v533
        %v560 = vsel %vm535, %v559, %v558
        %v561 = vperm.slane %v366, %v531
        %v562 = vperm.slane %v367, %v533
        %v563 = vsel %vm535, %v562, %v561
        %v564 = vperm.slane %v368, %v531
        %v565 = vperm.slane %v369, %v533
        %v566 = vsel %vm535, %v565, %v564
        %v567 = vperm.slane %v370, %v531
        %v568 = vperm.slane %v371, %v533
        %v569 = vsel %vm535, %v568, %v567
        %v570 = vperm.slane %v372, %v531
        %v571 = vperm.slane %v373, %v533
        %v572 = vsel %vm535, %v571, %v570
        %v573 = vperm.slane %v374, %v531
        %v574 = vperm.slane %v375, %v533
        %v575 = vsel %vm535, %v574, %v573
        %v576 = vperm.slane %v376, %v531
        %v577 = vperm.slane %v377, %v533
        %v578 = vsel %vm535, %v577, %v576
        %v579 = vperm.slane %v378, %v531
        %v580 = vperm.slane %v379, %v533
        %v581 = vsel %vm535, %v580, %v579
        %vm582 = vcmask 1041409
        %v583 = vsel %vm582, %v539, %v536
        %vm584 = vcmask 1042434
        %v585 = vsel %vm584, %v542, %v583
        %vm586 = vcmask 1043459
        %v587 = vsel %vm586, %v545, %v585
        %vm588 = vcmask 1044484
        %v589 = vsel %vm588, %v548, %v587
        %vm590 = vcmask 1045509
        %v591 = vsel %vm590, %v551, %v589
        %vm592 = vcmask 1046534
        %v593 = vsel %vm592, %v554, %v591
        %vm594 = vcmask 1047559
        %v595 = vsel %vm594, %v557, %v593
        %v596 = vsel %vm582, %v563, %v560
        %v597 = vsel %vm584, %v566, %v596
        %v598 = vsel %vm586, %v569, %v597
        %v599 = vsel %vm588, %v572, %v598
        %v600 = vsel %vm590, %v575, %v599
        %v601 = vsel %vm592, %v578, %v600
        %v602 = vsel %vm594, %v581, %v601
        %vm605 = vcmask 138248
        %606 = vst.msk [vmem:[#allocation2 + $0x1] sm:$0xff] %vm605, %v595
        %607 = vst.msk [vmem:[#allocation2 + $0x9] sm:$0xff] %vm605, %v602
        %v640 = vperm.slane %v382, %v531
        %v641 = vperm.slane %v385, %v533
        %v642 = vsel %vm535, %v641, %v640
        %v643 = vperm.slane %v388, %v531
        %v644 = vperm.slane %v391, %v533
        %v645 = vsel %vm535, %v644, %v643
        %v646 = vperm.slane %v394, %v531
        %v647 = vperm.slane %v397, %v533
        %v648 = vsel %vm535, %v647, %v646
        %v649 = vperm.slane %v400, %v531
        %v650 = vperm.slane %v403, %v533
        %v651 = vsel %vm535, %v650, %v649
        %v652 = vperm.slane %v406, %v531
        %v653 = vperm.slane %v409, %v533
        %v654 = vsel %vm535, %v653, %v652
        %v655 = vperm.slane %v412, %v531
        %v656 = vperm.slane %v415, %v533
        %v657 = vsel %vm535, %v656, %v655
        %v658 = vperm.slane %v418, %v531
        %v659 = vperm.slane %v421, %v533
        %v660 = vsel %vm535, %v659, %v658
        %v661 = vperm.slane %v424, %v531
        %v662 = vperm.slane %v427, %v533
        %v663 = vsel %vm535, %v662, %v661
        %v664 = vperm.slane %v430, %v531
        %v665 = vperm.slane %v433, %v533
        %v666 = vsel %vm535, %v665, %v664
        %v667 = vperm.slane %v436, %v531
        %v668 = vperm.slane %v439, %v533
        %v669 = vsel %vm535, %v668, %v667
        %v670 = vperm.slane %v442, %v531
        %v671 = vperm.slane %v445, %v533
        %v672 = vsel %vm535, %v671, %v670
        %v673 = vperm.slane %v448, %v531
        %v674 = vperm.slane %v451, %v533
        %v675 = vsel %vm535, %v674, %v673
        %v676 = vperm.slane %v454, %v531
        %v677 = vperm.slane %v457, %v533
        %v678 = vsel %vm535, %v677, %v676
        %v679 = vperm.slane %v460, %v531
        %v680 = vperm.slane %v463, %v533
        %v681 = vsel %vm535, %v680, %v679
        %v682 = vperm.slane %v466, %v531
        %v683 = vperm.slane %v469, %v533
        %v684 = vsel %vm535, %v683, %v682
        %v685 = vperm.slane %v472, %v531
        %v686 = vperm.slane %v475, %v533
        %v687 = vsel %vm535, %v686, %v685
        %v688 = vsel %vm582, %v645, %v642
        %v689 = vsel %vm584, %v648, %v688
        %v690 = vsel %vm586, %v651, %v689
        %v691 = vsel %vm588, %v654, %v690
        %v692 = vsel %vm590, %v657, %v691
        %v693 = vsel %vm592, %v660, %v692
        %v694 = vsel %vm594, %v663, %v693
        %v695 = vsel %vm582, %v669, %v666
        %v696 = vsel %vm584, %v672, %v695
        %v697 = vsel %vm586, %v675, %v696
        %v698 = vsel %vm588, %v678, %v697
        %v699 = vsel %vm590, %v681, %v698
        %v700 = vsel %vm592, %v684, %v699
        %v701 = vsel %vm594, %v687, %v700
        %s704 = scalar_lea.vmem [#allocation2], 24
        %705 = vst.msk [vmem:[%s704 + $0x1] sm:$0xff] %vm605, %v694
        %706 = vst.msk [vmem:[%s704 + $0x9] sm:$0xff] %vm605, %v701
        %s707 = sld [smem:[#allocation5]]
        %v708 = vld [vmem:[#allocation2] sm:$0xff]
        %v709 = vld [vmem:[#allocation2 + $0x8] sm:$0xff]
        %v710 = vstv %s707
        %v711 = vmul.f32 %v708, %v710
        %v712 = vmul.f32 %v709, %v710
        %v713 = vadd.f32 %v711, 0.0
        %v714 = vadd.f32 %v712, 0.0
        %s715 = sld [smem:[#allocation5 + $0x1]]
        %v716 = vstv %s715
        %v717 = vmul.f32 %v708, %v716
        %v718 = vmul.f32 %v709, %v716
        %721 = vrot.lane.b32.xlu0 %v717, 127
        %v722 = vpop.permute.xlu0 %721
        %723 = vrot.lane.b32.xlu0 %v718, 127
        %v724 = vpop.permute.xlu0 %723
        %v727 = vadd.f32 %v713, %v722
        %v728 = vadd.f32 %v714, %v724
        %s729 = sld [smem:[#allocation5 + $0x2]]
        %v730 = vstv %s729
        %v731 = vmul.f32 %v708, %v730
        %v732 = vmul.f32 %v709, %v730
        %735 = vrot.lane.b32.xlu0 %v731, 126
        %v736 = vpop.permute.xlu0 %735
        %737 = vrot.lane.b32.xlu0 %v732, 126
        %v738 = vpop.permute.xlu0 %737
        %v741 = vadd.f32 %v727, %v736
        %v742 = vadd.f32 %v728, %v738
        %s743 = sld [smem:[#allocation5 + $0x3]]
        %v744 = vld [vmem:[#allocation2 + $0x1] sm:$0xff]
        %v745 = vld [vmem:[#allocation2 + $0x9] sm:$0xff]
        %v746 = vstv %s743
        %v747 = vmul.f32 %v744, %v746
        %v748 = vmul.f32 %v745, %v746
        %v749 = vadd.f32 %v741, %v747
        %v750 = vadd.f32 %v742, %v748
        %s751 = sld [smem:[#allocation5 + $0x4]]
        %v752 = vstv %s751
        %v753 = vmul.f32 %v744, %v752
        %v754 = vmul.f32 %v745, %v752
        %757 = vrot.lane.b32.xlu0 %v753, 127
        %v758 = vpop.permute.xlu0 %757
        %759 = vrot.lane.b32.xlu0 %v754, 127
        %v760 = vpop.permute.xlu0 %759
        %v763 = vadd.f32 %v749, %v758
        %v764 = vadd.f32 %v750, %v760
        %s765 = sld [smem:[#allocation5 + $0x5]]
        %v766 = vstv %s765
        %v767 = vmul.f32 %v744, %v766
        %v768 = vmul.f32 %v745, %v766
        %771 = vrot.lane.b32.xlu0 %v767, 126
        %v772 = vpop.permute.xlu0 %771
        %773 = vrot.lane.b32.xlu0 %v768, 126
        %v774 = vpop.permute.xlu0 %773
        %v777 = vadd.f32 %v763, %v772
        %v778 = vadd.f32 %v764, %v774
        %s779 = sld [smem:[#allocation5 + $0x6]]
        %v780 = vld [vmem:[#allocation2 + $0x2] sm:$0xff]
        %v781 = vld [vmem:[#allocation2 + $0xa] sm:$0xff]
        %v782 = vstv %s779
        %v783 = vmul.f32 %v780, %v782
        %v784 = vmul.f32 %v781, %v782
        %v785 = vadd.f32 %v777, %v783
        %v786 = vadd.f32 %v778, %v784
        %s787 = sld [smem:[#allocation5 + $0x7]]
        %v788 = vstv %s787
        %v789 = vmul.f32 %v780, %v788
        %v790 = vmul.f32 %v781, %v788
        %793 = vrot.lane.b32.xlu0 %v789, 127
        %v794 = vpop.permute.xlu0 %793
        %795 = vrot.lane.b32.xlu0 %v790, 127
        %v796 = vpop.permute.xlu0 %795
        %v799 = vadd.f32 %v785, %v794
        %v800 = vadd.f32 %v786, %v796
        %s801 = sld [smem:[#allocation5 + $0x8]]
        %v802 = vstv %s801
        %v803 = vmul.f32 %v780, %v802
        %v804 = vmul.f32 %v781, %v802
        %807 = vrot.lane.b32.xlu0 %v803, 126
        %v808 = vpop.permute.xlu0 %807
        %809 = vrot.lane.b32.xlu0 %v804, 126
        %v810 = vpop.permute.xlu0 %809
        %v813 = vadd.f32 %v799, %v808
        %v814 = vadd.f32 %v800, %v810
        %s815 = sld [smem:[#allocation5 + $0x9]]
        %v816 = vld [vmem:[%s704] sm:$0xff]
        %v817 = vld [vmem:[%s704 + $0x8] sm:$0xff]
        %v818 = vstv %s815
        %v819 = vmul.f32 %v816, %v818
        %v820 = vmul.f32 %v817, %v818
        %v821 = vadd.f32 %v813, %v819
        %v822 = vadd.f32 %v814, %v820
        %s823 = sld [smem:[#allocation5 + $0xa]]
        %v824 = vstv %s823
        %v825 = vmul.f32 %v816, %v824
        %v826 = vmul.f32 %v817, %v824
        %829 = vrot.lane.b32.xlu0 %v825, 127
        %v830 = vpop.permute.xlu0 %829
        %831 = vrot.lane.b32.xlu0 %v826, 127
        %v832 = vpop.permute.xlu0 %831
        %v835 = vadd.f32 %v821, %v830
        %v836 = vadd.f32 %v822, %v832
        %s837 = sld [smem:[#allocation5 + $0xb]]
        %v838 = vstv %s837
        %v839 = vmul.f32 %v816, %v838
        %v840 = vmul.f32 %v817, %v838
        %843 = vrot.lane.b32.xlu0 %v839, 126
        %v844 = vpop.permute.xlu0 %843
        %845 = vrot.lane.b32.xlu0 %v840, 126
        %v846 = vpop.permute.xlu0 %845
        %v849 = vadd.f32 %v835, %v844
        %v850 = vadd.f32 %v836, %v846
        %s851 = sld [smem:[#allocation5 + $0xc]]
        %v852 = vld [vmem:[%s704 + $0x1] sm:$0xff]
        %v853 = vld [vmem:[%s704 + $0x9] sm:$0xff]
        %v854 = vstv %s851
        %v855 = vmul.f32 %v852, %v854
        %v856 = vmul.f32 %v853, %v854
        %v857 = vadd.f32 %v849, %v855
        %v858 = vadd.f32 %v850, %v856
        %s859 = sld [smem:[#allocation5 + $0xd]]
        %v860 = vstv %s859
        %v861 = vmul.f32 %v852, %v860
        %v862 = vmul.f32 %v853, %v860
        %865 = vrot.lane.b32.xlu0 %v861, 127
        %v866 = vpop.permute.xlu0 %865
        %867 = vrot.lane.b32.xlu0 %v862, 127
        %v868 = vpop.permute.xlu0 %867
        %v871 = vadd.f32 %v857, %v866
        %v872 = vadd.f32 %v858, %v868
        %s873 = sld [smem:[#allocation5 + $0xe]]
        %v874 = vstv %s873
        %v875 = vmul.f32 %v852, %v874
        %v876 = vmul.f32 %v853, %v874
        %879 = vrot.lane.b32.xlu0 %v875, 126
        %v880 = vpop.permute.xlu0 %879
        %881 = vrot.lane.b32.xlu0 %v876, 126
        %v882 = vpop.permute.xlu0 %881
        %v885 = vadd.f32 %v871, %v880
        %v886 = vadd.f32 %v872, %v882
        %s887 = sld [smem:[#allocation5 + $0xf]]
        %v888 = vld [vmem:[%s704 + $0x2] sm:$0xff]
        %v889 = vld [vmem:[%s704 + $0xa] sm:$0xff]
        %v890 = vstv %s887
        %v891 = vmul.f32 %v888, %v890
        %v892 = vmul.f32 %v889, %v890
        %v893 = vadd.f32 %v885, %v891
        %v894 = vadd.f32 %v886, %v892
        %s895 = sld [smem:[#allocation5 + $0x10]]
        %v896 = vstv %s895
        %v897 = vmul.f32 %v888, %v896
        %v898 = vmul.f32 %v889, %v896
        %901 = vrot.lane.b32.xlu0 %v897, 127
        %v902 = vpop.permute.xlu0 %901
        %903 = vrot.lane.b32.xlu0 %v898, 127
        %v904 = vpop.permute.xlu0 %903
        %v907 = vadd.f32 %v893, %v902
        %v908 = vadd.f32 %v894, %v904
        %s909 = sld [smem:[#allocation5 + $0x11]]
        %v910 = vstv %s909
        %v911 = vmul.f32 %v888, %v910
        %v912 = vmul.f32 %v889, %v910
        %915 = vrot.lane.b32.xlu0 %v911, 126
        %v916 = vpop.permute.xlu0 %915
        %917 = vrot.lane.b32.xlu0 %v912, 126
        %v918 = vpop.permute.xlu0 %917
        %v921 = vadd.f32 %v907, %v916
        %v922 = vadd.f32 %v908, %v918
        %v923 = vxor.u32 %v921, 2147483648
        %v924 = vxor.u32 %v922, 2147483648
        %v925 = vmul.f32 %v923, 1.442695
        %v926 = vpow.pop %v925
        %v927 = vmul.f32 %v924, 1.442695
        %v928 = vpow.pop %v927
        %v929 = vadd.f32 %v926, 1.0
        %v930 = vadd.f32 %v928, 1.0
        %v931 = vrcp.pop %v929
        %v932 = vmul.f32 %v929, %v931
        %v933 = vsub.f32 1.0, %v932
        %v934 = vmul.f32 %v931, %v933
        %v935 = vadd.f32 %v931, %v934
        %vm936 = vweird.f32 %v929
        %vm937 = vweird.f32 %v931
        %vm938 = vmor %vm936, %vm937
        %v939 = vsel %vm938, %v931, %v935
        %v940 = vand.u32 2147483647, %v929
        %vm941 = vcmp.eq.f32.partialorder %v940, 8.507059e+37
        %v942 = vand.u32 %v929, 2147483648
        %v943 = vor.u32 1.1754944e-38, %v942
        %v944 = vsel %vm941, %v943, %v939
        %v945 = vmul.f32 1.0, %v944
        %v946 = vrcp.pop %v930
        %v947 = vmul.f32 %v930, %v946
        %v948 = vsub.f32 1.0, %v947
        %v949 = vmul.f32 %v946, %v948
        %v950 = vadd.f32 %v946, %v949
        %vm951 = vweird.f32 %v930
        %vm952 = vweird.f32 %v946
        %vm953 = vmor %vm951, %vm952
        %v954 = vsel %vm953, %v946, %v950
        %v955 = vand.u32 2147483647, %v930
        %vm956 = vcmp.eq.f32.partialorder %v955, 8.507059e+37
        %v957 = vand.u32 %v930, 2147483648
        %v958 = vor.u32 1.1754944e-38, %v957
        %v959 = vsel %vm956, %v958, %v954
        %v960 = vmul.f32 1.0, %v959
        %v961 = vperm.slane %v945, 0
        %v962 = vlaneseq
        %v963 = vshrl.u32 %v962, 7
        %965 = vset.pattern.permute.xlu0 %v963
        %966 = vperm.xlu0 %965, %v961
        %v967 = vpop.permute.xlu0 %966
        %v968 = vlaneseq
        %v969 = vshrl.u32 %v968, 7
        %v970 = vadd.s32 %v969, 8
        %971 = vset.pattern.permute.xlu0 %v970
        %972 = vperm.xlu0 %971, %v961
        %v973 = vpop.permute.xlu0 %972
        %v974 = vperm.slane %v945, 1
        %v975 = vlaneseq
        %v976 = vshrl.u32 %v975, 7
        %978 = vset.pattern.permute.xlu0 %v976
        %979 = vperm.xlu0 %978, %v974
        %v980 = vpop.permute.xlu0 %979
        %v981 = vlaneseq
        %v982 = vshrl.u32 %v981, 7
        %v983 = vadd.s32 %v982, 8
        %984 = vset.pattern.permute.xlu0 %v983
        %985 = vperm.xlu0 %984, %v974
        %v986 = vpop.permute.xlu0 %985
        %v987 = vperm.slane %v945, 2
        %v988 = vlaneseq
        %v989 = vshrl.u32 %v988, 7
        %991 = vset.pattern.permute.xlu0 %v989
        %992 = vperm.xlu0 %991, %v987
        %v993 = vpop.permute.xlu0 %992
        %v994 = vlaneseq
        %v995 = vshrl.u32 %v994, 7
        %v996 = vadd.s32 %v995, 8
        %997 = vset.pattern.permute.xlu0 %v996
        %998 = vperm.xlu0 %997, %v987
        %v999 = vpop.permute.xlu0 %998
        %v1000 = vperm.slane %v945, 3
        %v1001 = vlaneseq
        %v1002 = vshrl.u32 %v1001, 7
        %1004 = vset.pattern.permute.xlu0 %v1002
        %1005 = vperm.xlu0 %1004, %v1000
        %v1006 = vpop.permute.xlu0 %1005
        %v1007 = vlaneseq
        %v1008 = vshrl.u32 %v1007, 7
        %v1009 = vadd.s32 %v1008, 8
        %1010 = vset.pattern.permute.xlu0 %v1009
        %1011 = vperm.xlu0 %1010, %v1000
        %v1012 = vpop.permute.xlu0 %1011
        %v1013 = vperm.slane %v945, 4
        %v1014 = vlaneseq
        %v1015 = vshrl.u32 %v1014, 7
        %1017 = vset.pattern.permute.xlu0 %v1015
        %1018 = vperm.xlu0 %1017, %v1013
        %v1019 = vpop.permute.xlu0 %1018
        %v1020 = vlaneseq
        %v1021 = vshrl.u32 %v1020, 7
        %v1022 = vadd.s32 %v1021, 8
        %1023 = vset.pattern.permute.xlu0 %v1022
        %1024 = vperm.xlu0 %1023, %v1013
        %v1025 = vpop.permute.xlu0 %1024
        %v1026 = vperm.slane %v945, 5
        %v1027 = vlaneseq
        %v1028 = vshrl.u32 %v1027, 7
        %1030 = vset.pattern.permute.xlu0 %v1028
        %1031 = vperm.xlu0 %1030, %v1026
        %v1032 = vpop.permute.xlu0 %1031
        %v1033 = vlaneseq
        %v1034 = vshrl.u32 %v1033, 7
        %v1035 = vadd.s32 %v1034, 8
        %1036 = vset.pattern.permute.xlu0 %v1035
        %1037 = vperm.xlu0 %1036, %v1026
        %v1038 = vpop.permute.xlu0 %1037
        %v1039 = vperm.slane %v945, 6
        %v1040 = vlaneseq
        %v1041 = vshrl.u32 %v1040, 7
        %1043 = vset.pattern.permute.xlu0 %v1041
        %1044 = vperm.xlu0 %1043, %v1039
        %v1045 = vpop.permute.xlu0 %1044
        %v1046 = vlaneseq
        %v1047 = vshrl.u32 %v1046, 7
        %v1048 = vadd.s32 %v1047, 8
        %1049 = vset.pattern.permute.xlu0 %v1048
        %1050 = vperm.xlu0 %1049, %v1039
        %v1051 = vpop.permute.xlu0 %1050
        %v1052 = vperm.slane %v945, 7
        %v1053 = vlaneseq
        %v1054 = vshrl.u32 %v1053, 7
        %1056 = vset.pattern.permute.xlu0 %v1054
        %1057 = vperm.xlu0 %1056, %v1052
        %v1058 = vpop.permute.xlu0 %1057
        %v1059 = vlaneseq
        %v1060 = vshrl.u32 %v1059, 7
        %v1061 = vadd.s32 %v1060, 8
        %1062 = vset.pattern.permute.xlu0 %v1061
        %1063 = vperm.xlu0 %1062, %v1052
        %v1064 = vpop.permute.xlu0 %1063
        %v1065 = vperm.slane %v960, 0
        %v1066 = vlaneseq
        %v1067 = vshrl.u32 %v1066, 7
        %1069 = vset.pattern.permute.xlu0 %v1067
        %1070 = vperm.xlu0 %1069, %v1065
        %v1071 = vpop.permute.xlu0 %1070
        %v1072 = vlaneseq
        %v1073 = vshrl.u32 %v1072, 7
        %v1074 = vadd.s32 %v1073, 8
        %1075 = vset.pattern.permute.xlu0 %v1074
        %1076 = vperm.xlu0 %1075, %v1065
        %v1077 = vpop.permute.xlu0 %1076
        %v1078 = vperm.slane %v960, 1
        %v1079 = vlaneseq
        %v1080 = vshrl.u32 %v1079, 7
        %1082 = vset.pattern.permute.xlu0 %v1080
        %1083 = vperm.xlu0 %1082, %v1078
        %v1084 = vpop.permute.xlu0 %1083
        %v1085 = vlaneseq
        %v1086 = vshrl.u32 %v1085, 7
        %v1087 = vadd.s32 %v1086, 8
        %1088 = vset.pattern.permute.xlu0 %v1087
        %1089 = vperm.xlu0 %1088, %v1078
        %v1090 = vpop.permute.xlu0 %1089
        %v1091 = vperm.slane %v960, 2
        %v1092 = vlaneseq
        %v1093 = vshrl.u32 %v1092, 7
        %1095 = vset.pattern.permute.xlu0 %v1093
        %1096 = vperm.xlu0 %1095, %v1091
        %v1097 = vpop.permute.xlu0 %1096
        %v1098 = vlaneseq
        %v1099 = vshrl.u32 %v1098, 7
        %v1100 = vadd.s32 %v1099, 8
        %1101 = vset.pattern.permute.xlu0 %v1100
        %1102 = vperm.xlu0 %1101, %v1091
        %v1103 = vpop.permute.xlu0 %1102
        %v1104 = vperm.slane %v960, 3
        %v1105 = vlaneseq
        %v1106 = vshrl.u32 %v1105, 7
        %1108 = vset.pattern.permute.xlu0 %v1106
        %1109 = vperm.xlu0 %1108, %v1104
        %v1110 = vpop.permute.xlu0 %1109
        %v1111 = vlaneseq
        %v1112 = vshrl.u32 %v1111, 7
        %v1113 = vadd.s32 %v1112, 8
        %1114 = vset.pattern.permute.xlu0 %v1113
        %1115 = vperm.xlu0 %1114, %v1104
        %v1116 = vpop.permute.xlu0 %1115
        %v1117 = vperm.slane %v960, 4
        %v1118 = vlaneseq
        %v1119 = vshrl.u32 %v1118, 7
        %1121 = vset.pattern.permute.xlu0 %v1119
        %1122 = vperm.xlu0 %1121, %v1117
        %v1123 = vpop.permute.xlu0 %1122
        %v1124 = vlaneseq
        %v1125 = vshrl.u32 %v1124, 7
        %v1126 = vadd.s32 %v1125, 8
        %1127 = vset.pattern.permute.xlu0 %v1126
        %1128 = vperm.xlu0 %1127, %v1117
        %v1129 = vpop.permute.xlu0 %1128
        %v1130 = vperm.slane %v960, 5
        %v1131 = vlaneseq
        %v1132 = vshrl.u32 %v1131, 7
        %1134 = vset.pattern.permute.xlu0 %v1132
        %1135 = vperm.xlu0 %1134, %v1130
        %v1136 = vpop.permute.xlu0 %1135
        %v1137 = vlaneseq
        %v1138 = vshrl.u32 %v1137, 7
        %v1139 = vadd.s32 %v1138, 8
        %1140 = vset.pattern.permute.xlu0 %v1139
        %1141 = vperm.xlu0 %1140, %v1130
        %v1142 = vpop.permute.xlu0 %1141
        %v1143 = vperm.slane %v960, 6
        %v1144 = vlaneseq
        %v1145 = vshrl.u32 %v1144, 7
        %1147 = vset.pattern.permute.xlu0 %v1145
        %1148 = vperm.xlu0 %1147, %v1143
        %v1149 = vpop.permute.xlu0 %1148
        %v1150 = vlaneseq
        %v1151 = vshrl.u32 %v1150, 7
        %v1152 = vadd.s32 %v1151, 8
        %1153 = vset.pattern.permute.xlu0 %v1152
        %1154 = vperm.xlu0 %1153, %v1143
        %v1155 = vpop.permute.xlu0 %1154
        %v1156 = vperm.slane %v960, 7
        %v1157 = vlaneseq
        %v1158 = vshrl.u32 %v1157, 7
        %1160 = vset.pattern.permute.xlu0 %v1158
        %1161 = vperm.xlu0 %1160, %v1156
        %v1162 = vpop.permute.xlu0 %1161
        %v1163 = vlaneseq
        %v1164 = vshrl.u32 %v1163, 7
        %v1165 = vadd.s32 %v1164, 8
        %1166 = vset.pattern.permute.xlu0 %v1165
        %1167 = vperm.xlu0 %1166, %v1156
        %v1168 = vpop.permute.xlu0 %1167
        %v1169 = vmul.f32 %v212, %v967
        %v1170 = vmul.f32 %v213, %v973
        %v1171 = vmul.f32 %v214, %v980
        %v1172 = vmul.f32 %v215, %v986
        %v1173 = vmul.f32 %v216, %v993
        %v1174 = vmul.f32 %v217, %v999
        %v1175 = vmul.f32 %v218, %v1006
        %v1176 = vmul.f32 %v219, %v1012
        %v1177 = vmul.f32 %v220, %v1019
        %v1178 = vmul.f32 %v221, %v1025
        %v1179 = vmul.f32 %v222, %v1032
        %v1180 = vmul.f32 %v223, %v1038
        %v1181 = vmul.f32 %v224, %v1045
        %v1182 = vmul.f32 %v225, %v1051
        %v1183 = vmul.f32 %v226, %v1058
        %v1184 = vmul.f32 %v227, %v1064
        %v1185 = vmul.f32 %v228, %v1071
        %v1186 = vmul.f32 %v229, %v1077
        %v1187 = vmul.f32 %v230, %v1084
        %v1188 = vmul.f32 %v231, %v1090
        %v1189 = vmul.f32 %v232, %v1097
        %v1190 = vmul.f32 %v233, %v1103
        %v1191 = vmul.f32 %v234, %v1110
        %v1192 = vmul.f32 %v235, %v1116
        %v1193 = vmul.f32 %v236, %v1123
        %v1194 = vmul.f32 %v237, %v1129
        %v1195 = vmul.f32 %v238, %v1136
        %v1196 = vmul.f32 %v239, %v1142
        %v1197 = vmul.f32 %v240, %v1149
        %v1198 = vmul.f32 %v241, %v1155
        %v1199 = vmul.f32 %v242, %v1162
        %v1200 = vmul.f32 %v243, %v1168
        %1201 = vst.msk [vmem:[#allocation3] sm:$0xff] %vm244, 0.0
        %1202 = vst.msk [vmem:[#allocation3 + $0x8] sm:$0xff] %vm244, 0.0
        %vm1203 = vcmask 25600
        %1204 = vst.msk [vmem:[#allocation3 + $0x10] sm:$0x3] %vm1203, 0.0
        %s1205 = scalar_lea.vmem [#allocation3], 408
        %1206 = vst.msk [vmem:[%s1205] sm:$0xff] %vm244, 0.0
        %1207 = vst.msk [vmem:[%s1205 + $0x8] sm:$0xff] %vm244, 0.0
        %1208 = vst.msk [vmem:[%s1205 + $0x10] sm:$0x3] %vm1203, 0.0
        %vm1209 = vcmask 24576
        %1210 = vst.msk [vmem:[#allocation3] sm:$0x1] %vm1209, 0.0
        %1211 = vst.msk [vmem:[#allocation3 + $0x18] sm:$0x1] %vm1209, 0.0
        %1212 = vst.msk [vmem:[#allocation3 + $0x30] sm:$0x1] %vm1209, 0.0
        %1213 = vst.msk [vmem:[#allocation3 + $0x48] sm:$0x1] %vm1209, 0.0
        %1214 = vst.msk [vmem:[#allocation3 + $0x60] sm:$0x1] %vm1209, 0.0
        %1215 = vst.msk [vmem:[#allocation3 + $0x78] sm:$0x1] %vm1209, 0.0
        %1216 = vst.msk [vmem:[#allocation3 + $0x90] sm:$0x1] %vm1209, 0.0
        %1217 = vst.msk [vmem:[#allocation3 + $0xa8] sm:$0x1] %vm1209, 0.0
        %1218 = vst.msk [vmem:[#allocation3 + $0xc0] sm:$0x1] %vm1209, 0.0
        %1219 = vst.msk [vmem:[#allocation3 + $0xd8] sm:$0x1] %vm1209, 0.0
        %1220 = vst.msk [vmem:[#allocation3 + $0xf0] sm:$0x1] %vm1209, 0.0
        %1221 = vst.msk [vmem:[#allocation3 + $0x108] sm:$0x1] %vm1209, 0.0
        %1222 = vst.msk [vmem:[#allocation3 + $0x120] sm:$0x1] %vm1209, 0.0
        %1223 = vst.msk [vmem:[#allocation3 + $0x138] sm:$0x1] %vm1209, 0.0
        %1224 = vst.msk [vmem:[#allocation3 + $0x150] sm:$0x1] %vm1209, 0.0
        %1225 = vst.msk [vmem:[#allocation3 + $0x168] sm:$0x1] %vm1209, 0.0
        %1226 = vst.msk [vmem:[#allocation3 + $0x180] sm:$0x1] %vm1209, 0.0
        %1227 = vst.msk [vmem:[#allocation3 + $0x198] sm:$0x1] %vm1209, 0.0
        %1228 = vst.msk [vmem:[#allocation3 + $0x11] sm:$0x1] %vm1209, 0.0
        %1229 = vst.msk [vmem:[#allocation3 + $0x29] sm:$0x1] %vm1209, 0.0
        %1230 = vst.msk [vmem:[#allocation3 + $0x41] sm:$0x1] %vm1209, 0.0
        %1231 = vst.msk [vmem:[#allocation3 + $0x59] sm:$0x1] %vm1209, 0.0
        %1232 = vst.msk [vmem:[#allocation3 + $0x71] sm:$0x1] %vm1209, 0.0
        %1233 = vst.msk [vmem:[#allocation3 + $0x89] sm:$0x1] %vm1209, 0.0
        %1234 = vst.msk [vmem:[#allocation3 + $0xa1] sm:$0x1] %vm1209, 0.0
        %1235 = vst.msk [vmem:[#allocation3 + $0xb9] sm:$0x1] %vm1209, 0.0
        %1236 = vst.msk [vmem:[#allocation3 + $0xd1] sm:$0x1] %vm1209, 0.0
        %1237 = vst.msk [vmem:[#allocation3 + $0xe9] sm:$0x1] %vm1209, 0.0
        %1238 = vst.msk [vmem:[#allocation3 + $0x101] sm:$0x1] %vm1209, 0.0
        %1239 = vst.msk [vmem:[#allocation3 + $0x119] sm:$0x1] %vm1209, 0.0
        %1240 = vst.msk [vmem:[#allocation3 + $0x131] sm:$0x1] %vm1209, 0.0
        %1241 = vst.msk [vmem:[#allocation3 + $0x149] sm:$0x1] %vm1209, 0.0
        %1242 = vst.msk [vmem:[#allocation3 + $0x161] sm:$0x1] %vm1209, 0.0
        %1243 = vst.msk [vmem:[#allocation3 + $0x179] sm:$0x1] %vm1209, 0.0
        %1244 = vst.msk [vmem:[#allocation3 + $0x191] sm:$0x1] %vm1209, 0.0
        %1245 = vst.msk [vmem:[#allocation3 + $0x1a9] sm:$0x1] %vm1209, 0.0
        %s1246 = scalar_lea.vmem [#allocation3], 24
        %1247 = vst.msk [vmem:[%s1246 + $0x1] sm:$0xff] %vm244, %v1169
        %1248 = vst.msk [vmem:[%s1246 + $0x9] sm:$0xff] %vm244, %v1170
        %1249 = vst.msk [vmem:[%s1246 + $0x19] sm:$0xff] %vm244, %v1171
        %1250 = vst.msk [vmem:[%s1246 + $0x21] sm:$0xff] %vm244, %v1172
        %1251 = vst.msk [vmem:[%s1246 + $0x31] sm:$0xff] %vm244, %v1173
        %1252 = vst.msk [vmem:[%s1246 + $0x39] sm:$0xff] %vm244, %v1174
        %1253 = vst.msk [vmem:[%s1246 + $0x49] sm:$0xff] %vm244, %v1175
        %1254 = vst.msk [vmem:[%s1246 + $0x51] sm:$0xff] %vm244, %v1176
        %1255 = vst.msk [vmem:[%s1246 + $0x61] sm:$0xff] %vm244, %v1177
        %1256 = vst.msk [vmem:[%s1246 + $0x69] sm:$0xff] %vm244, %v1178
        %1257 = vst.msk [vmem:[%s1246 + $0x79] sm:$0xff] %vm244, %v1179
        %1258 = vst.msk [vmem:[%s1246 + $0x81] sm:$0xff] %vm244, %v1180
        %1259 = vst.msk [vmem:[%s1246 + $0x91] sm:$0xff] %vm244, %v1181
        %1260 = vst.msk [vmem:[%s1246 + $0x99] sm:$0xff] %vm244, %v1182
        %1261 = vst.msk [vmem:[%s1246 + $0xa9] sm:$0xff] %vm244, %v1183
        %1262 = vst.msk [vmem:[%s1246 + $0xb1] sm:$0xff] %vm244, %v1184
        %1263 = vst.msk [vmem:[%s1246 + $0xc1] sm:$0xff] %vm244, %v1185
        %1264 = vst.msk [vmem:[%s1246 + $0xc9] sm:$0xff] %vm244, %v1186
        %1265 = vst.msk [vmem:[%s1246 + $0xd9] sm:$0xff] %vm244, %v1187
        %1266 = vst.msk [vmem:[%s1246 + $0xe1] sm:$0xff] %vm244, %v1188
        %1267 = vst.msk [vmem:[%s1246 + $0xf1] sm:$0xff] %vm244, %v1189
        %1268 = vst.msk [vmem:[%s1246 + $0xf9] sm:$0xff] %vm244, %v1190
        %1269 = vst.msk [vmem:[%s1246 + $0x109] sm:$0xff] %vm244, %v1191
        %1270 = vst.msk [vmem:[%s1246 + $0x111] sm:$0xff] %vm244, %v1192
        %1271 = vst.msk [vmem:[%s1246 + $0x121] sm:$0xff] %vm244, %v1193
        %1272 = vst.msk [vmem:[%s1246 + $0x129] sm:$0xff] %vm244, %v1194
        %1273 = vst.msk [vmem:[%s1246 + $0x139] sm:$0xff] %vm244, %v1195
        %1274 = vst.msk [vmem:[%s1246 + $0x141] sm:$0xff] %vm244, %v1196
        %1275 = vst.msk [vmem:[%s1246 + $0x151] sm:$0xff] %vm244, %v1197
        %1276 = vst.msk [vmem:[%s1246 + $0x159] sm:$0xff] %vm244, %v1198
        %1277 = vst.msk [vmem:[%s1246 + $0x169] sm:$0xff] %vm244, %v1199
        %1278 = vst.msk [vmem:[%s1246 + $0x171] sm:$0xff] %vm244, %v1200
        %v1279 = vld [vmem:[#allocation3] sm:$0xff]
        %v1280 = vld [vmem:[#allocation3 + $0x8] sm:$0xff]
        %v1281 = vld [vmem:[#allocation3 + $0x18] sm:$0xff]
        %v1282 = vld [vmem:[#allocation3 + $0x20] sm:$0xff]
        %v1283 = vld [vmem:[#allocation3 + $0x30] sm:$0xff]
        %v1284 = vld [vmem:[#allocation3 + $0x38] sm:$0xff]
        %v1285 = vld [vmem:[#allocation3 + $0x48] sm:$0xff]
        %v1286 = vld [vmem:[#allocation3 + $0x50] sm:$0xff]
        %v1287 = vld [vmem:[#allocation3 + $0x60] sm:$0xff]
        %v1288 = vld [vmem:[#allocation3 + $0x68] sm:$0xff]
        %v1289 = vld [vmem:[#allocation3 + $0x78] sm:$0xff]
        %v1290 = vld [vmem:[#allocation3 + $0x80] sm:$0xff]
        %v1291 = vld [vmem:[#allocation3 + $0x90] sm:$0xff]
        %v1292 = vld [vmem:[#allocation3 + $0x98] sm:$0xff]
        %v1293 = vld [vmem:[#allocation3 + $0xa8] sm:$0xff]
        %v1294 = vld [vmem:[#allocation3 + $0xb0] sm:$0xff]
        %v1295 = vld [vmem:[#allocation3 + $0xc0] sm:$0xff]
        %v1296 = vld [vmem:[#allocation3 + $0xc8] sm:$0xff]
        %v1297 = vld [vmem:[#allocation3 + $0xd8] sm:$0xff]
        %v1298 = vld [vmem:[#allocation3 + $0xe0] sm:$0xff]
        %v1299 = vld [vmem:[#allocation3 + $0xf0] sm:$0xff]
        %v1300 = vld [vmem:[#allocation3 + $0xf8] sm:$0xff]
        %v1301 = vld [vmem:[#allocation3 + $0x108] sm:$0xff]
        %v1302 = vld [vmem:[#allocation3 + $0x110] sm:$0xff]
        %v1303 = vld [vmem:[#allocation3 + $0x120] sm:$0xff]
        %v1304 = vld [vmem:[#allocation3 + $0x128] sm:$0xff]
        %v1305 = vld [vmem:[#allocation3 + $0x138] sm:$0xff]
        %v1306 = vld [vmem:[#allocation3 + $0x140] sm:$0xff]
        %v1307 = vld [vmem:[#allocation3 + $0x150] sm:$0xff]
        %v1308 = vld [vmem:[#allocation3 + $0x158] sm:$0xff]
        %v1309 = vld [vmem:[#allocation3 + $0x168] sm:$0xff]
        %v1310 = vld [vmem:[#allocation3 + $0x170] sm:$0xff]
        %1311 = vst.msk [vmem:[#allocation4] sm:$0xff] %vm244, %v1279
        %1312 = vst.msk [vmem:[#allocation4 + $0x8] sm:$0xff] %vm244, %v1280
        %1313 = vst.msk [vmem:[#allocation4 + $0x10] sm:$0xff] %vm244, %v1281
        %1314 = vst.msk [vmem:[#allocation4 + $0x18] sm:$0xff] %vm244, %v1282
        %1315 = vst.msk [vmem:[#allocation4 + $0x20] sm:$0xff] %vm244, %v1283
        %1316 = vst.msk [vmem:[#allocation4 + $0x28] sm:$0xff] %vm244, %v1284
        %1317 = vst.msk [vmem:[#allocation4 + $0x30] sm:$0xff] %vm244, %v1285
        %1318 = vst.msk [vmem:[#allocation4 + $0x38] sm:$0xff] %vm244, %v1286
        %1319 = vst.msk [vmem:[#allocation4 + $0x40] sm:$0xff] %vm244, %v1287
        %1320 = vst.msk [vmem:[#allocation4 + $0x48] sm:$0xff] %vm244, %v1288
        %1321 = vst.msk [vmem:[#allocation4 + $0x50] sm:$0xff] %vm244, %v1289
        %1322 = vst.msk [vmem:[#allocation4 + $0x58] sm:$0xff] %vm244, %v1290
        %1323 = vst.msk [vmem:[#allocation4 + $0x60] sm:$0xff] %vm244, %v1291
        %1324 = vst.msk [vmem:[#allocation4 + $0x68] sm:$0xff] %vm244, %v1292
        %1325 = vst.msk [vmem:[#allocation4 + $0x70] sm:$0xff] %vm244, %v1293
        %1326 = vst.msk [vmem:[#allocation4 + $0x78] sm:$0xff] %vm244, %v1294
        %1327 = vst.msk [vmem:[#allocation4 + $0x80] sm:$0xff] %vm244, %v1295
        %1328 = vst.msk [vmem:[#allocation4 + $0x88] sm:$0xff] %vm244, %v1296
        %1329 = vst.msk [vmem:[#allocation4 + $0x90] sm:$0xff] %vm244, %v1297
        %1330 = vst.msk [vmem:[#allocation4 + $0x98] sm:$0xff] %vm244, %v1298
        %1331 = vst.msk [vmem:[#allocation4 + $0xa0] sm:$0xff] %vm244, %v1299
        %1332 = vst.msk [vmem:[#allocation4 + $0xa8] sm:$0xff] %vm244, %v1300
        %1333 = vst.msk [vmem:[#allocation4 + $0xb0] sm:$0xff] %vm244, %v1301
        %1334 = vst.msk [vmem:[#allocation4 + $0xb8] sm:$0xff] %vm244, %v1302
        %1335 = vst.msk [vmem:[#allocation4 + $0xc0] sm:$0xff] %vm244, %v1303
        %1336 = vst.msk [vmem:[#allocation4 + $0xc8] sm:$0xff] %vm244, %v1304
        %1337 = vst.msk [vmem:[#allocation4 + $0xd0] sm:$0xff] %vm244, %v1305
        %1338 = vst.msk [vmem:[#allocation4 + $0xd8] sm:$0xff] %vm244, %v1306
        %1339 = vst.msk [vmem:[#allocation4 + $0xe0] sm:$0xff] %vm244, %v1307
        %1340 = vst.msk [vmem:[#allocation4 + $0xe8] sm:$0xff] %vm244, %v1308
        %1341 = vst.msk [vmem:[#allocation4 + $0xf0] sm:$0xff] %vm244, %v1309
        %1342 = vst.msk [vmem:[#allocation4 + $0xf8] sm:$0xff] %vm244, %v1310
        %v1343 = vld [vmem:[#allocation3 + $0x1] sm:$0xff]
        %v1344 = vld [vmem:[#allocation3 + $0x9] sm:$0xff]
        %v1345 = vld [vmem:[#allocation3 + $0x19] sm:$0xff]
        %v1346 = vld [vmem:[#allocation3 + $0x21] sm:$0xff]
        %v1347 = vld [vmem:[#allocation3 + $0x31] sm:$0xff]
        %v1348 = vld [vmem:[#allocation3 + $0x39] sm:$0xff]
        %v1349 = vld [vmem:[#allocation3 + $0x49] sm:$0xff]
        %v1350 = vld [vmem:[#allocation3 + $0x51] sm:$0xff]
        %v1351 = vld [vmem:[#allocation3 + $0x61] sm:$0xff]
        %v1352 = vld [vmem:[#allocation3 + $0x69] sm:$0xff]
        %v1353 = vld [vmem:[#allocation3 + $0x79] sm:$0xff]
        %v1354 = vld [vmem:[#allocation3 + $0x81] sm:$0xff]
        %v1355 = vld [vmem:[#allocation3 + $0x91] sm:$0xff]
        %v1356 = vld [vmem:[#allocation3 + $0x99] sm:$0xff]
        %v1357 = vld [vmem:[#allocation3 + $0xa9] sm:$0xff]
        %v1358 = vld [vmem:[#allocation3 + $0xb1] sm:$0xff]
        %v1359 = vld [vmem:[#allocation3 + $0xc1] sm:$0xff]
        %v1360 = vld [vmem:[#allocation3 + $0xc9] sm:$0xff]
        %v1361 = vld [vmem:[#allocation3 + $0xd9] sm:$0xff]
        %v1362 = vld [vmem:[#allocation3 + $0xe1] sm:$0xff]
        %v1363 = vld [vmem:[#allocation3 + $0xf1] sm:$0xff]
        %v1364 = vld [vmem:[#allocation3 + $0xf9] sm:$0xff]
        %v1365 = vld [vmem:[#allocation3 + $0x109] sm:$0xff]
        %v1366 = vld [vmem:[#allocation3 + $0x111] sm:$0xff]
        %v1367 = vld [vmem:[#allocation3 + $0x121] sm:$0xff]
        %v1368 = vld [vmem:[#allocation3 + $0x129] sm:$0xff]
        %v1369 = vld [vmem:[#allocation3 + $0x139] sm:$0xff]
        %v1370 = vld [vmem:[#allocation3 + $0x141] sm:$0xff]
        %v1371 = vld [vmem:[#allocation3 + $0x151] sm:$0xff]
        %v1372 = vld [vmem:[#allocation3 + $0x159] sm:$0xff]
        %v1373 = vld [vmem:[#allocation3 + $0x169] sm:$0xff]
        %v1374 = vld [vmem:[#allocation3 + $0x171] sm:$0xff]
        %1407 = vrot.lane.b32.xlu0 %v1343, 4
        %v1408 = vpop.permute.xlu0 %1407
        %1409 = vrot.lane.b32.xlu0 %v1344, 4
        %v1410 = vpop.permute.xlu0 %1409
        %1411 = vrot.lane.b32.xlu0 %v1345, 4
        %v1412 = vpop.permute.xlu0 %1411
        %1413 = vrot.lane.b32.xlu0 %v1346, 4
        %v1414 = vpop.permute.xlu0 %1413
        %1415 = vrot.lane.b32.xlu0 %v1347, 4
        %v1416 = vpop.permute.xlu0 %1415
        %1417 = vrot.lane.b32.xlu0 %v1348, 4
        %v1418 = vpop.permute.xlu0 %1417
        %1419 = vrot.lane.b32.xlu0 %v1349, 4
        %v1420 = vpop.permute.xlu0 %1419
        %1421 = vrot.lane.b32.xlu0 %v1350, 4
        %v1422 = vpop.permute.xlu0 %1421
        %1423 = vrot.lane.b32.xlu0 %v1351, 4
        %v1424 = vpop.permute.xlu0 %1423
        %1425 = vrot.lane.b32.xlu0 %v1352, 4
        %v1426 = vpop.permute.xlu0 %1425
        %1427 = vrot.lane.b32.xlu0 %v1353, 4
        %v1428 = vpop.permute.xlu0 %1427
        %1429 = vrot.lane.b32.xlu0 %v1354, 4
        %v1430 = vpop.permute.xlu0 %1429
        %1431 = vrot.lane.b32.xlu0 %v1355, 4
        %v1432 = vpop.permute.xlu0 %1431
        %1433 = vrot.lane.b32.xlu0 %v1356, 4
        %v1434 = vpop.permute.xlu0 %1433
        %1435 = vrot.lane.b32.xlu0 %v1357, 4
        %v1436 = vpop.permute.xlu0 %1435
        %1437 = vrot.lane.b32.xlu0 %v1358, 4
        %v1438 = vpop.permute.xlu0 %1437
        %1439 = vrot.lane.b32.xlu0 %v1359, 4
        %v1440 = vpop.permute.xlu0 %1439
        %1441 = vrot.lane.b32.xlu0 %v1360, 4
        %v1442 = vpop.permute.xlu0 %1441
        %1443 = vrot.lane.b32.xlu0 %v1361, 4
        %v1444 = vpop.permute.xlu0 %1443
        %1445 = vrot.lane.b32.xlu0 %v1362, 4
        %v1446 = vpop.permute.xlu0 %1445
        %1447 = vrot.lane.b32.xlu0 %v1363, 4
        %v1448 = vpop.permute.xlu0 %1447
        %1449 = vrot.lane.b32.xlu0 %v1364, 4
        %v1450 = vpop.permute.xlu0 %1449
        %1451 = vrot.lane.b32.xlu0 %v1365, 4
        %v1452 = vpop.permute.xlu0 %1451
        %1453 = vrot.lane.b32.xlu0 %v1366, 4
        %v1454 = vpop.permute.xlu0 %1453
        %1455 = vrot.lane.b32.xlu0 %v1367, 4
        %v1456 = vpop.permute.xlu0 %1455
        %1457 = vrot.lane.b32.xlu0 %v1368, 4
        %v1458 = vpop.permute.xlu0 %1457
        %1459 = vrot.lane.b32.xlu0 %v1369, 4
        %v1460 = vpop.permute.xlu0 %1459
        %1461 = vrot.lane.b32.xlu0 %v1370, 4
        %v1462 = vpop.permute.xlu0 %1461
        %1463 = vrot.lane.b32.xlu0 %v1371, 4
        %v1464 = vpop.permute.xlu0 %1463
        %1465 = vrot.lane.b32.xlu0 %v1372, 4
        %v1466 = vpop.permute.xlu0 %1465
        %1467 = vrot.lane.b32.xlu0 %v1373, 4
        %v1468 = vpop.permute.xlu0 %1467
        %1469 = vrot.lane.b32.xlu0 %v1374, 4
        %v1470 = vpop.permute.xlu0 %1469
        %vm1503 = vcmask 64544
        %1504 = vst.msk [vmem:[#allocation4] sm:$0xff] %vm1503, %v1408
        %1505 = vst.msk [vmem:[#allocation4 + $0x8] sm:$0xff] %vm1503, %v1410
        %1506 = vst.msk [vmem:[#allocation4 + $0x10] sm:$0xff] %vm1503, %v1412
        %1507 = vst.msk [vmem:[#allocation4 + $0x18] sm:$0xff] %vm1503, %v1414
        %1508 = vst.msk [vmem:[#allocation4 + $0x20] sm:$0xff] %vm1503, %v1416
        %1509 = vst.msk [vmem:[#allocation4 + $0x28] sm:$0xff] %vm1503, %v1418
        %1510 = vst.msk [vmem:[#allocation4 + $0x30] sm:$0xff] %vm1503, %v1420
        %1511 = vst.msk [vmem:[#allocation4 + $0x38] sm:$0xff] %vm1503, %v1422
        %1512 = vst.msk [vmem:[#allocation4 + $0x40] sm:$0xff] %vm1503, %v1424
        %1513 = vst.msk [vmem:[#allocation4 + $0x48] sm:$0xff] %vm1503, %v1426
        %1514 = vst.msk [vmem:[#allocation4 + $0x50] sm:$0xff] %vm1503, %v1428
        %1515 = vst.msk [vmem:[#allocation4 + $0x58] sm:$0xff] %vm1503, %v1430
        %1516 = vst.msk [vmem:[#allocation4 + $0x60] sm:$0xff] %vm1503, %v1432
        %1517 = vst.msk [vmem:[#allocation4 + $0x68] sm:$0xff] %vm1503, %v1434
        %1518 = vst.msk [vmem:[#allocation4 + $0x70] sm:$0xff] %vm1503, %v1436
        %1519 = vst.msk [vmem:[#allocation4 + $0x78] sm:$0xff] %vm1503, %v1438
        %1520 = vst.msk [vmem:[#allocation4 + $0x80] sm:$0xff] %vm1503, %v1440
        %1521 = vst.msk [vmem:[#allocation4 + $0x88] sm:$0xff] %vm1503, %v1442
        %1522 = vst.msk [vmem:[#allocation4 + $0x90] sm:$0xff] %vm1503, %v1444
        %1523 = vst.msk [vmem:[#allocation4 + $0x98] sm:$0xff] %vm1503, %v1446
        %1524 = vst.msk [vmem:[#allocation4 + $0xa0] sm:$0xff] %vm1503, %v1448
        %1525 = vst.msk [vmem:[#allocation4 + $0xa8] sm:$0xff] %vm1503, %v1450
        %1526 = vst.msk [vmem:[#allocation4 + $0xb0] sm:$0xff] %vm1503, %v1452
        %1527 = vst.msk [vmem:[#allocation4 + $0xb8] sm:$0xff] %vm1503, %v1454
        %1528 = vst.msk [vmem:[#allocation4 + $0xc0] sm:$0xff] %vm1503, %v1456
        %1529 = vst.msk [vmem:[#allocation4 + $0xc8] sm:$0xff] %vm1503, %v1458
        %1530 = vst.msk [vmem:[#allocation4 + $0xd0] sm:$0xff] %vm1503, %v1460
        %1531 = vst.msk [vmem:[#allocation4 + $0xd8] sm:$0xff] %vm1503, %v1462
        %1532 = vst.msk [vmem:[#allocation4 + $0xe0] sm:$0xff] %vm1503, %v1464
        %1533 = vst.msk [vmem:[#allocation4 + $0xe8] sm:$0xff] %vm1503, %v1466
        %1534 = vst.msk [vmem:[#allocation4 + $0xf0] sm:$0xff] %vm1503, %v1468
        %1535 = vst.msk [vmem:[#allocation4 + $0xf8] sm:$0xff] %vm1503, %v1470
        %v1536 = vld [vmem:[#allocation3 + $0x2] sm:$0xff]
        %v1537 = vld [vmem:[#allocation3 + $0xa] sm:$0xff]
        %v1538 = vld [vmem:[#allocation3 + $0x1a] sm:$0xff]
        %v1539 = vld [vmem:[#allocation3 + $0x22] sm:$0xff]
        %v1540 = vld [vmem:[#allocation3 + $0x32] sm:$0xff]
        %v1541 = vld [vmem:[#allocation3 + $0x3a] sm:$0xff]
        %v1542 = vld [vmem:[#allocation3 + $0x4a] sm:$0xff]
        %v1543 = vld [vmem:[#allocation3 + $0x52] sm:$0xff]
        %v1544 = vld [vmem:[#allocation3 + $0x62] sm:$0xff]
        %v1545 = vld [vmem:[#allocation3 + $0x6a] sm:$0xff]
        %v1546 = vld [vmem:[#allocation3 + $0x7a] sm:$0xff]
        %v1547 = vld [vmem:[#allocation3 + $0x82] sm:$0xff]
        %v1548 = vld [vmem:[#allocation3 + $0x92] sm:$0xff]
        %v1549 = vld [vmem:[#allocation3 + $0x9a] sm:$0xff]
        %v1550 = vld [vmem:[#allocation3 + $0xaa] sm:$0xff]
        %v1551 = vld [vmem:[#allocation3 + $0xb2] sm:$0xff]
        %v1552 = vld [vmem:[#allocation3 + $0xc2] sm:$0xff]
        %v1553 = vld [vmem:[#allocation3 + $0xca] sm:$0xff]
        %v1554 = vld [vmem:[#allocation3 + $0xda] sm:$0xff]
        %v1555 = vld [vmem:[#allocation3 + $0xe2] sm:$0xff]
        %v1556 = vld [vmem:[#allocation3 + $0xf2] sm:$0xff]
        %v1557 = vld [vmem:[#allocation3 + $0xfa] sm:$0xff]
        %v1558 = vld [vmem:[#allocation3 + $0x10a] sm:$0xff]
        %v1559 = vld [vmem:[#allocation3 + $0x112] sm:$0xff]
        %v1560 = vld [vmem:[#allocation3 + $0x122] sm:$0xff]
        %v1561 = vld [vmem:[#allocation3 + $0x12a] sm:$0xff]
        %v1562 = vld [vmem:[#allocation3 + $0x13a] sm:$0xff]
        %v1563 = vld [vmem:[#allocation3 + $0x142] sm:$0xff]
        %v1564 = vld [vmem:[#allocation3 + $0x152] sm:$0xff]
        %v1565 = vld [vmem:[#allocation3 + $0x15a] sm:$0xff]
        %v1566 = vld [vmem:[#allocation3 + $0x16a] sm:$0xff]
        %v1567 = vld [vmem:[#allocation3 + $0x172] sm:$0xff]
        %1600 = vrot.lane.b32.xlu0 %v1536, 8
        %v1601 = vpop.permute.xlu0 %1600
        %1602 = vrot.lane.b32.xlu0 %v1537, 8
        %v1603 = vpop.permute.xlu0 %1602
        %1604 = vrot.lane.b32.xlu0 %v1538, 8
        %v1605 = vpop.permute.xlu0 %1604
        %1606 = vrot.lane.b32.xlu0 %v1539, 8
        %v1607 = vpop.permute.xlu0 %1606
        %1608 = vrot.lane.b32.xlu0 %v1540, 8
        %v1609 = vpop.permute.xlu0 %1608
        %1610 = vrot.lane.b32.xlu0 %v1541, 8
        %v1611 = vpop.permute.xlu0 %1610
        %1612 = vrot.lane.b32.xlu0 %v1542, 8
        %v1613 = vpop.permute.xlu0 %1612
        %1614 = vrot.lane.b32.xlu0 %v1543, 8
        %v1615 = vpop.permute.xlu0 %1614
        %1616 = vrot.lane.b32.xlu0 %v1544, 8
        %v1617 = vpop.permute.xlu0 %1616
        %1618 = vrot.lane.b32.xlu0 %v1545, 8
        %v1619 = vpop.permute.xlu0 %1618
        %1620 = vrot.lane.b32.xlu0 %v1546, 8
        %v1621 = vpop.permute.xlu0 %1620
        %1622 = vrot.lane.b32.xlu0 %v1547, 8
        %v1623 = vpop.permute.xlu0 %1622
        %1624 = vrot.lane.b32.xlu0 %v1548, 8
        %v1625 = vpop.permute.xlu0 %1624
        %1626 = vrot.lane.b32.xlu0 %v1549, 8
        %v1627 = vpop.permute.xlu0 %1626
        %1628 = vrot.lane.b32.xlu0 %v1550, 8
        %v1629 = vpop.permute.xlu0 %1628
        %1630 = vrot.lane.b32.xlu0 %v1551, 8
        %v1631 = vpop.permute.xlu0 %1630
        %1632 = vrot.lane.b32.xlu0 %v1552, 8
        %v1633 = vpop.permute.xlu0 %1632
        %1634 = vrot.lane.b32.xlu0 %v1553, 8
        %v1635 = vpop.permute.xlu0 %1634
        %1636 = vrot.lane.b32.xlu0 %v1554, 8
        %v1637 = vpop.permute.xlu0 %1636
        %1638 = vrot.lane.b32.xlu0 %v1555, 8
        %v1639 = vpop.permute.xlu0 %1638
        %1640 = vrot.lane.b32.xlu0 %v1556, 8
        %v1641 = vpop.permute.xlu0 %1640
        %1642 = vrot.lane.b32.xlu0 %v1557, 8
        %v1643 = vpop.permute.xlu0 %1642
        %1644 = vrot.lane.b32.xlu0 %v1558, 8
        %v1645 = vpop.permute.xlu0 %1644
        %1646 = vrot.lane.b32.xlu0 %v1559, 8
        %v1647 = vpop.permute.xlu0 %1646
        %1648 = vrot.lane.b32.xlu0 %v1560, 8
        %v1649 = vpop.permute.xlu0 %1648
        %1650 = vrot.lane.b32.xlu0 %v1561, 8
        %v1651 = vpop.permute.xlu0 %1650
        %1652 = vrot.lane.b32.xlu0 %v1562, 8
        %v1653 = vpop.permute.xlu0 %1652
        %1654 = vrot.lane.b32.xlu0 %v1563, 8
        %v1655 = vpop.permute.xlu0 %1654
        %1656 = vrot.lane.b32.xlu0 %v1564, 8
        %v1657 = vpop.permute.xlu0 %1656
        %1658 = vrot.lane.b32.xlu0 %v1565, 8
        %v1659 = vpop.permute.xlu0 %1658
        %1660 = vrot.lane.b32.xlu0 %v1566, 8
        %v1661 = vpop.permute.xlu0 %1660
        %1662 = vrot.lane.b32.xlu0 %v1567, 8
        %v1663 = vpop.permute.xlu0 %1662
        %vm1696 = vcmask 97344
        %1697 = vst.msk [vmem:[#allocation4] sm:$0xff] %vm1696, %v1601
        %1698 = vst.msk [vmem:[#allocation4 + $0x8] sm:$0xff] %vm1696, %v1603
        %1699 = vst.msk [vmem:[#allocation4 + $0x10] sm:$0xff] %vm1696, %v1605
        %1700 = vst.msk [vmem:[#allocation4 + $0x18] sm:$0xff] %vm1696, %v1607
        %1701 = vst.msk [vmem:[#allocation4 + $0x20] sm:$0xff] %vm1696, %v1609
        %1702 = vst.msk [vmem:[#allocation4 + $0x28] sm:$0xff] %vm1696, %v1611
        %1703 = vst.msk [vmem:[#allocation4 + $0x30] sm:$0xff] %vm1696, %v1613
        %1704 = vst.msk [vmem:[#allocation4 + $0x38] sm:$0xff] %vm1696, %v1615
        %1705 = vst.msk [vmem:[#allocation4 + $0x40] sm:$0xff] %vm1696, %v1617
        %1706 = vst.msk [vmem:[#allocation4 + $0x48] sm:$0xff] %vm1696, %v1619
        %1707 = vst.msk [vmem:[#allocation4 + $0x50] sm:$0xff] %vm1696, %v1621
        %1708 = vst.msk [vmem:[#allocation4 + $0x58] sm:$0xff] %vm1696, %v1623
        %1709 = vst.msk [vmem:[#allocation4 + $0x60] sm:$0xff] %vm1696, %v1625
        %1710 = vst.msk [vmem:[#allocation4 + $0x68] sm:$0xff] %vm1696, %v1627
        %1711 = vst.msk [vmem:[#allocation4 + $0x70] sm:$0xff] %vm1696, %v1629
        %1712 = vst.msk [vmem:[#allocation4 + $0x78] sm:$0xff] %vm1696, %v1631
        %1713 = vst.msk [vmem:[#allocation4 + $0x80] sm:$0xff] %vm1696, %v1633
        %1714 = vst.msk [vmem:[#allocation4 + $0x88] sm:$0xff] %vm1696, %v1635
        %1715 = vst.msk [vmem:[#allocation4 + $0x90] sm:$0xff] %vm1696, %v1637
        %1716 = vst.msk [vmem:[#allocation4 + $0x98] sm:$0xff] %vm1696, %v1639
        %1717 = vst.msk [vmem:[#allocation4 + $0xa0] sm:$0xff] %vm1696, %v1641
        %1718 = vst.msk [vmem:[#allocation4 + $0xa8] sm:$0xff] %vm1696, %v1643
        %1719 = vst.msk [vmem:[#allocation4 + $0xb0] sm:$0xff] %vm1696, %v1645
        %1720 = vst.msk [vmem:[#allocation4 + $0xb8] sm:$0xff] %vm1696, %v1647
        %1721 = vst.msk [vmem:[#allocation4 + $0xc0] sm:$0xff] %vm1696, %v1649
        %1722 = vst.msk [vmem:[#allocation4 + $0xc8] sm:$0xff] %vm1696, %v1651
        %1723 = vst.msk [vmem:[#allocation4 + $0xd0] sm:$0xff] %vm1696, %v1653
        %1724 = vst.msk [vmem:[#allocation4 + $0xd8] sm:$0xff] %vm1696, %v1655
        %1725 = vst.msk [vmem:[#allocation4 + $0xe0] sm:$0xff] %vm1696, %v1657
        %1726 = vst.msk [vmem:[#allocation4 + $0xe8] sm:$0xff] %vm1696, %v1659
        %1727 = vst.msk [vmem:[#allocation4 + $0xf0] sm:$0xff] %vm1696, %v1661
        %1728 = vst.msk [vmem:[#allocation4 + $0xf8] sm:$0xff] %vm1696, %v1663
        %v1729 = vld [vmem:[%s1246] sm:$0xff]
        %v1730 = vld [vmem:[%s1246 + $0x8] sm:$0xff]
        %v1731 = vld [vmem:[%s1246 + $0x18] sm:$0xff]
        %v1732 = vld [vmem:[%s1246 + $0x20] sm:$0xff]
        %v1733 = vld [vmem:[%s1246 + $0x30] sm:$0xff]
        %v1734 = vld [vmem:[%s1246 + $0x38] sm:$0xff]
        %v1735 = vld [vmem:[%s1246 + $0x48] sm:$0xff]
        %v1736 = vld [vmem:[%s1246 + $0x50] sm:$0xff]
        %v1737 = vld [vmem:[%s1246 + $0x60] sm:$0xff]
        %v1738 = vld [vmem:[%s1246 + $0x68] sm:$0xff]
        %v1739 = vld [vmem:[%s1246 + $0x78] sm:$0xff]
        %v1740 = vld [vmem:[%s1246 + $0x80] sm:$0xff]
        %v1741 = vld [vmem:[%s1246 + $0x90] sm:$0xff]
        %v1742 = vld [vmem:[%s1246 + $0x98] sm:$0xff]
        %v1743 = vld [vmem:[%s1246 + $0xa8] sm:$0xff]
        %v1744 = vld [vmem:[%s1246 + $0xb0] sm:$0xff]
        %v1745 = vld [vmem:[%s1246 + $0xc0] sm:$0xff]
        %v1746 = vld [vmem:[%s1246 + $0xc8] sm:$0xff]
        %v1747 = vld [vmem:[%s1246 + $0xd8] sm:$0xff]
        %v1748 = vld [vmem:[%s1246 + $0xe0] sm:$0xff]
        %v1749 = vld [vmem:[%s1246 + $0xf0] sm:$0xff]
        %v1750 = vld [vmem:[%s1246 + $0xf8] sm:$0xff]
        %v1751 = vld [vmem:[%s1246 + $0x108] sm:$0xff]
        %v1752 = vld [vmem:[%s1246 + $0x110] sm:$0xff]
        %v1753 = vld [vmem:[%s1246 + $0x120] sm:$0xff]
        %v1754 = vld [vmem:[%s1246 + $0x128] sm:$0xff]
        %v1755 = vld [vmem:[%s1246 + $0x138] sm:$0xff]
        %v1756 = vld [vmem:[%s1246 + $0x140] sm:$0xff]
        %v1757 = vld [vmem:[%s1246 + $0x150] sm:$0xff]
        %v1758 = vld [vmem:[%s1246 + $0x158] sm:$0xff]
        %v1759 = vld [vmem:[%s1246 + $0x168] sm:$0xff]
        %v1760 = vld [vmem:[%s1246 + $0x170] sm:$0xff]
        %1793 = vrot.lane.b32.xlu0 %v1729, 12
        %v1794 = vpop.permute.xlu0 %1793
        %1795 = vrot.lane.b32.xlu0 %v1730, 12
        %v1796 = vpop.permute.xlu0 %1795
        %1797 = vrot.lane.b32.xlu0 %v1731, 12
        %v1798 = vpop.permute.xlu0 %1797
        %1799 = vrot.lane.b32.xlu0 %v1732, 12
        %v1800 = vpop.permute.xlu0 %1799
        %1801 = vrot.lane.b32.xlu0 %v1733, 12
        %v1802 = vpop.permute.xlu0 %1801
        %1803 = vrot.lane.b32.xlu0 %v1734, 12
        %v1804 = vpop.permute.xlu0 %1803
        %1805 = vrot.lane.b32.xlu0 %v1735, 12
        %v1806 = vpop.permute.xlu0 %1805
        %1807 = vrot.lane.b32.xlu0 %v1736, 12
        %v1808 = vpop.permute.xlu0 %1807
        %1809 = vrot.lane.b32.xlu0 %v1737, 12
        %v1810 = vpop.permute.xlu0 %1809
        %1811 = vrot.lane.b32.xlu0 %v1738, 12
        %v1812 = vpop.permute.xlu0 %1811
        %1813 = vrot.lane.b32.xlu0 %v1739, 12
        %v1814 = vpop.permute.xlu0 %1813
        %1815 = vrot.lane.b32.xlu0 %v1740, 12
        %v1816 = vpop.permute.xlu0 %1815
        %1817 = vrot.lane.b32.xlu0 %v1741, 12
        %v1818 = vpop.permute.xlu0 %1817
        %1819 = vrot.lane.b32.xlu0 %v1742, 12
        %v1820 = vpop.permute.xlu0 %1819
        %1821 = vrot.lane.b32.xlu0 %v1743, 12
        %v1822 = vpop.permute.xlu0 %1821
        %1823 = vrot.lane.b32.xlu0 %v1744, 12
        %v1824 = vpop.permute.xlu0 %1823
        %1825 = vrot.lane.b32.xlu0 %v1745, 12
        %v1826 = vpop.permute.xlu0 %1825
        %1827 = vrot.lane.b32.xlu0 %v1746, 12
        %v1828 = vpop.permute.xlu0 %1827
        %1829 = vrot.lane.b32.xlu0 %v1747, 12
        %v1830 = vpop.permute.xlu0 %1829
        %1831 = vrot.lane.b32.xlu0 %v1748, 12
        %v1832 = vpop.permute.xlu0 %1831
        %1833 = vrot.lane.b32.xlu0 %v1749, 12
        %v1834 = vpop.permute.xlu0 %1833
        %1835 = vrot.lane.b32.xlu0 %v1750, 12
        %v1836 = vpop.permute.xlu0 %1835
        %1837 = vrot.lane.b32.xlu0 %v1751, 12
        %v1838 = vpop.permute.xlu0 %1837
        %1839 = vrot.lane.b32.xlu0 %v1752, 12
        %v1840 = vpop.permute.xlu0 %1839
        %1841 = vrot.lane.b32.xlu0 %v1753, 12
        %v1842 = vpop.permute.xlu0 %1841
        %1843 = vrot.lane.b32.xlu0 %v1754, 12
        %v1844 = vpop.permute.xlu0 %1843
        %1845 = vrot.lane.b32.xlu0 %v1755, 12
        %v1846 = vpop.permute.xlu0 %1845
        %1847 = vrot.lane.b32.xlu0 %v1756, 12
        %v1848 = vpop.permute.xlu0 %1847
        %1849 = vrot.lane.b32.xlu0 %v1757, 12
        %v1850 = vpop.permute.xlu0 %1849
        %1851 = vrot.lane.b32.xlu0 %v1758, 12
        %v1852 = vpop.permute.xlu0 %1851
        %1853 = vrot.lane.b32.xlu0 %v1759, 12
        %v1854 = vpop.permute.xlu0 %1853
        %1855 = vrot.lane.b32.xlu0 %v1760, 12
        %v1856 = vpop.permute.xlu0 %1855
        %vm1889 = vcmask 130144
        %1890 = vst.msk [vmem:[#allocation4] sm:$0xff] %vm1889, %v1794
        %1891 = vst.msk [vmem:[#allocation4 + $0x8] sm:$0xff] %vm1889, %v1796
        %1892 = vst.msk [vmem:[#allocation4 + $0x10] sm:$0xff] %vm1889, %v1798
        %1893 = vst.msk [vmem:[#allocation4 + $0x18] sm:$0xff] %vm1889, %v1800
        %1894 = vst.msk [vmem:[#allocation4 + $0x20] sm:$0xff] %vm1889, %v1802
        %1895 = vst.msk [vmem:[#allocation4 + $0x28] sm:$0xff] %vm1889, %v1804
        %1896 = vst.msk [vmem:[#allocation4 + $0x30] sm:$0xff] %vm1889, %v1806
        %1897 = vst.msk [vmem:[#allocation4 + $0x38] sm:$0xff] %vm1889, %v1808
        %1898 = vst.msk [vmem:[#allocation4 + $0x40] sm:$0xff] %vm1889, %v1810
        %1899 = vst.msk [vmem:[#allocation4 + $0x48] sm:$0xff] %vm1889, %v1812
        %1900 = vst.msk [vmem:[#allocation4 + $0x50] sm:$0xff] %vm1889, %v1814
        %1901 = vst.msk [vmem:[#allocation4 + $0x58] sm:$0xff] %vm1889, %v1816
        %1902 = vst.msk [vmem:[#allocation4 + $0x60] sm:$0xff] %vm1889, %v1818
        %1903 = vst.msk [vmem:[#allocation4 + $0x68] sm:$0xff] %vm1889, %v1820
        %1904 = vst.msk [vmem:[#allocation4 + $0x70] sm:$0xff] %vm1889, %v1822
        %1905 = vst.msk [vmem:[#allocation4 + $0x78] sm:$0xff] %vm1889, %v1824
        %1906 = vst.msk [vmem:[#allocation4 + $0x80] sm:$0xff] %vm1889, %v1826
        %1907 = vst.msk [vmem:[#allocation4 + $0x88] sm:$0xff] %vm1889, %v1828
        %1908 = vst.msk [vmem:[#allocation4 + $0x90] sm:$0xff] %vm1889, %v1830
        %1909 = vst.msk [vmem:[#allocation4 + $0x98] sm:$0xff] %vm1889, %v1832
        %1910 = vst.msk [vmem:[#allocation4 + $0xa0] sm:$0xff] %vm1889, %v1834
        %1911 = vst.msk [vmem:[#allocation4 + $0xa8] sm:$0xff] %vm1889, %v1836
        %1912 = vst.msk [vmem:[#allocation4 + $0xb0] sm:$0xff] %vm1889, %v1838
        %1913 = vst.msk [vmem:[#allocation4 + $0xb8] sm:$0xff] %vm1889, %v1840
        %1914 = vst.msk [vmem:[#allocation4 + $0xc0] sm:$0xff] %vm1889, %v1842
        %1915 = vst.msk [vmem:[#allocation4 + $0xc8] sm:$0xff] %vm1889, %v1844
        %1916 = vst.msk [vmem:[#allocation4 + $0xd0] sm:$0xff] %vm1889, %v1846
        %1917 = vst.msk [vmem:[#allocation4 + $0xd8] sm:$0xff] %vm1889, %v1848
        %1918 = vst.msk [vmem:[#allocation4 + $0xe0] sm:$0xff] %vm1889, %v1850
        %1919 = vst.msk [vmem:[#allocation4 + $0xe8] sm:$0xff] %vm1889, %v1852
        %1920 = vst.msk [vmem:[#allocation4 + $0xf0] sm:$0xff] %vm1889, %v1854
        %1921 = vst.msk [vmem:[#allocation4 + $0xf8] sm:$0xff] %vm1889, %v1856
        %v1922 = vld [vmem:[%s1246 + $0x1] sm:$0xff]
        %v1923 = vld [vmem:[%s1246 + $0x9] sm:$0xff]
        %v1924 = vld [vmem:[%s1246 + $0x19] sm:$0xff]
        %v1925 = vld [vmem:[%s1246 + $0x21] sm:$0xff]
        %v1926 = vld [vmem:[%s1246 + $0x31] sm:$0xff]
        %v1927 = vld [vmem:[%s1246 + $0x39] sm:$0xff]
        %v1928 = vld [vmem:[%s1246 + $0x49] sm:$0xff]
        %v1929 = vld [vmem:[%s1246 + $0x51] sm:$0xff]
        %v1930 = vld [vmem:[%s1246 + $0x61] sm:$0xff]
        %v1931 = vld [vmem:[%s1246 + $0x69] sm:$0xff]
        %v1932 = vld [vmem:[%s1246 + $0x79] sm:$0xff]
        %v1933 = vld [vmem:[%s1246 + $0x81] sm:$0xff]
        %v1934 = vld [vmem:[%s1246 + $0x91] sm:$0xff]
        %v1935 = vld [vmem:[%s1246 + $0x99] sm:$0xff]
        %v1936 = vld [vmem:[%s1246 + $0xa9] sm:$0xff]
        %v1937 = vld [vmem:[%s1246 + $0xb1] sm:$0xff]
        %v1938 = vld [vmem:[%s1246 + $0xc1] sm:$0xff]
        %v1939 = vld [vmem:[%s1246 + $0xc9] sm:$0xff]
        %v1940 = vld [vmem:[%s1246 + $0xd9] sm:$0xff]
        %v1941 = vld [vmem:[%s1246 + $0xe1] sm:$0xff]
        %v1942 = vld [vmem:[%s1246 + $0xf1] sm:$0xff]
        %v1943 = vld [vmem:[%s1246 + $0xf9] sm:$0xff]
        %v1944 = vld [vmem:[%s1246 + $0x109] sm:$0xff]
        %v1945 = vld [vmem:[%s1246 + $0x111] sm:$0xff]
        %v1946 = vld [vmem:[%s1246 + $0x121] sm:$0xff]
        %v1947 = vld [vmem:[%s1246 + $0x129] sm:$0xff]
        %v1948 = vld [vmem:[%s1246 + $0x139] sm:$0xff]
        %v1949 = vld [vmem:[%s1246 + $0x141] sm:$0xff]
        %v1950 = vld [vmem:[%s1246 + $0x151] sm:$0xff]
        %v1951 = vld [vmem:[%s1246 + $0x159] sm:$0xff]
        %v1952 = vld [vmem:[%s1246 + $0x169] sm:$0xff]
        %v1953 = vld [vmem:[%s1246 + $0x171] sm:$0xff]
        %1986 = vrot.lane.b32.xlu0 %v1922, 16
        %v1987 = vpop.permute.xlu0 %1986
        %1988 = vrot.lane.b32.xlu0 %v1923, 16
        %v1989 = vpop.permute.xlu0 %1988
        %1990 = vrot.lane.b32.xlu0 %v1924, 16
        %v1991 = vpop.permute.xlu0 %1990
        %1992 = vrot.lane.b32.xlu0 %v1925, 16
        %v1993 = vpop.permute.xlu0 %1992
        %1994 = vrot.lane.b32.xlu0 %v1926, 16
        %v1995 = vpop.permute.xlu0 %1994
        %1996 = vrot.lane.b32.xlu0 %v1927, 16
        %v1997 = vpop.permute.xlu0 %1996
        %1998 = vrot.lane.b32.xlu0 %v1928, 16
        %v1999 = vpop.permute.xlu0 %1998
        %2000 = vrot.lane.b32.xlu0 %v1929, 16
        %v2001 = vpop.permute.xlu0 %2000
        %2002 = vrot.lane.b32.xlu0 %v1930, 16
        %v2003 = vpop.permute.xlu0 %2002
        %2004 = vrot.lane.b32.xlu0 %v1931, 16
        %v2005 = vpop.permute.xlu0 %2004
        %2006 = vrot.lane.b32.xlu0 %v1932, 16
        %v2007 = vpop.permute.xlu0 %2006
        %2008 = vrot.lane.b32.xlu0 %v1933, 16
        %v2009 = vpop.permute.xlu0 %2008
        %2010 = vrot.lane.b32.xlu0 %v1934, 16
        %v2011 = vpop.permute.xlu0 %2010
        %2012 = vrot.lane.b32.xlu0 %v1935, 16
        %v2013 = vpop.permute.xlu0 %2012
        %2014 = vrot.lane.b32.xlu0 %v1936, 16
        %v2015 = vpop.permute.xlu0 %2014
        %2016 = vrot.lane.b32.xlu0 %v1937, 16
        %v2017 = vpop.permute.xlu0 %2016
        %2018 = vrot.lane.b32.xlu0 %v1938, 16
        %v2019 = vpop.permute.xlu0 %2018
        %2020 = vrot.lane.b32.xlu0 %v1939, 16
        %v2021 = vpop.permute.xlu0 %2020
        %2022 = vrot.lane.b32.xlu0 %v1940, 16
        %v2023 = vpop.permute.xlu0 %2022
        %2024 = vrot.lane.b32.xlu0 %v1941, 16
        %v2025 = vpop.permute.xlu0 %2024
        %2026 = vrot.lane.b32.xlu0 %v1942, 16
        %v2027 = vpop.permute.xlu0 %2026
        %2028 = vrot.lane.b32.xlu0 %v1943, 16
        %v2029 = vpop.permute.xlu0 %2028
        %2030 = vrot.lane.b32.xlu0 %v1944, 16
        %v2031 = vpop.permute.xlu0 %2030
        %2032 = vrot.lane.b32.xlu0 %v1945, 16
        %v2033 = vpop.permute.xlu0 %2032
        %2034 = vrot.lane.b32.xlu0 %v1946, 16
        %v2035 = vpop.permute.xlu0 %2034
        %2036 = vrot.lane.b32.xlu0 %v1947, 16
        %v2037 = vpop.permute.xlu0 %2036
        %2038 = vrot.lane.b32.xlu0 %v1948, 16
        %v2039 = vpop.permute.xlu0 %2038
        %2040 = vrot.lane.b32.xlu0 %v1949, 16
        %v2041 = vpop.permute.xlu0 %2040
        %2042 = vrot.lane.b32.xlu0 %v1950, 16
        %v2043 = vpop.permute.xlu0 %2042
        %2044 = vrot.lane.b32.xlu0 %v1951, 16
        %v2045 = vpop.permute.xlu0 %2044
        %2046 = vrot.lane.b32.xlu0 %v1952, 16
        %v2047 = vpop.permute.xlu0 %2046
        %2048 = vrot.lane.b32.xlu0 %v1953, 16
        %v2049 = vpop.permute.xlu0 %2048
        %vm2082 = vcmask 162944
        %2083 = vst.msk [vmem:[#allocation4] sm:$0xff] %vm2082, %v1987
        %2084 = vst.msk [vmem:[#allocation4 + $0x8] sm:$0xff] %vm2082, %v1989
        %2085 = vst.msk [vmem:[#allocation4 + $0x10] sm:$0xff] %vm2082, %v1991
        %2086 = vst.msk [vmem:[#allocation4 + $0x18] sm:$0xff] %vm2082, %v1993
        %2087 = vst.msk [vmem:[#allocation4 + $0x20] sm:$0xff] %vm2082, %v1995
        %2088 = vst.msk [vmem:[#allocation4 + $0x28] sm:$0xff] %vm2082, %v1997
        %2089 = vst.msk [vmem:[#allocation4 + $0x30] sm:$0xff] %vm2082, %v1999
        %2090 = vst.msk [vmem:[#allocation4 + $0x38] sm:$0xff] %vm2082, %v2001
        %2091 = vst.msk [vmem:[#allocation4 + $0x40] sm:$0xff] %vm2082, %v2003
        %2092 = vst.msk [vmem:[#allocation4 + $0x48] sm:$0xff] %vm2082, %v2005
        %2093 = vst.msk [vmem:[#allocation4 + $0x50] sm:$0xff] %vm2082, %v2007
        %2094 = vst.msk [vmem:[#allocation4 + $0x58] sm:$0xff] %vm2082, %v2009
        %2095 = vst.msk [vmem:[#allocation4 + $0x60] sm:$0xff] %vm2082, %v2011
        %2096 = vst.msk [vmem:[#allocation4 + $0x68] sm:$0xff] %vm2082, %v2013
        %2097 = vst.msk [vmem:[#allocation4 + $0x70] sm:$0xff] %vm2082, %v2015
        %2098 = vst.msk [vmem:[#allocation4 + $0x78] sm:$0xff] %vm2082, %v2017
        %2099 = vst.msk [vmem:[#allocation4 + $0x80] sm:$0xff] %vm2082, %v2019
        %2100 = vst.msk [vmem:[#allocation4 + $0x88] sm:$0xff] %vm2082, %v2021
        %2101 = vst.msk [vmem:[#allocation4 + $0x90] sm:$0xff] %vm2082, %v2023
        %2102 = vst.msk [vmem:[#allocation4 + $0x98] sm:$0xff] %vm2082, %v2025
        %2103 = vst.msk [vmem:[#allocation4 + $0xa0] sm:$0xff] %vm2082, %v2027
        %2104 = vst.msk [vmem:[#allocation4 + $0xa8] sm:$0xff] %vm2082, %v2029
        %2105 = vst.msk [vmem:[#allocation4 + $0xb0] sm:$0xff] %vm2082, %v2031
        %2106 = vst.msk [vmem:[#allocation4 + $0xb8] sm:$0xff] %vm2082, %v2033
        %2107 = vst.msk [vmem:[#allocation4 + $0xc0] sm:$0xff] %vm2082, %v2035
        %2108 = vst.msk [vmem:[#allocation4 + $0xc8] sm:$0xff] %vm2082, %v2037
        %2109 = vst.msk [vmem:[#allocation4 + $0xd0] sm:$0xff] %vm2082, %v2039
        %2110 = vst.msk [vmem:[#allocation4 + $0xd8] sm:$0xff] %vm2082, %v2041
        %2111 = vst.msk [vmem:[#allocation4 + $0xe0] sm:$0xff] %vm2082, %v2043
        %2112 = vst.msk [vmem:[#allocation4 + $0xe8] sm:$0xff] %vm2082, %v2045
        %2113 = vst.msk [vmem:[#allocation4 + $0xf0] sm:$0xff] %vm2082, %v2047
        %2114 = vst.msk [vmem:[#allocation4 + $0xf8] sm:$0xff] %vm2082, %v2049
        %v2115 = vld [vmem:[%s1246 + $0x2] sm:$0xff]
        %v2116 = vld [vmem:[%s1246 + $0xa] sm:$0xff]
        %v2117 = vld [vmem:[%s1246 + $0x1a] sm:$0xff]
        %v2118 = vld [vmem:[%s1246 + $0x22] sm:$0xff]
        %v2119 = vld [vmem:[%s1246 + $0x32] sm:$0xff]
        %v2120 = vld [vmem:[%s1246 + $0x3a] sm:$0xff]
        %v2121 = vld [vmem:[%s1246 + $0x4a] sm:$0xff]
        %v2122 = vld [vmem:[%s1246 + $0x52] sm:$0xff]
        %v2123 = vld [vmem:[%s1246 + $0x62] sm:$0xff]
        %v2124 = vld [vmem:[%s1246 + $0x6a] sm:$0xff]
        %v2125 = vld [vmem:[%s1246 + $0x7a] sm:$0xff]
        %v2126 = vld [vmem:[%s1246 + $0x82] sm:$0xff]
        %v2127 = vld [vmem:[%s1246 + $0x92] sm:$0xff]
        %v2128 = vld [vmem:[%s1246 + $0x9a] sm:$0xff]
        %v2129 = vld [vmem:[%s1246 + $0xaa] sm:$0xff]
        %v2130 = vld [vmem:[%s1246 + $0xb2] sm:$0xff]
        %v2131 = vld [vmem:[%s1246 + $0xc2] sm:$0xff]
        %v2132 = vld [vmem:[%s1246 + $0xca] sm:$0xff]
        %v2133 = vld [vmem:[%s1246 + $0xda] sm:$0xff]
        %v2134 = vld [vmem:[%s1246 + $0xe2] sm:$0xff]
        %v2135 = vld [vmem:[%s1246 + $0xf2] sm:$0xff]
        %v2136 = vld [vmem:[%s1246 + $0xfa] sm:$0xff]
        %v2137 = vld [vmem:[%s1246 + $0x10a] sm:$0xff]
        %v2138 = vld [vmem:[%s1246 + $0x112] sm:$0xff]
        %v2139 = vld [vmem:[%s1246 + $0x122] sm:$0xff]
        %v2140 = vld [vmem:[%s1246 + $0x12a] sm:$0xff]
        %v2141 = vld [vmem:[%s1246 + $0x13a] sm:$0xff]
        %v2142 = vld [vmem:[%s1246 + $0x142] sm:$0xff]
        %v2143 = vld [vmem:[%s1246 + $0x152] sm:$0xff]
        %v2144 = vld [vmem:[%s1246 + $0x15a] sm:$0xff]
        %v2145 = vld [vmem:[%s1246 + $0x16a] sm:$0xff]
        %v2146 = vld [vmem:[%s1246 + $0x172] sm:$0xff]
        %2179 = vrot.lane.b32.xlu0 %v2115, 20
        %v2180 = vpop.permute.xlu0 %2179
        %2181 = vrot.lane.b32.xlu0 %v2116, 20
        %v2182 = vpop.permute.xlu0 %2181
        %2183 = vrot.lane.b32.xlu0 %v2117, 20
        %v2184 = vpop.permute.xlu0 %2183
        %2185 = vrot.lane.b32.xlu0 %v2118, 20
        %v2186 = vpop.permute.xlu0 %2185
        %2187 = vrot.lane.b32.xlu0 %v2119, 20
        %v2188 = vpop.permute.xlu0 %2187
        %2189 = vrot.lane.b32.xlu0 %v2120, 20
        %v2190 = vpop.permute.xlu0 %2189
        %2191 = vrot.lane.b32.xlu0 %v2121, 20
        %v2192 = vpop.permute.xlu0 %2191
        %2193 = vrot.lane.b32.xlu0 %v2122, 20
        %v2194 = vpop.permute.xlu0 %2193
        %2195 = vrot.lane.b32.xlu0 %v2123, 20
        %v2196 = vpop.permute.xlu0 %2195
        %2197 = vrot.lane.b32.xlu0 %v2124, 20
        %v2198 = vpop.permute.xlu0 %2197
        %2199 = vrot.lane.b32.xlu0 %v2125, 20
        %v2200 = vpop.permute.xlu0 %2199
        %2201 = vrot.lane.b32.xlu0 %v2126, 20
        %v2202 = vpop.permute.xlu0 %2201
        %2203 = vrot.lane.b32.xlu0 %v2127, 20
        %v2204 = vpop.permute.xlu0 %2203
        %2205 = vrot.lane.b32.xlu0 %v2128, 20
        %v2206 = vpop.permute.xlu0 %2205
        %2207 = vrot.lane.b32.xlu0 %v2129, 20
        %v2208 = vpop.permute.xlu0 %2207
        %2209 = vrot.lane.b32.xlu0 %v2130, 20
        %v2210 = vpop.permute.xlu0 %2209
        %2211 = vrot.lane.b32.xlu0 %v2131, 20
        %v2212 = vpop.permute.xlu0 %2211
        %2213 = vrot.lane.b32.xlu0 %v2132, 20
        %v2214 = vpop.permute.xlu0 %2213
        %2215 = vrot.lane.b32.xlu0 %v2133, 20
        %v2216 = vpop.permute.xlu0 %2215
        %2217 = vrot.lane.b32.xlu0 %v2134, 20
        %v2218 = vpop.permute.xlu0 %2217
        %2219 = vrot.lane.b32.xlu0 %v2135, 20
        %v2220 = vpop.permute.xlu0 %2219
        %2221 = vrot.lane.b32.xlu0 %v2136, 20
        %v2222 = vpop.permute.xlu0 %2221
        %2223 = vrot.lane.b32.xlu0 %v2137, 20
        %v2224 = vpop.permute.xlu0 %2223
        %2225 = vrot.lane.b32.xlu0 %v2138, 20
        %v2226 = vpop.permute.xlu0 %2225
        %2227 = vrot.lane.b32.xlu0 %v2139, 20
        %v2228 = vpop.permute.xlu0 %2227
        %2229 = vrot.lane.b32.xlu0 %v2140, 20
        %v2230 = vpop.permute.xlu0 %2229
        %2231 = vrot.lane.b32.xlu0 %v2141, 20
        %v2232 = vpop.permute.xlu0 %2231
        %2233 = vrot.lane.b32.xlu0 %v2142, 20
        %v2234 = vpop.permute.xlu0 %2233
        %2235 = vrot.lane.b32.xlu0 %v2143, 20
        %v2236 = vpop.permute.xlu0 %2235
        %2237 = vrot.lane.b32.xlu0 %v2144, 20
        %v2238 = vpop.permute.xlu0 %2237
        %2239 = vrot.lane.b32.xlu0 %v2145, 20
        %v2240 = vpop.permute.xlu0 %2239
        %2241 = vrot.lane.b32.xlu0 %v2146, 20
        %v2242 = vpop.permute.xlu0 %2241
        %vm2275 = vcmask 195744
        %2276 = vst.msk [vmem:[#allocation4] sm:$0xff] %vm2275, %v2180
        %2277 = vst.msk [vmem:[#allocation4 + $0x8] sm:$0xff] %vm2275, %v2182
        %2278 = vst.msk [vmem:[#allocation4 + $0x10] sm:$0xff] %vm2275, %v2184
        %2279 = vst.msk [vmem:[#allocation4 + $0x18] sm:$0xff] %vm2275, %v2186
        %2280 = vst.msk [vmem:[#allocation4 + $0x20] sm:$0xff] %vm2275, %v2188
        %2281 = vst.msk [vmem:[#allocation4 + $0x28] sm:$0xff] %vm2275, %v2190
        %2282 = vst.msk [vmem:[#allocation4 + $0x30] sm:$0xff] %vm2275, %v2192
        %2283 = vst.msk [vmem:[#allocation4 + $0x38] sm:$0xff] %vm2275, %v2194
        %2284 = vst.msk [vmem:[#allocation4 + $0x40] sm:$0xff] %vm2275, %v2196
        %2285 = vst.msk [vmem:[#allocation4 + $0x48] sm:$0xff] %vm2275, %v2198
        %2286 = vst.msk [vmem:[#allocation4 + $0x50] sm:$0xff] %vm2275, %v2200
        %2287 = vst.msk [vmem:[#allocation4 + $0x58] sm:$0xff] %vm2275, %v2202
        %2288 = vst.msk [vmem:[#allocation4 + $0x60] sm:$0xff] %vm2275, %v2204
        %2289 = vst.msk [vmem:[#allocation4 + $0x68] sm:$0xff] %vm2275, %v2206
        %2290 = vst.msk [vmem:[#allocation4 + $0x70] sm:$0xff] %vm2275, %v2208
        %2291 = vst.msk [vmem:[#allocation4 + $0x78] sm:$0xff] %vm2275, %v2210
        %2292 = vst.msk [vmem:[#allocation4 + $0x80] sm:$0xff] %vm2275, %v2212
        %2293 = vst.msk [vmem:[#allocation4 + $0x88] sm:$0xff] %vm2275, %v2214
        %2294 = vst.msk [vmem:[#allocation4 + $0x90] sm:$0xff] %vm2275, %v2216
        %2295 = vst.msk [vmem:[#allocation4 + $0x98] sm:$0xff] %vm2275, %v2218
        %2296 = vst.msk [vmem:[#allocation4 + $0xa0] sm:$0xff] %vm2275, %v2220
        %2297 = vst.msk [vmem:[#allocation4 + $0xa8] sm:$0xff] %vm2275, %v2222
        %2298 = vst.msk [vmem:[#allocation4 + $0xb0] sm:$0xff] %vm2275, %v2224
        %2299 = vst.msk [vmem:[#allocation4 + $0xb8] sm:$0xff] %vm2275, %v2226
        %2300 = vst.msk [vmem:[#allocation4 + $0xc0] sm:$0xff] %vm2275, %v2228
        %2301 = vst.msk [vmem:[#allocation4 + $0xc8] sm:$0xff] %vm2275, %v2230
        %2302 = vst.msk [vmem:[#allocation4 + $0xd0] sm:$0xff] %vm2275, %v2232
        %2303 = vst.msk [vmem:[#allocation4 + $0xd8] sm:$0xff] %vm2275, %v2234
        %2304 = vst.msk [vmem:[#allocation4 + $0xe0] sm:$0xff] %vm2275, %v2236
        %2305 = vst.msk [vmem:[#allocation4 + $0xe8] sm:$0xff] %vm2275, %v2238
        %2306 = vst.msk [vmem:[#allocation4 + $0xf0] sm:$0xff] %vm2275, %v2240
        %2307 = vst.msk [vmem:[#allocation4 + $0xf8] sm:$0xff] %vm2275, %v2242
        %s2308 = scalar_lea.vmem [#allocation3], 48
        %v2309 = vld [vmem:[%s2308] sm:$0xff]
        %v2310 = vld [vmem:[%s2308 + $0x8] sm:$0xff]
        %v2311 = vld [vmem:[%s2308 + $0x18] sm:$0xff]
        %v2312 = vld [vmem:[%s2308 + $0x20] sm:$0xff]
        %v2313 = vld [vmem:[%s2308 + $0x30] sm:$0xff]
        %v2314 = vld [vmem:[%s2308 + $0x38] sm:$0xff]
        %v2315 = vld [vmem:[%s2308 + $0x48] sm:$0xff]
        %v2316 = vld [vmem:[%s2308 + $0x50] sm:$0xff]
        %v2317 = vld [vmem:[%s2308 + $0x60] sm:$0xff]
        %v2318 = vld [vmem:[%s2308 + $0x68] sm:$0xff]
        %v2319 = vld [vmem:[%s2308 + $0x78] sm:$0xff]
        %v2320 = vld [vmem:[%s2308 + $0x80] sm:$0xff]
        %v2321 = vld [vmem:[%s2308 + $0x90] sm:$0xff]
        %v2322 = vld [vmem:[%s2308 + $0x98] sm:$0xff]
        %v2323 = vld [vmem:[%s2308 + $0xa8] sm:$0xff]
        %v2324 = vld [vmem:[%s2308 + $0xb0] sm:$0xff]
        %v2325 = vld [vmem:[%s2308 + $0xc0] sm:$0xff]
        %v2326 = vld [vmem:[%s2308 + $0xc8] sm:$0xff]
        %v2327 = vld [vmem:[%s2308 + $0xd8] sm:$0xff]
        %v2328 = vld [vmem:[%s2308 + $0xe0] sm:$0xff]
        %v2329 = vld [vmem:[%s2308 + $0xf0] sm:$0xff]
        %v2330 = vld [vmem:[%s2308 + $0xf8] sm:$0xff]
        %v2331 = vld [vmem:[%s2308 + $0x108] sm:$0xff]
        %v2332 = vld [vmem:[%s2308 + $0x110] sm:$0xff]
        %v2333 = vld [vmem:[%s2308 + $0x120] sm:$0xff]
        %v2334 = vld [vmem:[%s2308 + $0x128] sm:$0xff]
        %v2335 = vld [vmem:[%s2308 + $0x138] sm:$0xff]
        %v2336 = vld [vmem:[%s2308 + $0x140] sm:$0xff]
        %v2337 = vld [vmem:[%s2308 + $0x150] sm:$0xff]
        %v2338 = vld [vmem:[%s2308 + $0x158] sm:$0xff]
        %v2339 = vld [vmem:[%s2308 + $0x168] sm:$0xff]
        %v2340 = vld [vmem:[%s2308 + $0x170] sm:$0xff]
        %2373 = vrot.lane.b32.xlu0 %v2309, 24
        %v2374 = vpop.permute.xlu0 %2373
        %2375 = vrot.lane.b32.xlu0 %v2310, 24
        %v2376 = vpop.permute.xlu0 %2375
        %2377 = vrot.lane.b32.xlu0 %v2311, 24
        %v2378 = vpop.permute.xlu0 %2377
        %2379 = vrot.lane.b32.xlu0 %v2312, 24
        %v2380 = vpop.permute.xlu0 %2379
        %2381 = vrot.lane.b32.xlu0 %v2313, 24
        %v2382 = vpop.permute.xlu0 %2381
        %2383 = vrot.lane.b32.xlu0 %v2314, 24
        %v2384 = vpop.permute.xlu0 %2383
        %2385 = vrot.lane.b32.xlu0 %v2315, 24
        %v2386 = vpop.permute.xlu0 %2385
        %2387 = vrot.lane.b32.xlu0 %v2316, 24
        %v2388 = vpop.permute.xlu0 %2387
        %2389 = vrot.lane.b32.xlu0 %v2317, 24
        %v2390 = vpop.permute.xlu0 %2389
        %2391 = vrot.lane.b32.xlu0 %v2318, 24
        %v2392 = vpop.permute.xlu0 %2391
        %2393 = vrot.lane.b32.xlu0 %v2319, 24
        %v2394 = vpop.permute.xlu0 %2393
        %2395 = vrot.lane.b32.xlu0 %v2320, 24
        %v2396 = vpop.permute.xlu0 %2395
        %2397 = vrot.lane.b32.xlu0 %v2321, 24
        %v2398 = vpop.permute.xlu0 %2397
        %2399 = vrot.lane.b32.xlu0 %v2322, 24
        %v2400 = vpop.permute.xlu0 %2399
        %2401 = vrot.lane.b32.xlu0 %v2323, 24
        %v2402 = vpop.permute.xlu0 %2401
        %2403 = vrot.lane.b32.xlu0 %v2324, 24
        %v2404 = vpop.permute.xlu0 %2403
        %2405 = vrot.lane.b32.xlu0 %v2325, 24
        %v2406 = vpop.permute.xlu0 %2405
        %2407 = vrot.lane.b32.xlu0 %v2326, 24
        %v2408 = vpop.permute.xlu0 %2407
        %2409 = vrot.lane.b32.xlu0 %v2327, 24
        %v2410 = vpop.permute.xlu0 %2409
        %2411 = vrot.lane.b32.xlu0 %v2328, 24
        %v2412 = vpop.permute.xlu0 %2411
        %2413 = vrot.lane.b32.xlu0 %v2329, 24
        %v2414 = vpop.permute.xlu0 %2413
        %2415 = vrot.lane.b32.xlu0 %v2330, 24
        %v2416 = vpop.permute.xlu0 %2415
        %2417 = vrot.lane.b32.xlu0 %v2331, 24
        %v2418 = vpop.permute.xlu0 %2417
        %2419 = vrot.lane.b32.xlu0 %v2332, 24
        %v2420 = vpop.permute.xlu0 %2419
        %2421 = vrot.lane.b32.xlu0 %v2333, 24
        %v2422 = vpop.permute.xlu0 %2421
        %2423 = vrot.lane.b32.xlu0 %v2334, 24
        %v2424 = vpop.permute.xlu0 %2423
        %2425 = vrot.lane.b32.xlu0 %v2335, 24
        %v2426 = vpop.permute.xlu0 %2425
        %2427 = vrot.lane.b32.xlu0 %v2336, 24
        %v2428 = vpop.permute.xlu0 %2427
        %2429 = vrot.lane.b32.xlu0 %v2337, 24
        %v2430 = vpop.permute.xlu0 %2429
        %2431 = vrot.lane.b32.xlu0 %v2338, 24
        %v2432 = vpop.permute.xlu0 %2431
        %2433 = vrot.lane.b32.xlu0 %v2339, 24
        %v2434 = vpop.permute.xlu0 %2433
        %2435 = vrot.lane.b32.xlu0 %v2340, 24
        %v2436 = vpop.permute.xlu0 %2435
        %vm2469 = vcmask 228544
        %2470 = vst.msk [vmem:[#allocation4] sm:$0xff] %vm2469, %v2374
        %2471 = vst.msk [vmem:[#allocation4 + $0x8] sm:$0xff] %vm2469, %v2376
        %2472 = vst.msk [vmem:[#allocation4 + $0x10] sm:$0xff] %vm2469, %v2378
        %2473 = vst.msk [vmem:[#allocation4 + $0x18] sm:$0xff] %vm2469, %v2380
        %2474 = vst.msk [vmem:[#allocation4 + $0x20] sm:$0xff] %vm2469, %v2382
        %2475 = vst.msk [vmem:[#allocation4 + $0x28] sm:$0xff] %vm2469, %v2384
        %2476 = vst.msk [vmem:[#allocation4 + $0x30] sm:$0xff] %vm2469, %v2386
        %2477 = vst.msk [vmem:[#allocation4 + $0x38] sm:$0xff] %vm2469, %v2388
        %2478 = vst.msk [vmem:[#allocation4 + $0x40] sm:$0xff] %vm2469, %v2390
        %2479 = vst.msk [vmem:[#allocation4 + $0x48] sm:$0xff] %vm2469, %v2392
        %2480 = vst.msk [vmem:[#allocation4 + $0x50] sm:$0xff] %vm2469, %v2394
        %2481 = vst.msk [vmem:[#allocation4 + $0x58] sm:$0xff] %vm2469, %v2396
        %2482 = vst.msk [vmem:[#allocation4 + $0x60] sm:$0xff] %vm2469, %v2398
        %2483 = vst.msk [vmem:[#allocation4 + $0x68] sm:$0xff] %vm2469, %v2400
        %2484 = vst.msk [vmem:[#allocation4 + $0x70] sm:$0xff] %vm2469, %v2402
        %2485 = vst.msk [vmem:[#allocation4 + $0x78] sm:$0xff] %vm2469, %v2404
        %2486 = vst.msk [vmem:[#allocation4 + $0x80] sm:$0xff] %vm2469, %v2406
        %2487 = vst.msk [vmem:[#allocation4 + $0x88] sm:$0xff] %vm2469, %v2408
        %2488 = vst.msk [vmem:[#allocation4 + $0x90] sm:$0xff] %vm2469, %v2410
        %2489 = vst.msk [vmem:[#allocation4 + $0x98] sm:$0xff] %vm2469, %v2412
        %2490 = vst.msk [vmem:[#allocation4 + $0xa0] sm:$0xff] %vm2469, %v2414
        %2491 = vst.msk [vmem:[#allocation4 + $0xa8] sm:$0xff] %vm2469, %v2416
        %2492 = vst.msk [vmem:[#allocation4 + $0xb0] sm:$0xff] %vm2469, %v2418
        %2493 = vst.msk [vmem:[#allocation4 + $0xb8] sm:$0xff] %vm2469, %v2420
        %2494 = vst.msk [vmem:[#allocation4 + $0xc0] sm:$0xff] %vm2469, %v2422
        %2495 = vst.msk [vmem:[#allocation4 + $0xc8] sm:$0xff] %vm2469, %v2424
        %2496 = vst.msk [vmem:[#allocation4 + $0xd0] sm:$0xff] %vm2469, %v2426
        %2497 = vst.msk [vmem:[#allocation4 + $0xd8] sm:$0xff] %vm2469, %v2428
        %2498 = vst.msk [vmem:[#allocation4 + $0xe0] sm:$0xff] %vm2469, %v2430
        %2499 = vst.msk [vmem:[#allocation4 + $0xe8] sm:$0xff] %vm2469, %v2432
        %2500 = vst.msk [vmem:[#allocation4 + $0xf0] sm:$0xff] %vm2469, %v2434
        %2501 = vst.msk [vmem:[#allocation4 + $0xf8] sm:$0xff] %vm2469, %v2436
        %v2502 = vld [vmem:[%s2308 + $0x1] sm:$0xff]
        %v2503 = vld [vmem:[%s2308 + $0x9] sm:$0xff]
        %v2504 = vld [vmem:[%s2308 + $0x19] sm:$0xff]
        %v2505 = vld [vmem:[%s2308 + $0x21] sm:$0xff]
        %v2506 = vld [vmem:[%s2308 + $0x31] sm:$0xff]
        %v2507 = vld [vmem:[%s2308 + $0x39] sm:$0xff]
        %v2508 = vld [vmem:[%s2308 + $0x49] sm:$0xff]
        %v2509 = vld [vmem:[%s2308 + $0x51] sm:$0xff]
        %v2510 = vld [vmem:[%s2308 + $0x61] sm:$0xff]
        %v2511 = vld [vmem:[%s2308 + $0x69] sm:$0xff]
        %v2512 = vld [vmem:[%s2308 + $0x79] sm:$0xff]
        %v2513 = vld [vmem:[%s2308 + $0x81] sm:$0xff]
        %v2514 = vld [vmem:[%s2308 + $0x91] sm:$0xff]
        %v2515 = vld [vmem:[%s2308 + $0x99] sm:$0xff]
        %v2516 = vld [vmem:[%s2308 + $0xa9] sm:$0xff]
        %v2517 = vld [vmem:[%s2308 + $0xb1] sm:$0xff]
        %v2518 = vld [vmem:[%s2308 + $0xc1] sm:$0xff]
        %v2519 = vld [vmem:[%s2308 + $0xc9] sm:$0xff]
        %v2520 = vld [vmem:[%s2308 + $0xd9] sm:$0xff]
        %v2521 = vld [vmem:[%s2308 + $0xe1] sm:$0xff]
        %v2522 = vld [vmem:[%s2308 + $0xf1] sm:$0xff]
        %v2523 = vld [vmem:[%s2308 + $0xf9] sm:$0xff]
        %v2524 = vld [vmem:[%s2308 + $0x109] sm:$0xff]
        %v2525 = vld [vmem:[%s2308 + $0x111] sm:$0xff]
        %v2526 = vld [vmem:[%s2308 + $0x121] sm:$0xff]
        %v2527 = vld [vmem:[%s2308 + $0x129] sm:$0xff]
        %v2528 = vld [vmem:[%s2308 + $0x139] sm:$0xff]
        %v2529 = vld [vmem:[%s2308 + $0x141] sm:$0xff]
        %v2530 = vld [vmem:[%s2308 + $0x151] sm:$0xff]
        %v2531 = vld [vmem:[%s2308 + $0x159] sm:$0xff]
        %v2532 = vld [vmem:[%s2308 + $0x169] sm:$0xff]
        %v2533 = vld [vmem:[%s2308 + $0x171] sm:$0xff]
        %2566 = vrot.lane.b32.xlu0 %v2502, 28
        %v2567 = vpop.permute.xlu0 %2566
        %2568 = vrot.lane.b32.xlu0 %v2503, 28
        %v2569 = vpop.permute.xlu0 %2568
        %2570 = vrot.lane.b32.xlu0 %v2504, 28
        %v2571 = vpop.permute.xlu0 %2570
        %2572 = vrot.lane.b32.xlu0 %v2505, 28
        %v2573 = vpop.permute.xlu0 %2572
        %2574 = vrot.lane.b32.xlu0 %v2506, 28
        %v2575 = vpop.permute.xlu0 %2574
        %2576 = vrot.lane.b32.xlu0 %v2507, 28
        %v2577 = vpop.permute.xlu0 %2576
        %2578 = vrot.lane.b32.xlu0 %v2508, 28
        %v2579 = vpop.permute.xlu0 %2578
        %2580 = vrot.lane.b32.xlu0 %v2509, 28
        %v2581 = vpop.permute.xlu0 %2580
        %2582 = vrot.lane.b32.xlu0 %v2510, 28
        %v2583 = vpop.permute.xlu0 %2582
        %2584 = vrot.lane.b32.xlu0 %v2511, 28
        %v2585 = vpop.permute.xlu0 %2584
        %2586 = vrot.lane.b32.xlu0 %v2512, 28
        %v2587 = vpop.permute.xlu0 %2586
        %2588 = vrot.lane.b32.xlu0 %v2513, 28
        %v2589 = vpop.permute.xlu0 %2588
        %2590 = vrot.lane.b32.xlu0 %v2514, 28
        %v2591 = vpop.permute.xlu0 %2590
        %2592 = vrot.lane.b32.xlu0 %v2515, 28
        %v2593 = vpop.permute.xlu0 %2592
        %2594 = vrot.lane.b32.xlu0 %v2516, 28
        %v2595 = vpop.permute.xlu0 %2594
        %2596 = vrot.lane.b32.xlu0 %v2517, 28
        %v2597 = vpop.permute.xlu0 %2596
        %2598 = vrot.lane.b32.xlu0 %v2518, 28
        %v2599 = vpop.permute.xlu0 %2598
        %2600 = vrot.lane.b32.xlu0 %v2519, 28
        %v2601 = vpop.permute.xlu0 %2600
        %2602 = vrot.lane.b32.xlu0 %v2520, 28
        %v2603 = vpop.permute.xlu0 %2602
        %2604 = vrot.lane.b32.xlu0 %v2521, 28
        %v2605 = vpop.permute.xlu0 %2604
        %2606 = vrot.lane.b32.xlu0 %v2522, 28
        %v2607 = vpop.permute.xlu0 %2606
        %2608 = vrot.lane.b32.xlu0 %v2523, 28
        %v2609 = vpop.permute.xlu0 %2608
        %2610 = vrot.lane.b32.xlu0 %v2524, 28
        %v2611 = vpop.permute.xlu0 %2610
        %2612 = vrot.lane.b32.xlu0 %v2525, 28
        %v2613 = vpop.permute.xlu0 %2612
        %2614 = vrot.lane.b32.xlu0 %v2526, 28
        %v2615 = vpop.permute.xlu0 %2614
        %2616 = vrot.lane.b32.xlu0 %v2527, 28
        %v2617 = vpop.permute.xlu0 %2616
        %2618 = vrot.lane.b32.xlu0 %v2528, 28
        %v2619 = vpop.permute.xlu0 %2618
        %2620 = vrot.lane.b32.xlu0 %v2529, 28
        %v2621 = vpop.permute.xlu0 %2620
        %2622 = vrot.lane.b32.xlu0 %v2530, 28
        %v2623 = vpop.permute.xlu0 %2622
        %2624 = vrot.lane.b32.xlu0 %v2531, 28
        %v2625 = vpop.permute.xlu0 %2624
        %2626 = vrot.lane.b32.xlu0 %v2532, 28
        %v2627 = vpop.permute.xlu0 %2626
        %2628 = vrot.lane.b32.xlu0 %v2533, 28
        %v2629 = vpop.permute.xlu0 %2628
        %vm2662 = vcmask 261344
        %2663 = vst.msk [vmem:[#allocation4] sm:$0xff] %vm2662, %v2567
        %2664 = vst.msk [vmem:[#allocation4 + $0x8] sm:$0xff] %vm2662, %v2569
        %2665 = vst.msk [vmem:[#allocation4 + $0x10] sm:$0xff] %vm2662, %v2571
        %2666 = vst.msk [vmem:[#allocation4 + $0x18] sm:$0xff] %vm2662, %v2573
        %2667 = vst.msk [vmem:[#allocation4 + $0x20] sm:$0xff] %vm2662, %v2575
        %2668 = vst.msk [vmem:[#allocation4 + $0x28] sm:$0xff] %vm2662, %v2577
        %2669 = vst.msk [vmem:[#allocation4 + $0x30] sm:$0xff] %vm2662, %v2579
        %2670 = vst.msk [vmem:[#allocation4 + $0x38] sm:$0xff] %vm2662, %v2581
        %2671 = vst.msk [vmem:[#allocation4 + $0x40] sm:$0xff] %vm2662, %v2583
        %2672 = vst.msk [vmem:[#allocation4 + $0x48] sm:$0xff] %vm2662, %v2585
        %2673 = vst.msk [vmem:[#allocation4 + $0x50] sm:$0xff] %vm2662, %v2587
        %2674 = vst.msk [vmem:[#allocation4 + $0x58] sm:$0xff] %vm2662, %v2589
        %2675 = vst.msk [vmem:[#allocation4 + $0x60] sm:$0xff] %vm2662, %v2591
        %2676 = vst.msk [vmem:[#allocation4 + $0x68] sm:$0xff] %vm2662, %v2593
        %2677 = vst.msk [vmem:[#allocation4 + $0x70] sm:$0xff] %vm2662, %v2595
        %2678 = vst.msk [vmem:[#allocation4 + $0x78] sm:$0xff] %vm2662, %v2597
        %2679 = vst.msk [vmem:[#allocation4 + $0x80] sm:$0xff] %vm2662, %v2599
        %2680 = vst.msk [vmem:[#allocation4 + $0x88] sm:$0xff] %vm2662, %v2601
        %2681 = vst.msk [vmem:[#allocation4 + $0x90] sm:$0xff] %vm2662, %v2603
        %2682 = vst.msk [vmem:[#allocation4 + $0x98] sm:$0xff] %vm2662, %v2605
        %2683 = vst.msk [vmem:[#allocation4 + $0xa0] sm:$0xff] %vm2662, %v2607
        %2684 = vst.msk [vmem:[#allocation4 + $0xa8] sm:$0xff] %vm2662, %v2609
        %2685 = vst.msk [vmem:[#allocation4 + $0xb0] sm:$0xff] %vm2662, %v2611
        %2686 = vst.msk [vmem:[#allocation4 + $0xb8] sm:$0xff] %vm2662, %v2613
        %2687 = vst.msk [vmem:[#allocation4 + $0xc0] sm:$0xff] %vm2662, %v2615
        %2688 = vst.msk [vmem:[#allocation4 + $0xc8] sm:$0xff] %vm2662, %v2617
        %2689 = vst.msk [vmem:[#allocation4 + $0xd0] sm:$0xff] %vm2662, %v2619
        %2690 = vst.msk [vmem:[#allocation4 + $0xd8] sm:$0xff] %vm2662, %v2621
        %2691 = vst.msk [vmem:[#allocation4 + $0xe0] sm:$0xff] %vm2662, %v2623
        %2692 = vst.msk [vmem:[#allocation4 + $0xe8] sm:$0xff] %vm2662, %v2625
        %2693 = vst.msk [vmem:[#allocation4 + $0xf0] sm:$0xff] %vm2662, %v2627
        %2694 = vst.msk [vmem:[#allocation4 + $0xf8] sm:$0xff] %vm2662, %v2629
        %v2695 = vld [vmem:[%s2308 + $0x2] sm:$0xff]
        %v2696 = vld [vmem:[%s2308 + $0xa] sm:$0xff]
        %v2697 = vld [vmem:[%s2308 + $0x1a] sm:$0xff]
        %v2698 = vld [vmem:[%s2308 + $0x22] sm:$0xff]
        %v2699 = vld [vmem:[%s2308 + $0x32] sm:$0xff]
        %v2700 = vld [vmem:[%s2308 + $0x3a] sm:$0xff]
        %v2701 = vld [vmem:[%s2308 + $0x4a] sm:$0xff]
        %v2702 = vld [vmem:[%s2308 + $0x52] sm:$0xff]
        %v2703 = vld [vmem:[%s2308 + $0x62] sm:$0xff]
        %v2704 = vld [vmem:[%s2308 + $0x6a] sm:$0xff]
        %v2705 = vld [vmem:[%s2308 + $0x7a] sm:$0xff]
        %v2706 = vld [vmem:[%s2308 + $0x82] sm:$0xff]
        %v2707 = vld [vmem:[%s2308 + $0x92] sm:$0xff]
        %v2708 = vld [vmem:[%s2308 + $0x9a] sm:$0xff]
        %v2709 = vld [vmem:[%s2308 + $0xaa] sm:$0xff]
        %v2710 = vld [vmem:[%s2308 + $0xb2] sm:$0xff]
        %v2711 = vld [vmem:[%s2308 + $0xc2] sm:$0xff]
        %v2712 = vld [vmem:[%s2308 + $0xca] sm:$0xff]
        %v2713 = vld [vmem:[%s2308 + $0xda] sm:$0xff]
        %v2714 = vld [vmem:[%s2308 + $0xe2] sm:$0xff]
        %v2715 = vld [vmem:[%s2308 + $0xf2] sm:$0xff]
        %v2716 = vld [vmem:[%s2308 + $0xfa] sm:$0xff]
        %v2717 = vld [vmem:[%s2308 + $0x10a] sm:$0xff]
        %v2718 = vld [vmem:[%s2308 + $0x112] sm:$0xff]
        %v2719 = vld [vmem:[%s2308 + $0x122] sm:$0xff]
        %v2720 = vld [vmem:[%s2308 + $0x12a] sm:$0xff]
        %v2721 = vld [vmem:[%s2308 + $0x13a] sm:$0xff]
        %v2722 = vld [vmem:[%s2308 + $0x142] sm:$0xff]
        %v2723 = vld [vmem:[%s2308 + $0x152] sm:$0xff]
        %v2724 = vld [vmem:[%s2308 + $0x15a] sm:$0xff]
        %v2725 = vld [vmem:[%s2308 + $0x16a] sm:$0xff]
        %v2726 = vld [vmem:[%s2308 + $0x172] sm:$0xff]
        %2759 = vrot.lane.b32.xlu0 %v2695, 32
        %v2760 = vpop.permute.xlu0 %2759
        %2761 = vrot.lane.b32.xlu0 %v2696, 32
        %v2762 = vpop.permute.xlu0 %2761
        %2763 = vrot.lane.b32.xlu0 %v2697, 32
        %v2764 = vpop.permute.xlu0 %2763
        %2765 = vrot.lane.b32.xlu0 %v2698, 32
        %v2766 = vpop.permute.xlu0 %2765
        %2767 = vrot.lane.b32.xlu0 %v2699, 32
        %v2768 = vpop.permute.xlu0 %2767
        %2769 = vrot.lane.b32.xlu0 %v2700, 32
        %v2770 = vpop.permute.xlu0 %2769
        %2771 = vrot.lane.b32.xlu0 %v2701, 32
        %v2772 = vpop.permute.xlu0 %2771
        %2773 = vrot.lane.b32.xlu0 %v2702, 32
        %v2774 = vpop.permute.xlu0 %2773
        %2775 = vrot.lane.b32.xlu0 %v2703, 32
        %v2776 = vpop.permute.xlu0 %2775
        %2777 = vrot.lane.b32.xlu0 %v2704, 32
        %v2778 = vpop.permute.xlu0 %2777
        %2779 = vrot.lane.b32.xlu0 %v2705, 32
        %v2780 = vpop.permute.xlu0 %2779
        %2781 = vrot.lane.b32.xlu0 %v2706, 32
        %v2782 = vpop.permute.xlu0 %2781
        %2783 = vrot.lane.b32.xlu0 %v2707, 32
        %v2784 = vpop.permute.xlu0 %2783
        %2785 = vrot.lane.b32.xlu0 %v2708, 32
        %v2786 = vpop.permute.xlu0 %2785
        %2787 = vrot.lane.b32.xlu0 %v2709, 32
        %v2788 = vpop.permute.xlu0 %2787
        %2789 = vrot.lane.b32.xlu0 %v2710, 32
        %v2790 = vpop.permute.xlu0 %2789
        %2791 = vrot.lane.b32.xlu0 %v2711, 32
        %v2792 = vpop.permute.xlu0 %2791
        %2793 = vrot.lane.b32.xlu0 %v2712, 32
        %v2794 = vpop.permute.xlu0 %2793
        %2795 = vrot.lane.b32.xlu0 %v2713, 32
        %v2796 = vpop.permute.xlu0 %2795
        %2797 = vrot.lane.b32.xlu0 %v2714, 32
        %v2798 = vpop.permute.xlu0 %2797
        %2799 = vrot.lane.b32.xlu0 %v2715, 32
        %v2800 = vpop.permute.xlu0 %2799
        %2801 = vrot.lane.b32.xlu0 %v2716, 32
        %v2802 = vpop.permute.xlu0 %2801
        %2803 = vrot.lane.b32.xlu0 %v2717, 32
        %v2804 = vpop.permute.xlu0 %2803
        %2805 = vrot.lane.b32.xlu0 %v2718, 32
        %v2806 = vpop.permute.xlu0 %2805
        %2807 = vrot.lane.b32.xlu0 %v2719, 32
        %v2808 = vpop.permute.xlu0 %2807
        %2809 = vrot.lane.b32.xlu0 %v2720, 32
        %v2810 = vpop.permute.xlu0 %2809
        %2811 = vrot.lane.b32.xlu0 %v2721, 32
        %v2812 = vpop.permute.xlu0 %2811
        %2813 = vrot.lane.b32.xlu0 %v2722, 32
        %v2814 = vpop.permute.xlu0 %2813
        %2815 = vrot.lane.b32.xlu0 %v2723, 32
        %v2816 = vpop.permute.xlu0 %2815
        %2817 = vrot.lane.b32.xlu0 %v2724, 32
        %v2818 = vpop.permute.xlu0 %2817
        %2819 = vrot.lane.b32.xlu0 %v2725, 32
        %v2820 = vpop.permute.xlu0 %2819
        %2821 = vrot.lane.b32.xlu0 %v2726, 32
        %v2822 = vpop.permute.xlu0 %2821
        %vm2855 = vcmask 294144
        %2856 = vst.msk [vmem:[#allocation4] sm:$0xff] %vm2855, %v2760
        %2857 = vst.msk [vmem:[#allocation4 + $0x8] sm:$0xff] %vm2855, %v2762
        %2858 = vst.msk [vmem:[#allocation4 + $0x10] sm:$0xff] %vm2855, %v2764
        %2859 = vst.msk [vmem:[#allocation4 + $0x18] sm:$0xff] %vm2855, %v2766
        %2860 = vst.msk [vmem:[#allocation4 + $0x20] sm:$0xff] %vm2855, %v2768
        %2861 = vst.msk [vmem:[#allocation4 + $0x28] sm:$0xff] %vm2855, %v2770
        %2862 = vst.msk [vmem:[#allocation4 + $0x30] sm:$0xff] %vm2855, %v2772
        %2863 = vst.msk [vmem:[#allocation4 + $0x38] sm:$0xff] %vm2855, %v2774
        %2864 = vst.msk [vmem:[#allocation4 + $0x40] sm:$0xff] %vm2855, %v2776
        %2865 = vst.msk [vmem:[#allocation4 + $0x48] sm:$0xff] %vm2855, %v2778
        %2866 = vst.msk [vmem:[#allocation4 + $0x50] sm:$0xff] %vm2855, %v2780
        %2867 = vst.msk [vmem:[#allocation4 + $0x58] sm:$0xff] %vm2855, %v2782
        %2868 = vst.msk [vmem:[#allocation4 + $0x60] sm:$0xff] %vm2855, %v2784
        %2869 = vst.msk [vmem:[#allocation4 + $0x68] sm:$0xff] %vm2855, %v2786
        %2870 = vst.msk [vmem:[#allocation4 + $0x70] sm:$0xff] %vm2855, %v2788
        %2871 = vst.msk [vmem:[#allocation4 + $0x78] sm:$0xff] %vm2855, %v2790
        %2872 = vst.msk [vmem:[#allocation4 + $0x80] sm:$0xff] %vm2855, %v2792
        %2873 = vst.msk [vmem:[#allocation4 + $0x88] sm:$0xff] %vm2855, %v2794
        %2874 = vst.msk [vmem:[#allocation4 + $0x90] sm:$0xff] %vm2855, %v2796
        %2875 = vst.msk [vmem:[#allocation4 + $0x98] sm:$0xff] %vm2855, %v2798
        %2876 = vst.msk [vmem:[#allocation4 + $0xa0] sm:$0xff] %vm2855, %v2800
        %2877 = vst.msk [vmem:[#allocation4 + $0xa8] sm:$0xff] %vm2855, %v2802
        %2878 = vst.msk [vmem:[#allocation4 + $0xb0] sm:$0xff] %vm2855, %v2804
        %2879 = vst.msk [vmem:[#allocation4 + $0xb8] sm:$0xff] %vm2855, %v2806
        %2880 = vst.msk [vmem:[#allocation4 + $0xc0] sm:$0xff] %vm2855, %v2808
        %2881 = vst.msk [vmem:[#allocation4 + $0xc8] sm:$0xff] %vm2855, %v2810
        %2882 = vst.msk [vmem:[#allocation4 + $0xd0] sm:$0xff] %vm2855, %v2812
        %2883 = vst.msk [vmem:[#allocation4 + $0xd8] sm:$0xff] %vm2855, %v2814
        %2884 = vst.msk [vmem:[#allocation4 + $0xe0] sm:$0xff] %vm2855, %v2816
        %2885 = vst.msk [vmem:[#allocation4 + $0xe8] sm:$0xff] %vm2855, %v2818
        %2886 = vst.msk [vmem:[#allocation4 + $0xf0] sm:$0xff] %vm2855, %v2820
        %2887 = vst.msk [vmem:[#allocation4 + $0xf8] sm:$0xff] %vm2855, %v2822
        %v2888 = vld [vmem:[#allocation4] sm:$0xff]
        %v2889 = vld [vmem:[#allocation4 + $0x8] sm:$0xff]
        %v2890 = vld [vmem:[#allocation4 + $0x10] sm:$0xff]
        %v2891 = vld [vmem:[#allocation4 + $0x18] sm:$0xff]
        %v2892 = vld [vmem:[#allocation4 + $0x20] sm:$0xff]
        %v2893 = vld [vmem:[#allocation4 + $0x28] sm:$0xff]
        %v2894 = vld [vmem:[#allocation4 + $0x30] sm:$0xff]
        %v2895 = vld [vmem:[#allocation4 + $0x38] sm:$0xff]
        %v2896 = vld [vmem:[#allocation4 + $0x40] sm:$0xff]
        %v2897 = vld [vmem:[#allocation4 + $0x48] sm:$0xff]
        %v2898 = vld [vmem:[#allocation4 + $0x50] sm:$0xff]
        %v2899 = vld [vmem:[#allocation4 + $0x58] sm:$0xff]
        %v2900 = vld [vmem:[#allocation4 + $0x60] sm:$0xff]
        %v2901 = vld [vmem:[#allocation4 + $0x68] sm:$0xff]
        %v2902 = vld [vmem:[#allocation4 + $0x70] sm:$0xff]
        %v2903 = vld [vmem:[#allocation4 + $0x78] sm:$0xff]
        %v2904 = vld [vmem:[#allocation4 + $0x80] sm:$0xff]
        %v2905 = vld [vmem:[#allocation4 + $0x88] sm:$0xff]
        %v2906 = vld [vmem:[#allocation4 + $0x90] sm:$0xff]
        %v2907 = vld [vmem:[#allocation4 + $0x98] sm:$0xff]
        %v2908 = vld [vmem:[#allocation4 + $0xa0] sm:$0xff]
        %v2909 = vld [vmem:[#allocation4 + $0xa8] sm:$0xff]
        %v2910 = vld [vmem:[#allocation4 + $0xb0] sm:$0xff]
        %v2911 = vld [vmem:[#allocation4 + $0xb8] sm:$0xff]
        %v2912 = vld [vmem:[#allocation4 + $0xc0] sm:$0xff]
        %v2913 = vld [vmem:[#allocation4 + $0xc8] sm:$0xff]
        %v2914 = vld [vmem:[#allocation4 + $0xd0] sm:$0xff]
        %v2915 = vld [vmem:[#allocation4 + $0xd8] sm:$0xff]
        %v2916 = vld [vmem:[#allocation4 + $0xe0] sm:$0xff]
        %v2917 = vld [vmem:[#allocation4 + $0xe8] sm:$0xff]
        %v2918 = vld [vmem:[#allocation4 + $0xf0] sm:$0xff]
        %v2919 = vld [vmem:[#allocation4 + $0xf8] sm:$0xff]
        %v2920 = vld [vmem:[%s2] sm:$0xff]
        %v2921 = vld [vmem:[%s2 + $0x8] sm:$0xff]
        %v2922 = vld [vmem:[%s2 + $0x10] sm:$0xff]
        %v2923 = vld [vmem:[%s2 + $0x18] sm:$0xff]
        %v2924 = vld [vmem:[%s2 + $0x20] sm:$0xf]
        %v2925 = vld [vmem:[%s3] sm:$0x1]
        %v2927 = vperm.slane %v2925, 0
        %vm2929 = vcmask 293888
        %v2931 = vsel %vm2929, %v2888, 0
        %v2934 = vsel %vm2929, %v2889, 0
        %v2937 = vsel %vm2929, %v2890, 0
        %v2940 = vsel %vm2929, %v2891, 0
        %v2943 = vsel %vm2929, %v2892, 0
        %v2946 = vsel %vm2929, %v2893, 0
        %v2949 = vsel %vm2929, %v2894, 0
        %v2952 = vsel %vm2929, %v2895, 0
        %v2955 = vsel %vm2929, %v2896, 0
        %v2958 = vsel %vm2929, %v2897, 0
        %v2961 = vsel %vm2929, %v2898, 0
        %v2964 = vsel %vm2929, %v2899, 0
        %v2967 = vsel %vm2929, %v2900, 0
        %v2970 = vsel %vm2929, %v2901, 0
        %v2973 = vsel %vm2929, %v2902, 0
        %v2976 = vsel %vm2929, %v2903, 0
        %v2979 = vsel %vm2929, %v2904, 0
        %v2982 = vsel %vm2929, %v2905, 0
        %v2985 = vsel %vm2929, %v2906, 0
        %v2988 = vsel %vm2929, %v2907, 0
        %v2991 = vsel %vm2929, %v2908, 0
        %v2994 = vsel %vm2929, %v2909, 0
        %v2997 = vsel %vm2929, %v2910, 0
        %v3000 = vsel %vm2929, %v2911, 0
        %v3003 = vsel %vm2929, %v2912, 0
        %v3006 = vsel %vm2929, %v2913, 0
        %v3009 = vsel %vm2929, %v2914, 0
        %v3012 = vsel %vm2929, %v2915, 0
        %v3015 = vsel %vm2929, %v2916, 0
        %v3018 = vsel %vm2929, %v2917, 0
        %v3021 = vsel %vm2929, %v2918, 0
        %v3024 = vsel %vm2929, %v2919, 0
        %vm3026 = vcmask 1043456
        %v3028 = vsel %vm3026, %v2924, 0
        %3030 = vmatpush.msra.mxu0 0.0
        %3031 = vmatpush.msra.mxu0 0.0
        %3032 = vmatpush.msra.mxu0 0.0
        %3033 = vmatpush.msra.mxu0 0.0
        %3034 = vmatpush.msra.mxu0 0.0
        %3035 = vmatpush.msra.mxu0 0.0
        %3036 = vmatpush.msra.mxu0 0.0
        %3037 = vmatpush.msra.mxu0 0.0
        %3038 = vmatpush.msra.mxu0 0.0
        %3039 = vmatpush.msra.mxu0 0.0
        %3040 = vmatpush.msra.mxu0 0.0
        %3041 = vmatpush.msra.mxu0 %v3028
        %3042 = vmatpush.msra.mxu0 %v2923
        %3043 = vmatpush.msra.mxu0 %v2922
        %3044 = vmatpush.msra.mxu0 %v2921
        %3045 = vmatpush.msra.mxu0 %v2920
        %3046 = vmatmul.f32.gmra.mxu0 %v2931
        %v3047 = vpop.f32.mrf.mxu0
        %v3048 = vadd.f32 %v2927, %v3047
        %3049 = vmatmul.f32.gmra.mxu0 %v2934
        %v3050 = vpop.f32.mrf.mxu0
        %v3051 = vadd.f32 %v2927, %v3050
        %3052 = vmatmul.f32.gmra.mxu0 %v2937
        %v3053 = vpop.f32.mrf.mxu0
        %v3054 = vadd.f32 %v2927, %v3053
        %3055 = vmatmul.f32.gmra.mxu0 %v2940
        %v3056 = vpop.f32.mrf.mxu0
        %v3057 = vadd.f32 %v2927, %v3056
        %3058 = vmatmul.f32.gmra.mxu0 %v2943
        %v3059 = vpop.f32.mrf.mxu0
        %v3060 = vadd.f32 %v2927, %v3059
        %3061 = vmatmul.f32.gmra.mxu0 %v2946
        %v3062 = vpop.f32.mrf.mxu0
        %v3063 = vadd.f32 %v2927, %v3062
        %3064 = vmatmul.f32.gmra.mxu0 %v2949
        %v3065 = vpop.f32.mrf.mxu0
        %v3066 = vadd.f32 %v2927, %v3065
        %3067 = vmatmul.f32.gmra.mxu0 %v2952
        %v3068 = vpop.f32.mrf.mxu0
        %v3069 = vadd.f32 %v2927, %v3068
        %3070 = vmatmul.f32.gmra.mxu0 %v2955
        %v3071 = vpop.f32.mrf.mxu0
        %v3072 = vadd.f32 %v2927, %v3071
        %3073 = vmatmul.f32.gmra.mxu0 %v2958
        %v3074 = vpop.f32.mrf.mxu0
        %v3075 = vadd.f32 %v2927, %v3074
        %3076 = vmatmul.f32.gmra.mxu0 %v2961
        %v3077 = vpop.f32.mrf.mxu0
        %v3078 = vadd.f32 %v2927, %v3077
        %3079 = vmatmul.f32.gmra.mxu0 %v2964
        %v3080 = vpop.f32.mrf.mxu0
        %v3081 = vadd.f32 %v2927, %v3080
        %3082 = vmatmul.f32.gmra.mxu0 %v2967
        %v3083 = vpop.f32.mrf.mxu0
        %v3084 = vadd.f32 %v2927, %v3083
        %3085 = vmatmul.f32.gmra.mxu0 %v2970
        %v3086 = vpop.f32.mrf.mxu0
        %v3087 = vadd.f32 %v2927, %v3086
        %3088 = vmatmul.f32.gmra.mxu0 %v2973
        %v3089 = vpop.f32.mrf.mxu0
        %v3090 = vadd.f32 %v2927, %v3089
        %3091 = vmatmul.f32.gmra.mxu0 %v2976
        %v3092 = vpop.f32.mrf.mxu0
        %v3093 = vadd.f32 %v2927, %v3092
        %3094 = vmatmul.f32.gmra.mxu0 %v2979
        %v3095 = vpop.f32.mrf.mxu0
        %v3096 = vadd.f32 %v2927, %v3095
        %3097 = vmatmul.f32.gmra.mxu0 %v2982
        %v3098 = vpop.f32.mrf.mxu0
        %v3099 = vadd.f32 %v2927, %v3098
        %3100 = vmatmul.f32.gmra.mxu0 %v2985
        %v3101 = vpop.f32.mrf.mxu0
        %v3102 = vadd.f32 %v2927, %v3101
        %3103 = vmatmul.f32.gmra.mxu0 %v2988
        %v3104 = vpop.f32.mrf.mxu0
        %v3105 = vadd.f32 %v2927, %v3104
        %3106 = vmatmul.f32.gmra.mxu0 %v2991
        %v3107 = vpop.f32.mrf.mxu0
        %v3108 = vadd.f32 %v2927, %v3107
        %3109 = vmatmul.f32.gmra.mxu0 %v2994
        %v3110 = vpop.f32.mrf.mxu0
        %v3111 = vadd.f32 %v2927, %v3110
        %3112 = vmatmul.f32.gmra.mxu0 %v2997
        %v3113 = vpop.f32.mrf.mxu0
        %v3114 = vadd.f32 %v2927, %v3113
        %3115 = vmatmul.f32.gmra.mxu0 %v3000
        %v3116 = vpop.f32.mrf.mxu0
        %v3117 = vadd.f32 %v2927, %v3116
        %3118 = vmatmul.f32.gmra.mxu0 %v3003
        %v3119 = vpop.f32.mrf.mxu0
        %v3120 = vadd.f32 %v2927, %v3119
        %3121 = vmatmul.f32.gmra.mxu0 %v3006
        %v3122 = vpop.f32.mrf.mxu0
        %v3123 = vadd.f32 %v2927, %v3122
        %3124 = vmatmul.f32.gmra.mxu0 %v3009
        %v3125 = vpop.f32.mrf.mxu0
        %v3126 = vadd.f32 %v2927, %v3125
        %3127 = vmatmul.f32.gmra.mxu0 %v3012
        %v3128 = vpop.f32.mrf.mxu0
        %v3129 = vadd.f32 %v2927, %v3128
        %3130 = vmatmul.f32.gmra.mxu0 %v3015
        %v3131 = vpop.f32.mrf.mxu0
        %v3132 = vadd.f32 %v2927, %v3131
        %3133 = vmatmul.f32.gmra.mxu0 %v3018
        %v3134 = vpop.f32.mrf.mxu0
        %v3135 = vadd.f32 %v2927, %v3134
        %3136 = vmatmul.f32.gmra.mxu0 %v3021
        %v3137 = vpop.f32.mrf.mxu0
        %v3138 = vadd.f32 %v2927, %v3137
        %3139 = vmatmul.f32.gmra.mxu0 %v3024
        %v3140 = vpop.f32.mrf.mxu0
        %v3141 = vadd.f32 %v2927, %v3140
        %3142 = vdwg.mxu0
        %v3143 = vmax.f32 %v3048, 0.0
        %v3144 = vmax.f32 %v3051, 0.0
        %v3145 = vmax.f32 %v3054, 0.0
        %v3146 = vmax.f32 %v3057, 0.0
        %v3147 = vmax.f32 %v3060, 0.0
        %v3148 = vmax.f32 %v3063, 0.0
        %v3149 = vmax.f32 %v3066, 0.0
        %v3150 = vmax.f32 %v3069, 0.0
        %v3151 = vmax.f32 %v3072, 0.0
        %v3152 = vmax.f32 %v3075, 0.0
        %v3153 = vmax.f32 %v3078, 0.0
        %v3154 = vmax.f32 %v3081, 0.0
        %v3155 = vmax.f32 %v3084, 0.0
        %v3156 = vmax.f32 %v3087, 0.0
        %v3157 = vmax.f32 %v3090, 0.0
        %v3158 = vmax.f32 %v3093, 0.0
        %v3159 = vmax.f32 %v3096, 0.0
        %v3160 = vmax.f32 %v3099, 0.0
        %v3161 = vmax.f32 %v3102, 0.0
        %v3162 = vmax.f32 %v3105, 0.0
        %v3163 = vmax.f32 %v3108, 0.0
        %v3164 = vmax.f32 %v3111, 0.0
        %v3165 = vmax.f32 %v3114, 0.0
        %v3166 = vmax.f32 %v3117, 0.0
        %v3167 = vmax.f32 %v3120, 0.0
        %v3168 = vmax.f32 %v3123, 0.0
        %v3169 = vmax.f32 %v3126, 0.0
        %v3170 = vmax.f32 %v3129, 0.0
        %v3171 = vmax.f32 %v3132, 0.0
        %v3172 = vmax.f32 %v3135, 0.0
        %v3173 = vmax.f32 %v3138, 0.0
        %v3174 = vmax.f32 %v3141, 0.0
        %3175 = vst.msk [vmem:[%s211] sm:$0xff] %vm244, %v3143
        %3176 = vst.msk [vmem:[%s211 + $0x8] sm:$0xff] %vm244, %v3144
        %3177 = vst.msk [vmem:[%s211 + $0x10] sm:$0xff] %vm244, %v3145
        %3178 = vst.msk [vmem:[%s211 + $0x18] sm:$0xff] %vm244, %v3146
        %3179 = vst.msk [vmem:[%s211 + $0x20] sm:$0xff] %vm244, %v3147
        %3180 = vst.msk [vmem:[%s211 + $0x28] sm:$0xff] %vm244, %v3148
        %3181 = vst.msk [vmem:[%s211 + $0x30] sm:$0xff] %vm244, %v3149
        %3182 = vst.msk [vmem:[%s211 + $0x38] sm:$0xff] %vm244, %v3150
        %3183 = vst.msk [vmem:[%s211 + $0x40] sm:$0xff] %vm244, %v3151
        %3184 = vst.msk [vmem:[%s211 + $0x48] sm:$0xff] %vm244, %v3152
        %3185 = vst.msk [vmem:[%s211 + $0x50] sm:$0xff] %vm244, %v3153
        %3186 = vst.msk [vmem:[%s211 + $0x58] sm:$0xff] %vm244, %v3154
        %3187 = vst.msk [vmem:[%s211 + $0x60] sm:$0xff] %vm244, %v3155
        %3188 = vst.msk [vmem:[%s211 + $0x68] sm:$0xff] %vm244, %v3156
        %3189 = vst.msk [vmem:[%s211 + $0x70] sm:$0xff] %vm244, %v3157
        %3190 = vst.msk [vmem:[%s211 + $0x78] sm:$0xff] %vm244, %v3158
        %3191 = vst.msk [vmem:[%s211 + $0x80] sm:$0xff] %vm244, %v3159
        %3192 = vst.msk [vmem:[%s211 + $0x88] sm:$0xff] %vm244, %v3160
        %3193 = vst.msk [vmem:[%s211 + $0x90] sm:$0xff] %vm244, %v3161
        %3194 = vst.msk [vmem:[%s211 + $0x98] sm:$0xff] %vm244, %v3162
        %3195 = vst.msk [vmem:[%s211 + $0xa0] sm:$0xff] %vm244, %v3163
        %3196 = vst.msk [vmem:[%s211 + $0xa8] sm:$0xff] %vm244, %v3164
        %3197 = vst.msk [vmem:[%s211 + $0xb0] sm:$0xff] %vm244, %v3165
        %3198 = vst.msk [vmem:[%s211 + $0xb8] sm:$0xff] %vm244, %v3166
        %3199 = vst.msk [vmem:[%s211 + $0xc0] sm:$0xff] %vm244, %v3167
        %3200 = vst.msk [vmem:[%s211 + $0xc8] sm:$0xff] %vm244, %v3168
        %3201 = vst.msk [vmem:[%s211 + $0xd0] sm:$0xff] %vm244, %v3169
        %3202 = vst.msk [vmem:[%s211 + $0xd8] sm:$0xff] %vm244, %v3170
        %3203 = vst.msk [vmem:[%s211 + $0xe0] sm:$0xff] %vm244, %v3171
        %3204 = vst.msk [vmem:[%s211 + $0xe8] sm:$0xff] %vm244, %v3172
        %3205 = vst.msk [vmem:[%s211 + $0xf0] sm:$0xff] %vm244, %v3173
        %3206 = vst.msk [vmem:[%s211 + $0xf8] sm:$0xff] %vm244, %v3174
        %p3207 = scmp.lt.s32.totalorder %s16, 1
        %s3208 = scalar_select %p3207, %s16, 1
        %s3209 = smul.addr %s3208, 32
        %s3210 = smul.addr %s3209, 8
        %s3211 = scalar_lea.vmem %s4, %s3210
        // Predicated region
        $region41: #{tpu_custom_call.1} parent=35 // pred_check
          %p3212 = pneg %p123
        $region42: #{tpu_custom_call.1} parent=35 // pred_check_branch
          %3214 = sbr.rel (%p3212) target = $region44
        $region43: #{tpu_custom_call.1} parent=35 // pred_region
          _
        $region44: #{tpu_custom_call.1} parent=35 // pred_fallthru
          _
      $region36: #{tpu_custom_call.1} parent=5 // pred_fallthru
        _
      %p3215 = scmp.le.s32.totalorder 2, %s11
      // Predicated region
      $region45: #{tpu_custom_call.1} parent=5 // pred_check
        %p3216 = pneg %p3215
      $region46: #{tpu_custom_call.1} parent=5 // pred_check_branch
        %3218 = sbr.rel (%p3216) target = $region48
      $region47: #{tpu_custom_call.1} parent=5 // pred_region
        %s3219 = ssub.s32 %s11, 2
        // Predicated region
        $region49: #{tpu_custom_call.1} parent=47 // pred_check
          %p3220 = pneg %p129
        $region50: #{tpu_custom_call.1} parent=47 // pred_check_branch
          %3222 = sbr.rel (%p3220) target = $region52
        $region51: #{tpu_custom_call.1} parent=47 // pred_region
          %p3223 = scmp.lt.s32.totalorder %s17, 1
          %s3224 = scalar_select %p3223, %s17, 1
          %s3225 = smul.addr %s3224, 32
          %s3226 = smul.addr %s3225, 8
          %s3227 = scalar_lea.vmem %s4, %s3226
        $region52: #{tpu_custom_call.1} parent=47 // pred_fallthru
          _
      $region48: #{tpu_custom_call.1} parent=5 // pred_fallthru
        _
    $region6: #{tpu_custom_call.1} parent=1 // loop_footer
      %s15 = sadd.s32 1, %s11
    $region7: #{tpu_custom_call.1} parent=1 // loop_footer_branch
      %10 = sbr.rel target = $region3
    $region8: #{tpu_custom_call.1} parent=1 // loop_exit
      _
    %3228 = vsyncpa [#allocation6], 1
    %s3229 = scalar_lea.sflag [#allocation6], 1
    %3230 = vsyncpa %s3229, 1

</llo_original>
